<compile_context>
chip_gen: v7x
topology: tpu7x:2x2x1
jax: 0.10.0
libtpu: 0.0.40
codegen_flags: <defaults>
</compile_context>

<pallas_src>
import functools
import math

import jax
import jax.numpy as jnp
from jax import lax
from jax.experimental import pallas as pl
from jax.experimental.pallas import tpu as pltpu

_T_OUT = 20  # AdaptiveMaxPool2d((1, 20))


def _local_kernel(x_ref, w1_ref, w2_ref, s1_ref, b1_ref, s2_ref, b2_ref, o_ref, *, bins):
    # x_ref : (TB, C, H, W)   NCHW block of TB samples
    # w1_ref: (3*C, D1)       Conv2d(C, D1, (1,3)) weight, taps stacked along K
    # w2_ref: (D1, D2)        Conv2d(D1, D2, 1x1) weight, transposed
    # s*/b* : (1, D*)         folded BatchNorm scale / shift (inference)
    # o_ref : (TB*T, D2)      flattened (sample, time) rows, channels on lanes
    TB, C, H, W = x_ref.shape
    T = len(bins)

    # ---- AdaptiveMaxPool2d((1, T)): max over H (sublanes), then static per-bin lane max.
    xh = jnp.max(x_ref[...], axis=2)                                     # (TB, C, W)
    cols = [jnp.max(xh[:, :, lo:hi], axis=2, keepdims=True) for lo, hi in bins]
    xp = jnp.transpose(jnp.concatenate(cols, axis=2), (0, 2, 1))         # (TB, T, C)
    xp = xp.astype(jnp.float32)

    # ---- Conv2d (1,3), padding (0,1): gather the three shifted taps on the lane axis
    #      and do a single (TB*T, 3C) x (3C, D1) matmul.
    zero = jnp.zeros((TB, 1, C), dtype=xp.dtype)
    xpad = jnp.concatenate([zero, xp, zero], axis=1)                     # (TB, T+2, C)
    xcat = jnp.concatenate(
        [xpad[:, 0:T, :], xpad[:, 1:T + 1, :], xpad[:, 2:T + 2, :]], axis=2)  # (TB, T, 3C)
    y = jnp.dot(xcat.reshape(TB * T, 3 * C), w1_ref[...],
                preferred_element_type=jnp.float32)                      # (TB*T, D1)

    # ---- BN1 (folded, inference) + ReLU.  Dropout2d is the identity at inference.
    y = jnp.maximum(y * s1_ref[...] + b1_ref[...], 0.0)

    # ---- 1x1 Conv + BN2 (folded) + ReLU.
    z = jnp.dot(y, w2_ref[...], preferred_element_type=jnp.float32)      # (TB*T, D2)
    z = jnp.maximum(z * s2_ref[...] + b2_ref[...], 0.0)

    o_ref[...] = z.astype(o_ref.dtype)


def local_forward(x, conv1_w, conv2_w, bn1, bn2, *, eps=1e-5, block_n=None):
    """x: (N, dim1, H, W) NCHW.  conv1_w: (dim1, dim1, 1, 3), conv2_w: (dim2, dim1, 1, 1).
    bn1/bn2: (gamma, beta, running_mean, running_var) tuples.  Returns (N, dim2, 1, 20)."""
    N, C, H, W = x.shape
    dim1 = conv1_w.shape[0]
    dim2 = conv2_w.shape[0]
    assert conv1_w.shape[1] == C and conv2_w.shape[1] == dim1
    T = _T_OUT

    # --- fold BatchNorm (inference) into per-channel scale / shift ---
    g1, be1, m1, v1 = bn1
    s1 = g1 * lax.rsqrt(v1 + eps)
    sh1 = be1 - m1 * s1
    g2, be2, m2, v2 = bn2
    s2 = g2 * lax.rsqrt(v2 + eps)
    sh2 = be2 - m2 * s2

    # --- conv weights rearranged for (rows, channels) matmuls ---
    # (1,3) conv: taps stacked along K so the kernel does ONE matmul with K = 3*C.
    w1_cat = jnp.transpose(conv1_w[:, :, 0, :], (2, 1, 0)).reshape(3 * C, dim1)  # (3C, D1)
    w2_t = jnp.transpose(conv2_w[:, :, 0, 0], (1, 0))                            # (D1, D2)

    # --- PyTorch adaptive-max-pool bin boundaries over W (static at trace time) ---
    bins = tuple((int((t * W) // T), int(-(-((t + 1) * W) // T))) for t in range(T))

    # --- batch tile: biggest block whose working set fits comfortably in scoped VMEM ---
    if block_n is None:
        per_sample = (2 * C * H * W * x.dtype.itemsize           # double-buffered input block
                      + 4 * C * W                                 # H-reduced activations
                      + 4 * T * (5 * C + 2 * dim1 + 4 * dim2))    # pooled/taps + y/z (+out dbuf)
        budget = 16 * 1024 * 1024
        block_n = int(max(1, min(N, budget // max(1, per_sample))))
    # keep the flattened output tile (block_n*T rows) sublane-aligned unless it spans all of N
    q = 8 // math.gcd(T, 8)
    if block_n < N:
        block_n = min(N, max(q, (block_n // q) * q))
    grid = (pl.cdiv(N, block_n),)

    kernel = functools.partial(_local_kernel, bins=bins)

    flat_out = pl.pallas_call(
        kernel,
        out_shape=jax.ShapeDtypeStruct((N * T, dim2), x.dtype),
        grid_spec=pltpu.PrefetchScalarGridSpec(
            num_scalar_prefetch=0,
            grid=grid,
            in_specs=[
                pl.BlockSpec((block_n, C, H, W), lambda i: (i, 0, 0, 0)),
                pl.BlockSpec(memory_space=pltpu.MemorySpace.VMEM),   # conv1 taps (3C, D1)
                pl.BlockSpec(memory_space=pltpu.MemorySpace.VMEM),   # conv2 (D1, D2)
                pl.BlockSpec(memory_space=pltpu.MemorySpace.VMEM),   # bn1 scale
                pl.BlockSpec(memory_space=pltpu.MemorySpace.VMEM),   # bn1 shift
                pl.BlockSpec(memory_space=pltpu.MemorySpace.VMEM),   # bn2 scale
                pl.BlockSpec(memory_space=pltpu.MemorySpace.VMEM),   # bn2 shift
            ],
            out_specs=pl.BlockSpec((block_n * T, dim2), lambda i: (i, 0)),
        ),
        compiler_params=pltpu.CompilerParams(
            dimension_semantics=("parallel",),
            vmem_limit_bytes=32 * 1024 * 1024,
        ),
    )(x, w1_cat, w2_t,
      s1.reshape(1, dim1).astype(jnp.float32), sh1.reshape(1, dim1).astype(jnp.float32),
      s2.reshape(1, dim2).astype(jnp.float32), sh2.reshape(1, dim2).astype(jnp.float32))

    # (N*T, dim2) -> PyTorch NCHW (N, dim2, 1, T)
    return jnp.transpose(flat_out.reshape(N, T, dim2), (0, 2, 1))[:, :, None, :]


def _reference(x, conv1_w, conv2_w, bn1, bn2, eps=1e-5):
    """Pure-JAX mirror of the PyTorch forward (inference mode)."""
    N, C, H, W = x.shape
    T = _T_OUT
    # AdaptiveMaxPool2d((1, T)) with PyTorch bin boundaries
    cols = []
    for t in range(T):
        lo = (t * W) // T
        hi = -(-((t + 1) * W) // T)
        cols.append(jnp.max(x[:, :, :, lo:hi], axis=(2, 3)))
    xp = jnp.stack(cols, axis=-1)[:, :, None, :]              # (N, C, 1, T)

    def bn(v, params):
        g, b, m, var = params
        inv = g / jnp.sqrt(var + eps)
        return (v - m[None, :, None, None]) * inv[None, :, None, None] + b[None, :, None, None]

    y = lax.conv_general_dilated(xp, conv1_w, window_strides=(1, 1),
                                 padding=((0, 0), (1, 1)),
                                 dimension_numbers=("NCHW", "OIHW", "NCHW"),
                                 precision=lax.Precision.HIGHEST)
    y = jnp.maximum(bn(y, bn1), 0.0)
    z = lax.conv_general_dilated(y, conv2_w, window_strides=(1, 1),
                                 padding="VALID",
                                 dimension_numbers=("NCHW", "OIHW", "NCHW"),
                                 precision=lax.Precision.HIGHEST)
    z = jnp.maximum(bn(z, bn2), 0.0)
    return z


if __name__ == "__main__":
    # small shapes consistent with the module: dim1 in-channels, (1,3) conv, 1x1 conv to dim2
    N, dim1, dim2, H, W = 8, 32, 64, 16, 50   # W=50 exercises non-uniform adaptive bins

    key = jax.random.PRNGKey(0)
    ks = jax.random.split(key, 11)
    x = jax.random.normal(ks[0], (N, dim1, H, W), dtype=jnp.float32)
    conv1_w = jax.random.normal(ks[1], (dim1, dim1, 1, 3), dtype=jnp.float32) * 0.1
    conv2_w = jax.random.normal(ks[2], (dim2, dim1, 1, 1), dtype=jnp.float32) * 0.1
    bn1 = (1.0 + 0.1 * jax.random.normal(ks[3], (dim1,), jnp.float32),   # gamma
           0.1 * jax.random.normal(ks[4], (dim1,), jnp.float32),          # beta
           0.1 * jax.random.normal(ks[5], (dim1,), jnp.float32),          # running_mean
           0.5 + jax.random.uniform(ks[6], (dim1,), jnp.float32))         # running_var > 0
    bn2 = (1.0 + 0.1 * jax.random.normal(ks[7], (dim2,), jnp.float32),
           0.1 * jax.random.normal(ks[8], (dim2,), jnp.float32),
           0.1 * jax.random.normal(ks[9], (dim2,), jnp.float32),
           0.5 + jax.random.uniform(ks[10], (dim2,), jnp.float32))

    out = local_forward(x, conv1_w, conv2_w, bn1, bn2, block_n=4)  # 2 grid steps
    out = jax.block_until_ready(out)

    ref = _reference(x, conv1_w, conv2_w, bn1, bn2)
    assert out.shape == (N, dim2, 1, _T_OUT)
    assert jnp.allclose(out, ref, atol=5e-4, rtol=5e-4), float(jnp.max(jnp.abs(out - ref)))

    print("KERNEL_OK")
</pallas_src>

<mosaic_0001>
module attributes {stable_mosaic.version = 11 : i64} {
  func.func @_local_kernel(%arg0: i32, %arg1: memref<4x32x16x50xf32, #tpu.memory_space<vmem>>, %arg2: memref<96x32xf32, #tpu.memory_space<vmem>>, %arg3: memref<32x64xf32, #tpu.memory_space<vmem>>, %arg4: memref<1x32xf32, #tpu.memory_space<vmem>>, %arg5: memref<1x32xf32, #tpu.memory_space<vmem>>, %arg6: memref<1x64xf32, #tpu.memory_space<vmem>>, %arg7: memref<1x64xf32, #tpu.memory_space<vmem>>, %arg8: memref<80x64xf32, #tpu.memory_space<vmem>>) attributes {dimension_semantics = [#tpu.dimension_semantics<parallel>], iteration_bounds = array<i64: 2>, scalar_prefetch = 0 : i64, scratch_operands = 0 : i64, tpu.core_type = #tpu.core_type<tc>, window_params = [{transform_indices = @transform_0, window_bounds = array<i64: 4, 32, 16, 50>}, {pipeline_mode = #tpu.pipeline_mode<synchronous>, transform_indices = @transform_1, window_bounds = array<i64: 96, 32>}, {pipeline_mode = #tpu.pipeline_mode<synchronous>, transform_indices = @transform_2, window_bounds = array<i64: 32, 64>}, {pipeline_mode = #tpu.pipeline_mode<synchronous>, transform_indices = @transform_3, window_bounds = array<i64: 1, 32>}, {pipeline_mode = #tpu.pipeline_mode<synchronous>, transform_indices = @transform_4, window_bounds = array<i64: 1, 32>}, {pipeline_mode = #tpu.pipeline_mode<synchronous>, transform_indices = @transform_5, window_bounds = array<i64: 1, 64>}, {pipeline_mode = #tpu.pipeline_mode<synchronous>, transform_indices = @transform_6, window_bounds = array<i64: 1, 64>}, {transform_indices = @transform_7, window_bounds = array<i64: 80, 64>}]} {
    %c0 = arith.constant 0 : index
    %c0_0 = arith.constant 0 : index
    %c0_1 = arith.constant 0 : index
    %c0_2 = arith.constant 0 : index
    %0 = vector.load %arg1[%c0, %c0_0, %c0_1, %c0_2] : memref<4x32x16x50xf32, #tpu.memory_space<vmem>>, vector<4x32x16x50xf32>
    %cst = arith.constant dense<0xFF800000> : vector<4x32x50xf32>
    %1 = vector.multi_reduction <maximumf>, %0, %cst [2] : vector<4x32x16x50xf32> to vector<4x32x50xf32>
    %2 = vector.extract_strided_slice %1 {offsets = [0, 0, 0], sizes = [4, 32, 3], strides = [1, 1, 1]} : vector<4x32x50xf32> to vector<4x32x3xf32>
    %cst_3 = arith.constant dense<0xFF800000> : vector<4x32xf32>
    %3 = vector.multi_reduction <maximumf>, %2, %cst_3 [2] : vector<4x32x3xf32> to vector<4x32xf32>
    %4 = vector.shape_cast %3 : vector<4x32xf32> to vector<4x32x1xf32>
    %5 = vector.extract_strided_slice %1 {offsets = [0, 0, 2], sizes = [4, 32, 3], strides = [1, 1, 1]} : vector<4x32x50xf32> to vector<4x32x3xf32>
    %cst_4 = arith.constant dense<0xFF800000> : vector<4x32xf32>
    %6 = vector.multi_reduction <maximumf>, %5, %cst_4 [2] : vector<4x32x3xf32> to vector<4x32xf32>
    %7 = vector.shape_cast %6 : vector<4x32xf32> to vector<4x32x1xf32>
    %8 = vector.extract_strided_slice %1 {offsets = [0, 0, 5], sizes = [4, 32, 3], strides = [1, 1, 1]} : vector<4x32x50xf32> to vector<4x32x3xf32>
    %cst_5 = arith.constant dense<0xFF800000> : vector<4x32xf32>
    %9 = vector.multi_reduction <maximumf>, %8, %cst_5 [2] : vector<4x32x3xf32> to vector<4x32xf32>
    %10 = vector.shape_cast %9 : vector<4x32xf32> to vector<4x32x1xf32>
    %11 = vector.extract_strided_slice %1 {offsets = [0, 0, 7], sizes = [4, 32, 3], strides = [1, 1, 1]} : vector<4x32x50xf32> to vector<4x32x3xf32>
    %cst_6 = arith.constant dense<0xFF800000> : vector<4x32xf32>
    %12 = vector.multi_reduction <maximumf>, %11, %cst_6 [2] : vector<4x32x3xf32> to vector<4x32xf32>
    %13 = vector.shape_cast %12 : vector<4x32xf32> to vector<4x32x1xf32>
    %14 = vector.extract_strided_slice %1 {offsets = [0, 0, 10], sizes = [4, 32, 3], strides = [1, 1, 1]} : vector<4x32x50xf32> to vector<4x32x3xf32>
    %cst_7 = arith.constant dense<0xFF800000> : vector<4x32xf32>
    %15 = vector.multi_reduction <maximumf>, %14, %cst_7 [2] : vector<4x32x3xf32> to vector<4x32xf32>
    %16 = vector.shape_cast %15 : vector<4x32xf32> to vector<4x32x1xf32>
    %17 = vector.extract_strided_slice %1 {offsets = [0, 0, 12], sizes = [4, 32, 3], strides = [1, 1, 1]} : vector<4x32x50xf32> to vector<4x32x3xf32>
    %cst_8 = arith.constant dense<0xFF800000> : vector<4x32xf32>
    %18 = vector.multi_reduction <maximumf>, %17, %cst_8 [2] : vector<4x32x3xf32> to vector<4x32xf32>
    %19 = vector.shape_cast %18 : vector<4x32xf32> to vector<4x32x1xf32>
    %20 = vector.extract_strided_slice %1 {offsets = [0, 0, 15], sizes = [4, 32, 3], strides = [1, 1, 1]} : vector<4x32x50xf32> to vector<4x32x3xf32>
    %cst_9 = arith.constant dense<0xFF800000> : vector<4x32xf32>
    %21 = vector.multi_reduction <maximumf>, %20, %cst_9 [2] : vector<4x32x3xf32> to vector<4x32xf32>
    %22 = vector.shape_cast %21 : vector<4x32xf32> to vector<4x32x1xf32>
    %23 = vector.extract_strided_slice %1 {offsets = [0, 0, 17], sizes = [4, 32, 3], strides = [1, 1, 1]} : vector<4x32x50xf32> to vector<4x32x3xf32>
    %cst_10 = arith.constant dense<0xFF800000> : vector<4x32xf32>
    %24 = vector.multi_reduction <maximumf>, %23, %cst_10 [2] : vector<4x32x3xf32> to vector<4x32xf32>
    %25 = vector.shape_cast %24 : vector<4x32xf32> to vector<4x32x1xf32>
    %26 = vector.extract_strided_slice %1 {offsets = [0, 0, 20], sizes = [4, 32, 3], strides = [1, 1, 1]} : vector<4x32x50xf32> to vector<4x32x3xf32>
    %cst_11 = arith.constant dense<0xFF800000> : vector<4x32xf32>
    %27 = vector.multi_reduction <maximumf>, %26, %cst_11 [2] : vector<4x32x3xf32> to vector<4x32xf32>
    %28 = vector.shape_cast %27 : vector<4x32xf32> to vector<4x32x1xf32>
    %29 = vector.extract_strided_slice %1 {offsets = [0, 0, 22], sizes = [4, 32, 3], strides = [1, 1, 1]} : vector<4x32x50xf32> to vector<4x32x3xf32>
    %cst_12 = arith.constant dense<0xFF800000> : vector<4x32xf32>
    %30 = vector.multi_reduction <maximumf>, %29, %cst_12 [2] : vector<4x32x3xf32> to vector<4x32xf32>
    %31 = vector.shape_cast %30 : vector<4x32xf32> to vector<4x32x1xf32>
    %32 = vector.extract_strided_slice %1 {offsets = [0, 0, 25], sizes = [4, 32, 3], strides = [1, 1, 1]} : vector<4x32x50xf32> to vector<4x32x3xf32>
    %cst_13 = arith.constant dense<0xFF800000> : vector<4x32xf32>
    %33 = vector.multi_reduction <maximumf>, %32, %cst_13 [2] : vector<4x32x3xf32> to vector<4x32xf32>
    %34 = vector.shape_cast %33 : vector<4x32xf32> to vector<4x32x1xf32>
    %35 = vector.extract_strided_slice %1 {offsets = [0, 0, 27], sizes = [4, 32, 3], strides = [1, 1, 1]} : vector<4x32x50xf32> to vector<4x32x3xf32>
    %cst_14 = arith.constant dense<0xFF800000> : vector<4x32xf32>
    %36 = vector.multi_reduction <maximumf>, %35, %cst_14 [2] : vector<4x32x3xf32> to vector<4x32xf32>
    %37 = vector.shape_cast %36 : vector<4x32xf32> to vector<4x32x1xf32>
    %38 = vector.extract_strided_slice %1 {offsets = [0, 0, 30], sizes = [4, 32, 3], strides = [1, 1, 1]} : vector<4x32x50xf32> to vector<4x32x3xf32>
    %cst_15 = arith.constant dense<0xFF800000> : vector<4x32xf32>
    %39 = vector.multi_reduction <maximumf>, %38, %cst_15 [2] : vector<4x32x3xf32> to vector<4x32xf32>
    %40 = vector.shape_cast %39 : vector<4x32xf32> to vector<4x32x1xf32>
    %41 = vector.extract_strided_slice %1 {offsets = [0, 0, 32], sizes = [4, 32, 3], strides = [1, 1, 1]} : vector<4x32x50xf32> to vector<4x32x3xf32>
    %cst_16 = arith.constant dense<0xFF800000> : vector<4x32xf32>
    %42 = vector.multi_reduction <maximumf>, %41, %cst_16 [2] : vector<4x32x3xf32> to vector<4x32xf32>
    %43 = vector.shape_cast %42 : vector<4x32xf32> to vector<4x32x1xf32>
    %44 = vector.extract_strided_slice %1 {offsets = [0, 0, 35], sizes = [4, 32, 3], strides = [1, 1, 1]} : vector<4x32x50xf32> to vector<4x32x3xf32>
    %cst_17 = arith.constant dense<0xFF800000> : vector<4x32xf32>
    %45 = vector.multi_reduction <maximumf>, %44, %cst_17 [2] : vector<4x32x3xf32> to vector<4x32xf32>
    %46 = vector.shape_cast %45 : vector<4x32xf32> to vector<4x32x1xf32>
    %47 = vector.extract_strided_slice %1 {offsets = [0, 0, 37], sizes = [4, 32, 3], strides = [1, 1, 1]} : vector<4x32x50xf32> to vector<4x32x3xf32>
    %cst_18 = arith.constant dense<0xFF800000> : vector<4x32xf32>
    %48 = vector.multi_reduction <maximumf>, %47, %cst_18 [2] : vector<4x32x3xf32> to vector<4x32xf32>
    %49 = vector.shape_cast %48 : vector<4x32xf32> to vector<4x32x1xf32>
    %50 = vector.extract_strided_slice %1 {offsets = [0, 0, 40], sizes = [4, 32, 3], strides = [1, 1, 1]} : vector<4x32x50xf32> to vector<4x32x3xf32>
    %cst_19 = arith.constant dense<0xFF800000> : vector<4x32xf32>
    %51 = vector.multi_reduction <maximumf>, %50, %cst_19 [2] : vector<4x32x3xf32> to vector<4x32xf32>
    %52 = vector.shape_cast %51 : vector<4x32xf32> to vector<4x32x1xf32>
    %53 = vector.extract_strided_slice %1 {offsets = [0, 0, 42], sizes = [4, 32, 3], strides = [1, 1, 1]} : vector<4x32x50xf32> to vector<4x32x3xf32>
    %cst_20 = arith.constant dense<0xFF800000> : vector<4x32xf32>
    %54 = vector.multi_reduction <maximumf>, %53, %cst_20 [2] : vector<4x32x3xf32> to vector<4x32xf32>
    %55 = vector.shape_cast %54 : vector<4x32xf32> to vector<4x32x1xf32>
    %56 = vector.extract_strided_slice %1 {offsets = [0, 0, 45], sizes = [4, 32, 3], strides = [1, 1, 1]} : vector<4x32x50xf32> to vector<4x32x3xf32>
    %cst_21 = arith.constant dense<0xFF800000> : vector<4x32xf32>
    %57 = vector.multi_reduction <maximumf>, %56, %cst_21 [2] : vector<4x32x3xf32> to vector<4x32xf32>
    %58 = vector.shape_cast %57 : vector<4x32xf32> to vector<4x32x1xf32>
    %59 = vector.extract_strided_slice %1 {offsets = [0, 0, 47], sizes = [4, 32, 3], strides = [1, 1, 1]} : vector<4x32x50xf32> to vector<4x32x3xf32>
    %cst_22 = arith.constant dense<0xFF800000> : vector<4x32xf32>
    %60 = vector.multi_reduction <maximumf>, %59, %cst_22 [2] : vector<4x32x3xf32> to vector<4x32xf32>
    %61 = vector.shape_cast %60 : vector<4x32xf32> to vector<4x32x1xf32>
    %62 = tpu.concatenate %4, %7, %10, %13, %16, %19, %22, %25, %28, %31, %34, %37, %40, %43, %46, %49 in 2 : vector<4x32x1xf32>, vector<4x32x1xf32>, vector<4x32x1xf32>, vector<4x32x1xf32>, vector<4x32x1xf32>, vector<4x32x1xf32>, vector<4x32x1xf32>, vector<4x32x1xf32>, vector<4x32x1xf32>, vector<4x32x1xf32>, vector<4x32x1xf32>, vector<4x32x1xf32>, vector<4x32x1xf32>, vector<4x32x1xf32>, vector<4x32x1xf32>, vector<4x32x1xf32> -> vector<4x32x16xf32>
    %63 = tpu.concatenate %52, %55, %58, %61 in 2 : vector<4x32x1xf32>, vector<4x32x1xf32>, vector<4x32x1xf32>, vector<4x32x1xf32> -> vector<4x32x4xf32>
    %64 = tpu.concatenate %62, %63 in 2 : vector<4x32x16xf32>, vector<4x32x4xf32> -> vector<4x32x20xf32>
    %65 = tpu.transpose %64, [0, 2, 1] : vector<4x32x20xf32> -> vector<4x20x32xf32>
    %cst_23 = arith.constant 0.000000e+00 : f32
    %66 = vector.broadcast %cst_23 : f32 to vector<4x1x32xf32>
    %67 = tpu.concatenate %66, %65, %66 in 1 : vector<4x1x32xf32>, vector<4x20x32xf32>, vector<4x1x32xf32> -> vector<4x22x32xf32>
    %68 = vector.extract_strided_slice %67 {offsets = [0, 0, 0], sizes = [4, 20, 32], strides = [1, 1, 1]} : vector<4x22x32xf32> to vector<4x20x32xf32>
    %69 = vector.extract_strided_slice %67 {offsets = [0, 1, 0], sizes = [4, 20, 32], strides = [1, 1, 1]} : vector<4x22x32xf32> to vector<4x20x32xf32>
    %70 = vector.extract_strided_slice %67 {offsets = [0, 2, 0], sizes = [4, 20, 32], strides = [1, 1, 1]} : vector<4x22x32xf32> to vector<4x20x32xf32>
    %71 = tpu.concatenate %68, %69, %70 in 2 : vector<4x20x32xf32>, vector<4x20x32xf32>, vector<4x20x32xf32> -> vector<4x20x96xf32>
    %72 = vector.shape_cast %71 : vector<4x20x96xf32> to vector<80x96xf32>
    %c0_24 = arith.constant 0 : index
    %c0_25 = arith.constant 0 : index
    %73 = vector.load %arg2[%c0_24, %c0_25] : memref<96x32xf32, #tpu.memory_space<vmem>>, vector<96x32xf32>
    %cst_26 = arith.constant dense<0.000000e+00> : vector<80x32xf32>
    %74 = tpu.matmul %72, %73, %cst_26 {dimension_numbers = #tpu.dot_dimension_numbers<[1], [0], [0], [1], [0, 0, 1, 1], [], []>} : vector<80x96xf32>, vector<96x32xf32>, vector<80x32xf32> -> vector<80x32xf32>
    %c0_27 = arith.constant 0 : index
    %c0_28 = arith.constant 0 : index
    %75 = vector.load %arg4[%c0_27, %c0_28] : memref<1x32xf32, #tpu.memory_space<vmem>>, vector<1x32xf32>
    %76 = vector.broadcast %75 : vector<1x32xf32> to vector<80x32xf32>
    %77 = arith.mulf %74, %76 : vector<80x32xf32>
    %c0_29 = arith.constant 0 : index
    %c0_30 = arith.constant 0 : index
    %78 = vector.load %arg5[%c0_29, %c0_30] : memref<1x32xf32, #tpu.memory_space<vmem>>, vector<1x32xf32>
    %79 = vector.broadcast %78 : vector<1x32xf32> to vector<80x32xf32>
    %80 = arith.addf %77, %79 : vector<80x32xf32>
    %cst_31 = arith.constant 0.000000e+00 : f32
    %81 = vector.broadcast %cst_31 : f32 to vector<80x32xf32>
    %82 = arith.maximumf %80, %81 : vector<80x32xf32>
    %c0_32 = arith.constant 0 : index
    %c0_33 = arith.constant 0 : index
    %83 = vector.load %arg3[%c0_32, %c0_33] : memref<32x64xf32, #tpu.memory_space<vmem>>, vector<32x64xf32>
    %cst_34 = arith.constant dense<0.000000e+00> : vector<80x64xf32>
    %84 = tpu.matmul %82, %83, %cst_34 {dimension_numbers = #tpu.dot_dimension_numbers<[1], [0], [0], [1], [0, 0, 1, 1], [], []>} : vector<80x32xf32>, vector<32x64xf32>, vector<80x64xf32> -> vector<80x64xf32>
    %c0_35 = arith.constant 0 : index
    %c0_36 = arith.constant 0 : index
    %85 = vector.load %arg6[%c0_35, %c0_36] : memref<1x64xf32, #tpu.memory_space<vmem>>, vector<1x64xf32>
    %86 = vector.broadcast %85 : vector<1x64xf32> to vector<80x64xf32>
    %87 = arith.mulf %84, %86 : vector<80x64xf32>
    %c0_37 = arith.constant 0 : index
    %c0_38 = arith.constant 0 : index
    %88 = vector.load %arg7[%c0_37, %c0_38] : memref<1x64xf32, #tpu.memory_space<vmem>>, vector<1x64xf32>
    %89 = vector.broadcast %88 : vector<1x64xf32> to vector<80x64xf32>
    %90 = arith.addf %87, %89 : vector<80x64xf32>
    %cst_39 = arith.constant 0.000000e+00 : f32
    %91 = vector.broadcast %cst_39 : f32 to vector<80x64xf32>
    %92 = arith.maximumf %90, %91 : vector<80x64xf32>
    %c0_40 = arith.constant 0 : index
    %c0_41 = arith.constant 0 : index
    %93 = vector.load %arg8[%c0_40, %c0_41] : memref<80x64xf32, #tpu.memory_space<vmem>>, vector<80x64xf32>
    tpu.vector_store %arg8[%c0_40, %c0_41], %92 {strides = array<i32>} : memref<80x64xf32, #tpu.memory_space<vmem>>, vector<80x64xf32>,
    return
  }
  func.func @transform_0(%arg0: i32) -> (i32, i32, i32, i32) {
    %c0_i32 = arith.constant 0 : i32
    %c0_i32_0 = arith.constant 0 : i32
    %c0_i32_1 = arith.constant 0 : i32
    %c0_i32_2 = arith.constant 0 : i32
    return %arg0, %c0_i32, %c0_i32_0, %c0_i32_1 : i32, i32, i32, i32
  }
  func.func @transform_1(%arg0: i32) -> (i32, i32) {
    %c0_i32 = arith.constant 0 : i32
    %c0_i32_0 = arith.constant 0 : i32
    %c0_i32_1 = arith.constant 0 : i32
    return %c0_i32, %c0_i32_0 : i32, i32
  }
  func.func @transform_2(%arg0: i32) -> (i32, i32) {
    %c0_i32 = arith.constant 0 : i32
    %c0_i32_0 = arith.constant 0 : i32
    %c0_i32_1 = arith.constant 0 : i32
    return %c0_i32, %c0_i32_0 : i32, i32
  }
  func.func @transform_3(%arg0: i32) -> (i32, i32) {
    %c0_i32 = arith.constant 0 : i32
    %c0_i32_0 = arith.constant 0 : i32
    %c0_i32_1 = arith.constant 0 : i32
    return %c0_i32, %c0_i32_0 : i32, i32
  }
  func.func @transform_4(%arg0: i32) -> (i32, i32) {
    %c0_i32 = arith.constant 0 : i32
    %c0_i32_0 = arith.constant 0 : i32
    %c0_i32_1 = arith.constant 0 : i32
    return %c0_i32, %c0_i32_0 : i32, i32
  }
  func.func @transform_5(%arg0: i32) -> (i32, i32) {
    %c0_i32 = arith.constant 0 : i32
    %c0_i32_0 = arith.constant 0 : i32
    %c0_i32_1 = arith.constant 0 : i32
    return %c0_i32, %c0_i32_0 : i32, i32
  }
  func.func @transform_6(%arg0: i32) -> (i32, i32) {
    %c0_i32 = arith.constant 0 : i32
    %c0_i32_0 = arith.constant 0 : i32
    %c0_i32_1 = arith.constant 0 : i32
    return %c0_i32, %c0_i32_0 : i32, i32
  }
  func.func @transform_7(%arg0: i32) -> (i32, i32) {
    %c0_i32 = arith.constant 0 : i32
    %c0_i32_0 = arith.constant 0 : i32
    return %arg0, %c0_i32 : i32, i32
  }
}

</mosaic_0001>

<llo_original>
// kernel: tpu_custom_call.1
$region0: #{tpu_custom_call.1}
  #allocation0 [shape = 'u32[]', space=smem, size = 0x4, offset = 0x4, fixed_abs, tag = 'smem constant byte address 0x4 - core index']
  #allocation1 [shape = 'u32[144,128]{1,0:T(1,128)}', space=vmem, size = 0x12000, scoped, tag = 'internal scratch']
  %s0 = inlined_call_operand.hbm [shape: f32[8,32,16,50], index: 0, kind: input, shape index: {}]
  %s1 = inlined_call_operand.vmem [shape: f32[96,32], index: 1, kind: input, shape index: {}]
  %s2 = inlined_call_operand.hbm [shape: f32[32,64], index: 2, kind: input, shape index: {}]
  %s3 = inlined_call_operand.hbm [shape: f32[1,32], index: 3, kind: input, shape index: {}]
  %s4 = inlined_call_operand.hbm [shape: f32[1,32], index: 4, kind: input, shape index: {}]
  %s5 = inlined_call_operand.hbm [shape: f32[1,64], index: 5, kind: input, shape index: {}]
  %s6 = inlined_call_operand.hbm [shape: f32[1,64], index: 6, kind: input, shape index: {}]
  %s7 = inlined_call_operand.vmem [shape: f32[160,64], index: 7, kind: output, shape index: {}]
  %s8 = sld [smem:[#allocation0]]
  $region85: #{tpu_custom_call.1} parent=0
    _
  %s10 = ssub.s32 1, %s8
  %s11 = scalar_select 0, %s10, %s8
  $region1: #{tpu_custom_call.1} parent=0
    #allocation2 [shape = 'u8[2097152]{0}', space=vmem, size = 0x200000, scoped, tag = 'input window, operand 0']
    #allocation3 [shape = 's32[2]{0}', space=sflag, size = 0x8, scoped, tag = 'scoped memory for tpu_custom_call.1']
    #allocation4 [shape = 'u8[16384]{0}', space=vmem, size = 0x4000, scoped, tag = 'input window, operand 2, single buffered']
    #allocation5 [shape = 's32[1]{0}', space=sflag, size = 0x4, scoped, tag = 'scoped memory for tpu_custom_call.1']
    #allocation6 [shape = 'u8[512]{0}', space=vmem, size = 0x400, scoped, tag = 'input window, operand 3, single buffered']
    #allocation7 [shape = 'u8[512]{0}', space=vmem, size = 0x400, scoped, tag = 'input window, operand 4, single buffered']
    #allocation8 [shape = 's32[1]{0}', space=sflag, size = 0x4, scoped, tag = 'scoped memory for tpu_custom_call.1']
    #allocation9 [shape = 'u8[512]{0}', space=vmem, size = 0x400, scoped, tag = 'input window, operand 5, single buffered']
    #allocation10 [shape = 'u8[512]{0}', space=vmem, size = 0x400, scoped, tag = 'input window, operand 6, single buffered']
    #allocation11 [shape = 's32[1]{0}', space=sflag, size = 0x4, scoped, tag = 'scoped memory for tpu_custom_call.1']
    %12 = vsyncpa [#allocation3], 0
    %s13 = scalar_lea.sflag [#allocation3], 1
    %14 = vsyncpa %s13, 0
    %15 = vsyncpa [#allocation5], 0
    %16 = vsyncpa [#allocation8], 0
    %17 = vsyncpa [#allocation11], 0
    loop: start=0, step=1, limit=4
    $region2: #{tpu_custom_call.1} parent=1 // loop_pre_header
      _
    $region3: #{tpu_custom_call.1} parent=1 // loop_header
      %s19 = sphi 0, %s23
      %p20 = scmp.ge.s32.totalorder %s19, 4
      %s29 = sphi 0, %s31
      %s32 = sphi 0, %s29
      %s33 = sphi 0, %s32
      %s49 = sphi 0, %s33
      %s53 = sphi 0, %s53
      %s55 = sphi 0, %s53
      %s56 = sphi 0, %s55
      %s70 = sphi 0, %s56
      %s74 = sphi 0, %s74
      %s76 = sphi 0, %s74
      %s77 = sphi 0, %s76
      %s91 = sphi 0, %s77
      %s95 = sphi 0, %s95
      %s97 = sphi 0, %s95
      %s98 = sphi 0, %s97
      %s112 = sphi 0, %s98
      %s116 = sphi 0, %s116
      %s118 = sphi 0, %s116
      %s119 = sphi 0, %s118
      %s133 = sphi 0, %s119
      %s137 = sphi 0, %s137
      %s139 = sphi 0, %s137
      %s140 = sphi 0, %s139
      %s154 = sphi 0, %s140
      %s158 = sphi 0, %s158
      %s160 = sphi 0, %s158
      %s161 = sphi 0, %s160
      %s175 = sphi 0, %s161
      %s181 = sphi 0, %s183
      %s184 = sphi 0, %s181
      %s185 = sphi 0, %s184
      %s201 = sphi 0, %s185
    $region4: #{tpu_custom_call.1} parent=1 // loop_header_branch
      %22 = sbr.rel (%p20) target = $region8
    $region5: #{tpu_custom_call.1} parent=1 // loop_body
      %s24 = ssub.s32 %s19, 1
      %s25 = ssub.s32 %s19, 2
      %s26 = sadd.s32 %s19, 1
      %s27 = ssub.s32 %s19, %s26
      %p28 = scmp.eq.s32.totalorder %s27, 0
      %s30 = sadd.s32 %s29, 1
      %s31 = scalar_select %p28, %s29, %s30
      %p34 = pneg %p28
      %p35 = scmp.eq.s32.totalorder %s19, 1
      %p36 = por %p34, %p35
      %p37 = scmp.ne.s32.totalorder %s29, %s32
      %p38 = scmp.eq.s32.totalorder %s19, 0
      %p39 = por %p37, %p38
      %p40 = scmp.ne.s32.totalorder %s29, %s32
      %p41 = scmp.eq.s32.totalorder %s24, 1
      %p42 = por %p40, %p41
      %p43 = scmp.ne.s32.totalorder %s32, %s33
      %p44 = scmp.eq.s32.totalorder %s24, 0
      %p45 = por %p43, %p44
      %p46 = scmp.ne.s32.totalorder %s32, %s33
      %p47 = scmp.eq.s32.totalorder %s25, 1
      %p48 = por %p46, %p47
      %p50 = scmp.ne.s32.totalorder %s33, %s49
      %p51 = scmp.eq.s32.totalorder %s25, 0
      %p52 = por %p50, %p51
      %s54 = sadd.s32 %s53, 1
      %p57 = scmp.eq.s32.totalorder %s19, 1
      %p58 = scmp.ne.s32.totalorder %s53, %s55
      %p59 = scmp.eq.s32.totalorder %s19, 0
      %p60 = por %p58, %p59
      %p61 = scmp.ne.s32.totalorder %s53, %s55
      %p62 = scmp.eq.s32.totalorder %s24, 1
      %p63 = por %p61, %p62
      %p64 = scmp.ne.s32.totalorder %s55, %s56
      %p65 = scmp.eq.s32.totalorder %s24, 0
      %p66 = por %p64, %p65
      %p67 = scmp.ne.s32.totalorder %s55, %s56
      %p68 = scmp.eq.s32.totalorder %s25, 1
      %p69 = por %p67, %p68
      %p71 = scmp.ne.s32.totalorder %s56, %s70
      %p72 = scmp.eq.s32.totalorder %s25, 0
      %p73 = por %p71, %p72
      %s75 = sadd.s32 %s74, 1
      %p78 = scmp.eq.s32.totalorder %s19, 1
      %p79 = scmp.ne.s32.totalorder %s74, %s76
      %p80 = scmp.eq.s32.totalorder %s19, 0
      %p81 = por %p79, %p80
      %p82 = scmp.ne.s32.totalorder %s74, %s76
      %p83 = scmp.eq.s32.totalorder %s24, 1
      %p84 = por %p82, %p83
      %p85 = scmp.ne.s32.totalorder %s76, %s77
      %p86 = scmp.eq.s32.totalorder %s24, 0
      %p87 = por %p85, %p86
      %p88 = scmp.ne.s32.totalorder %s76, %s77
      %p89 = scmp.eq.s32.totalorder %s25, 1
      %p90 = por %p88, %p89
      %p92 = scmp.ne.s32.totalorder %s77, %s91
      %p93 = scmp.eq.s32.totalorder %s25, 0
      %p94 = por %p92, %p93
      %s96 = sadd.s32 %s95, 1
      %p99 = scmp.eq.s32.totalorder %s19, 1
      %p100 = scmp.ne.s32.totalorder %s95, %s97
      %p101 = scmp.eq.s32.totalorder %s19, 0
      %p102 = por %p100, %p101
      %p103 = scmp.ne.s32.totalorder %s95, %s97
      %p104 = scmp.eq.s32.totalorder %s24, 1
      %p105 = por %p103, %p104
      %p106 = scmp.ne.s32.totalorder %s97, %s98
      %p107 = scmp.eq.s32.totalorder %s24, 0
      %p108 = por %p106, %p107
      %p109 = scmp.ne.s32.totalorder %s97, %s98
      %p110 = scmp.eq.s32.totalorder %s25, 1
      %p111 = por %p109, %p110
      %p113 = scmp.ne.s32.totalorder %s98, %s112
      %p114 = scmp.eq.s32.totalorder %s25, 0
      %p115 = por %p113, %p114
      %s117 = sadd.s32 %s116, 1
      %p120 = scmp.eq.s32.totalorder %s19, 1
      %p121 = scmp.ne.s32.totalorder %s116, %s118
      %p122 = scmp.eq.s32.totalorder %s19, 0
      %p123 = por %p121, %p122
      %p124 = scmp.ne.s32.totalorder %s116, %s118
      %p125 = scmp.eq.s32.totalorder %s24, 1
      %p126 = por %p124, %p125
      %p127 = scmp.ne.s32.totalorder %s118, %s119
      %p128 = scmp.eq.s32.totalorder %s24, 0
      %p129 = por %p127, %p128
      %p130 = scmp.ne.s32.totalorder %s118, %s119
      %p131 = scmp.eq.s32.totalorder %s25, 1
      %p132 = por %p130, %p131
      %p134 = scmp.ne.s32.totalorder %s119, %s133
      %p135 = scmp.eq.s32.totalorder %s25, 0
      %p136 = por %p134, %p135
      %s138 = sadd.s32 %s137, 1
      %p141 = scmp.eq.s32.totalorder %s19, 1
      %p142 = scmp.ne.s32.totalorder %s137, %s139
      %p143 = scmp.eq.s32.totalorder %s19, 0
      %p144 = por %p142, %p143
      %p145 = scmp.ne.s32.totalorder %s137, %s139
      %p146 = scmp.eq.s32.totalorder %s24, 1
      %p147 = por %p145, %p146
      %p148 = scmp.ne.s32.totalorder %s139, %s140
      %p149 = scmp.eq.s32.totalorder %s24, 0
      %p150 = por %p148, %p149
      %p151 = scmp.ne.s32.totalorder %s139, %s140
      %p152 = scmp.eq.s32.totalorder %s25, 1
      %p153 = por %p151, %p152
      %p155 = scmp.ne.s32.totalorder %s140, %s154
      %p156 = scmp.eq.s32.totalorder %s25, 0
      %p157 = por %p155, %p156
      %s159 = sadd.s32 %s158, 1
      %p162 = scmp.eq.s32.totalorder %s19, 1
      %p163 = scmp.ne.s32.totalorder %s158, %s160
      %p164 = scmp.eq.s32.totalorder %s19, 0
      %p165 = por %p163, %p164
      %p166 = scmp.ne.s32.totalorder %s158, %s160
      %p167 = scmp.eq.s32.totalorder %s24, 1
      %p168 = por %p166, %p167
      %p169 = scmp.ne.s32.totalorder %s160, %s161
      %p170 = scmp.eq.s32.totalorder %s24, 0
      %p171 = por %p169, %p170
      %p172 = scmp.ne.s32.totalorder %s160, %s161
      %p173 = scmp.eq.s32.totalorder %s25, 1
      %p174 = por %p172, %p173
      %p176 = scmp.ne.s32.totalorder %s161, %s175
      %p177 = scmp.eq.s32.totalorder %s25, 0
      %p178 = por %p176, %p177
      %s179 = ssub.s32 %s19, %s26
      %p180 = scmp.eq.s32.totalorder %s179, 0
      %s182 = sadd.s32 %s181, 1
      %s183 = scalar_select %p180, %s181, %s182
      %p186 = pneg %p180
      %p187 = scmp.eq.s32.totalorder %s19, 1
      %p188 = por %p186, %p187
      %p189 = scmp.ne.s32.totalorder %s181, %s184
      %p190 = scmp.eq.s32.totalorder %s19, 0
      %p191 = por %p189, %p190
      %p192 = scmp.ne.s32.totalorder %s181, %s184
      %p193 = scmp.eq.s32.totalorder %s24, 1
      %p194 = por %p192, %p193
      %p195 = scmp.ne.s32.totalorder %s184, %s185
      %p196 = scmp.eq.s32.totalorder %s24, 0
      %p197 = por %p195, %p196
      %p198 = scmp.ne.s32.totalorder %s184, %s185
      %p199 = scmp.eq.s32.totalorder %s25, 1
      %p200 = por %p198, %p199
      %p202 = scmp.ne.s32.totalorder %s185, %s201
      %p203 = scmp.eq.s32.totalorder %s25, 0
      %p204 = por %p202, %p203
      %p205 = scmp.le.s32.totalorder 1, %s19
      %p206 = scmp.lt.s32.totalorder %s19, 3
      %p207 = pnand %p205, %p206
      %p208 = pneg %p207
      // Predicated region
      $region9: #{tpu_custom_call.1} parent=5 // pred_check
        _
      $region10: #{tpu_custom_call.1} parent=5 // pred_check_branch
        %210 = sbr.rel (%p207) target = $region12
      $region11: #{tpu_custom_call.1} parent=5 // pred_region
        %s211 = ssub.s32 %s19, 1
        // Predicated region
        $region13: #{tpu_custom_call.1} parent=11 // pred_check
          %p212 = pneg %p66
        $region14: #{tpu_custom_call.1} parent=11 // pred_check_branch
          %214 = sbr.rel (%p212) target = $region16
        $region15: #{tpu_custom_call.1} parent=11 // pred_region
          _
        $region16: #{tpu_custom_call.1} parent=11 // pred_fallthru
          _
        // Predicated region
        $region17: #{tpu_custom_call.1} parent=11 // pred_check
          %p215 = pneg %p87
        $region18: #{tpu_custom_call.1} parent=11 // pred_check_branch
          %217 = sbr.rel (%p215) target = $region20
        $region19: #{tpu_custom_call.1} parent=11 // pred_region
          %s219 = ssub.s32 512, 512
          %220 = vsyncadd [#allocation5], %s219
          %s221 = sshll.u32 [#allocation4], 4
          %s222 = int_to_ptr.vmem [resolvable:$true] %s221
          %227 = dma.hbm_to_vmem [thread:$0]  %s2, 512, %s222, [#allocation5], 128, 128, 8
        $region20: #{tpu_custom_call.1} parent=11 // pred_fallthru
          _
        // Predicated region
        $region21: #{tpu_custom_call.1} parent=11 // pred_check
          %p228 = pneg %p108
        $region22: #{tpu_custom_call.1} parent=11 // pred_check_branch
          %230 = sbr.rel (%p228) target = $region24
        $region23: #{tpu_custom_call.1} parent=11 // pred_region
          %s232 = ssub.s32 16, 16
          %233 = vsyncadd [#allocation5], %s232
          %s235 = sshll.u32 [#allocation6], 4
          %s236 = int_to_ptr.vmem [resolvable:$true] %s235
          %238 = dma.hbm_to_vmem [thread:$0]  %s3, 16, %s236, [#allocation5]
        $region24: #{tpu_custom_call.1} parent=11 // pred_fallthru
          _
        // Predicated region
        $region25: #{tpu_custom_call.1} parent=11 // pred_check
          %p239 = pneg %p129
        $region26: #{tpu_custom_call.1} parent=11 // pred_check_branch
          %241 = sbr.rel (%p239) target = $region28
        $region27: #{tpu_custom_call.1} parent=11 // pred_region
          %s243 = ssub.s32 16, 16
          %244 = vsyncadd [#allocation8], %s243
          %s246 = sshll.u32 [#allocation7], 4
          %s247 = int_to_ptr.vmem [resolvable:$true] %s246
          %249 = dma.hbm_to_vmem [thread:$0]  %s4, 16, %s247, [#allocation8]
        $region28: #{tpu_custom_call.1} parent=11 // pred_fallthru
          _
        // Predicated region
        $region29: #{tpu_custom_call.1} parent=11 // pred_check
          %p250 = pneg %p150
        $region30: #{tpu_custom_call.1} parent=11 // pred_check_branch
          %252 = sbr.rel (%p250) target = $region32
        $region31: #{tpu_custom_call.1} parent=11 // pred_region
          %s254 = ssub.s32 16, 16
          %255 = vsyncadd [#allocation8], %s254
          %s257 = sshll.u32 [#allocation9], 4
          %s258 = int_to_ptr.vmem [resolvable:$true] %s257
          %260 = dma.hbm_to_vmem [thread:$0]  %s5, 16, %s258, [#allocation8]
        $region32: #{tpu_custom_call.1} parent=11 // pred_fallthru
          _
        // Predicated region
        $region33: #{tpu_custom_call.1} parent=11 // pred_check
          %p261 = pneg %p171
        $region34: #{tpu_custom_call.1} parent=11 // pred_check_branch
          %263 = sbr.rel (%p261) target = $region36
        $region35: #{tpu_custom_call.1} parent=11 // pred_region
          %s265 = ssub.s32 16, 16
          %266 = vsyncadd [#allocation11], %s265
          %s268 = sshll.u32 [#allocation10], 4
          %s269 = int_to_ptr.vmem [resolvable:$true] %s268
          %271 = dma.hbm_to_vmem [thread:$0]  %s6, 16, %s269, [#allocation11]
        $region36: #{tpu_custom_call.1} parent=11 // pred_fallthru
          _
      $region12: #{tpu_custom_call.1} parent=5 // pred_fallthru
        _
      %p272 = scmp.lt.s32.totalorder %s19, 2
      // Predicated region
      $region37: #{tpu_custom_call.1} parent=5 // pred_check
        %p273 = pneg %p272
      $region38: #{tpu_custom_call.1} parent=5 // pred_check_branch
        %275 = sbr.rel (%p273) target = $region40
      $region39: #{tpu_custom_call.1} parent=5 // pred_region
        // Predicated region
        $region41: #{tpu_custom_call.1} parent=39 // pred_check
          %p276 = pneg %p39
        $region42: #{tpu_custom_call.1} parent=39 // pred_check_branch
          %278 = sbr.rel (%p276) target = $region44
        $region43: #{tpu_custom_call.1} parent=39 // pred_region
          %s279 = sand.u32 %s29, 1
          %s280 = scalar_lea.sflag [#allocation3], %s279
          %s281 = sand.u32 %s29, 1
          %s282 = smul.addr %s281, 2048
          %s283 = scalar_lea.vmem [#allocation2], %s282
          %s284 = smul.u32 4, %s19
          %s286 = ssub.s32 32768, 32768
          %287 = vsyncadd %s280, %s286
          %s288 = smul.addr %s284, 64
          %s289 = smul.addr %s288, 128
          %s290 = scalar_lea.hbm %s0, %s289
          %s291 = sshll.u32 %s283, 4
          %s292 = int_to_ptr.vmem [resolvable:$true] %s291
          %297 = dma.hbm_to_vmem [thread:$0]  %s290, 32768, %s292, %s280, 128, 128, 8
        $region44: #{tpu_custom_call.1} parent=39 // pred_fallthru
          _
      $region40: #{tpu_custom_call.1} parent=5 // pred_fallthru
        _
      %p298 = scmp.le.s32.totalorder 1, %s19
      %p299 = scmp.lt.s32.totalorder %s19, 3
      %p300 = pnand %p298, %p299
      %p301 = pneg %p300
      // Predicated region
      $region45: #{tpu_custom_call.1} parent=5 // pred_check
        _
      $region46: #{tpu_custom_call.1} parent=5 // pred_check_branch
        %303 = sbr.rel (%p300) target = $region48
      $region47: #{tpu_custom_call.1} parent=5 // pred_region
        %s304 = ssub.s32 %s19, 1
        %s305 = sand.u32 %s32, 1
        %s306 = scalar_lea.sflag [#allocation3], %s305
        %s307 = sand.u32 %s32, 1
        %s308 = smul.addr %s307, 2048
        %s309 = scalar_lea.vmem [#allocation2], %s308
        // Predicated region
        $region49: #{tpu_custom_call.1} parent=47 // pred_check
          %p310 = pneg %p45
        $region50: #{tpu_custom_call.1} parent=47 // pred_check_branch
          %312 = sbr.rel (%p310) target = $region52
        $region51: #{tpu_custom_call.1} parent=47 // pred_region
          %313 = dma.done %s306, 32768
        $region52: #{tpu_custom_call.1} parent=47 // pred_fallthru
          _
        // Predicated region
        $region53: #{tpu_custom_call.1} parent=47 // pred_check
          %p314 = pneg %p87
        $region54: #{tpu_custom_call.1} parent=47 // pred_check_branch
          %316 = sbr.rel (%p314) target = $region56
        $region55: #{tpu_custom_call.1} parent=47 // pred_region
          %317 = dma.done [#allocation5], 512
        $region56: #{tpu_custom_call.1} parent=47 // pred_fallthru
          _
        // Predicated region
        $region57: #{tpu_custom_call.1} parent=47 // pred_check
          %p318 = pneg %p108
        $region58: #{tpu_custom_call.1} parent=47 // pred_check_branch
          %320 = sbr.rel (%p318) target = $region60
        $region59: #{tpu_custom_call.1} parent=47 // pred_region
          %321 = dma.done [#allocation5], 16
        $region60: #{tpu_custom_call.1} parent=47 // pred_fallthru
          _
        // Predicated region
        $region61: #{tpu_custom_call.1} parent=47 // pred_check
          %p322 = pneg %p129
        $region62: #{tpu_custom_call.1} parent=47 // pred_check_branch
          %324 = sbr.rel (%p322) target = $region64
        $region63: #{tpu_custom_call.1} parent=47 // pred_region
          %325 = dma.done [#allocation8], 16
        $region64: #{tpu_custom_call.1} parent=47 // pred_fallthru
          _
        // Predicated region
        $region65: #{tpu_custom_call.1} parent=47 // pred_check
          %p326 = pneg %p150
        $region66: #{tpu_custom_call.1} parent=47 // pred_check_branch
          %328 = sbr.rel (%p326) target = $region68
        $region67: #{tpu_custom_call.1} parent=47 // pred_region
          %329 = dma.done [#allocation8], 16
        $region68: #{tpu_custom_call.1} parent=47 // pred_fallthru
          _
        // Predicated region
        $region69: #{tpu_custom_call.1} parent=47 // pred_check
          %p330 = pneg %p171
        $region70: #{tpu_custom_call.1} parent=47 // pred_check_branch
          %332 = sbr.rel (%p330) target = $region72
        $region71: #{tpu_custom_call.1} parent=47 // pred_region
          %333 = dma.done [#allocation11], 16
        $region72: #{tpu_custom_call.1} parent=47 // pred_fallthru
          _
        %s334 = sand.u32 %s32, 1
        %s335 = scalar_lea.sflag [#allocation3], %s334
        %s336 = sand.u32 %s32, 1
        %s337 = smul.addr %s336, 2048
        %s338 = scalar_lea.vmem [#allocation2], %s337
        %p339 = pneg %p45
        %p340 = pneg %p42
        %p341 = pneg %p66
        %p342 = pneg %p63
        %p343 = pneg %p87
        %p344 = pneg %p84
        %p345 = pneg %p108
        %p346 = pneg %p105
        %p347 = pneg %p129
        %p348 = pneg %p126
        %p349 = pneg %p150
        %p350 = pneg %p147
        %p351 = pneg %p171
        %p352 = pneg %p168
        %p353 = pneg %p197
        %p354 = pneg %p194
        %s355 = smul.u32 10, %s24
        %p356 = scmp.lt.s32.totalorder %s355, 19
        %s357 = scalar_select %p356, %s355, 19
        %s358 = smul.addr %s357, 8
        %s359 = scalar_lea.vmem %s7, %s358
        %s360 = smul.u32 4, %s24
        %s361 = smul.u32 10, %s24
        %p362 = scmp.lt.s32.totalorder %s361, 19
        %s363 = scalar_select %p362, %s361, 19
        %s364 = smul.addr %s363, 8
        %s365 = scalar_lea.vmem %s7, %s364
        %s366 = smul.u32 10, %s24
        %v367 = vld [vmem:[%s309] sm:$0xff]
        %v368 = vld [vmem:[%s309 + $0x8] sm:$0xff]
        %v369 = vld [vmem:[%s309 + $0x10] sm:$0xff]
        %v370 = vld [vmem:[%s309 + $0x18] sm:$0xff]
        %v371 = vld [vmem:[%s309 + $0x20] sm:$0xff]
        %v372 = vld [vmem:[%s309 + $0x28] sm:$0xff]
        %v373 = vld [vmem:[%s309 + $0x30] sm:$0xff]
        %v374 = vld [vmem:[%s309 + $0x38] sm:$0xff]
        %v375 = vld [vmem:[%s309 + $0x40] sm:$0xff]
        %v376 = vld [vmem:[%s309 + $0x48] sm:$0xff]
        %v377 = vld [vmem:[%s309 + $0x50] sm:$0xff]
        %v378 = vld [vmem:[%s309 + $0x58] sm:$0xff]
        %v379 = vld [vmem:[%s309 + $0x60] sm:$0xff]
        %v380 = vld [vmem:[%s309 + $0x68] sm:$0xff]
        %v381 = vld [vmem:[%s309 + $0x70] sm:$0xff]
        %v382 = vld [vmem:[%s309 + $0x78] sm:$0xff]
        %v383 = vld [vmem:[%s309 + $0x80] sm:$0xff]
        %v384 = vld [vmem:[%s309 + $0x88] sm:$0xff]
        %v385 = vld [vmem:[%s309 + $0x90] sm:$0xff]
        %v386 = vld [vmem:[%s309 + $0x98] sm:$0xff]
        %v387 = vld [vmem:[%s309 + $0xa0] sm:$0xff]
        %v388 = vld [vmem:[%s309 + $0xa8] sm:$0xff]
        %v389 = vld [vmem:[%s309 + $0xb0] sm:$0xff]
        %v390 = vld [vmem:[%s309 + $0xb8] sm:$0xff]
        %v391 = vld [vmem:[%s309 + $0xc0] sm:$0xff]
        %v392 = vld [vmem:[%s309 + $0xc8] sm:$0xff]
        %v393 = vld [vmem:[%s309 + $0xd0] sm:$0xff]
        %v394 = vld [vmem:[%s309 + $0xd8] sm:$0xff]
        %v395 = vld [vmem:[%s309 + $0xe0] sm:$0xff]
        %v396 = vld [vmem:[%s309 + $0xe8] sm:$0xff]
        %v397 = vld [vmem:[%s309 + $0xf0] sm:$0xff]
        %v398 = vld [vmem:[%s309 + $0xf8] sm:$0xff]
        %v399 = vld [vmem:[%s309 + $0x100] sm:$0xff]
        %v400 = vld [vmem:[%s309 + $0x108] sm:$0xff]
        %v401 = vld [vmem:[%s309 + $0x110] sm:$0xff]
        %v402 = vld [vmem:[%s309 + $0x118] sm:$0xff]
        %v403 = vld [vmem:[%s309 + $0x120] sm:$0xff]
        %v404 = vld [vmem:[%s309 + $0x128] sm:$0xff]
        %v405 = vld [vmem:[%s309 + $0x130] sm:$0xff]
        %v406 = vld [vmem:[%s309 + $0x138] sm:$0xff]
        %v407 = vld [vmem:[%s309 + $0x140] sm:$0xff]
        %v408 = vld [vmem:[%s309 + $0x148] sm:$0xff]
        %v409 = vld [vmem:[%s309 + $0x150] sm:$0xff]
        %v410 = vld [vmem:[%s309 + $0x158] sm:$0xff]
        %v411 = vld [vmem:[%s309 + $0x160] sm:$0xff]
        %v412 = vld [vmem:[%s309 + $0x168] sm:$0xff]
        %v413 = vld [vmem:[%s309 + $0x170] sm:$0xff]
        %v414 = vld [vmem:[%s309 + $0x178] sm:$0xff]
        %v415 = vld [vmem:[%s309 + $0x180] sm:$0xff]
        %v416 = vld [vmem:[%s309 + $0x188] sm:$0xff]
        %v417 = vld [vmem:[%s309 + $0x190] sm:$0xff]
        %v418 = vld [vmem:[%s309 + $0x198] sm:$0xff]
        %v419 = vld [vmem:[%s309 + $0x1a0] sm:$0xff]
        %v420 = vld [vmem:[%s309 + $0x1a8] sm:$0xff]
        %v421 = vld [vmem:[%s309 + $0x1b0] sm:$0xff]
        %v422 = vld [vmem:[%s309 + $0x1b8] sm:$0xff]
        %v423 = vld [vmem:[%s309 + $0x1c0] sm:$0xff]
        %v424 = vld [vmem:[%s309 + $0x1c8] sm:$0xff]
        %v425 = vld [vmem:[%s309 + $0x1d0] sm:$0xff]
        %v426 = vld [vmem:[%s309 + $0x1d8] sm:$0xff]
        %v427 = vld [vmem:[%s309 + $0x1e0] sm:$0xff]
        %v428 = vld [vmem:[%s309 + $0x1e8] sm:$0xff]
        %v429 = vld [vmem:[%s309 + $0x1f0] sm:$0xff]
        %v430 = vld [vmem:[%s309 + $0x1f8] sm:$0xff]
        %v431 = vld [vmem:[%s309 + $0x200] sm:$0xff]
        %v432 = vld [vmem:[%s309 + $0x208] sm:$0xff]
        %v433 = vld [vmem:[%s309 + $0x210] sm:$0xff]
        %v434 = vld [vmem:[%s309 + $0x218] sm:$0xff]
        %v435 = vld [vmem:[%s309 + $0x220] sm:$0xff]
        %v436 = vld [vmem:[%s309 + $0x228] sm:$0xff]
        %v437 = vld [vmem:[%s309 + $0x230] sm:$0xff]
        %v438 = vld [vmem:[%s309 + $0x238] sm:$0xff]
        %v439 = vld [vmem:[%s309 + $0x240] sm:$0xff]
        %v440 = vld [vmem:[%s309 + $0x248] sm:$0xff]
        %v441 = vld [vmem:[%s309 + $0x250] sm:$0xff]
        %v442 = vld [vmem:[%s309 + $0x258] sm:$0xff]
        %v443 = vld [vmem:[%s309 + $0x260] sm:$0xff]
        %v444 = vld [vmem:[%s309 + $0x268] sm:$0xff]
        %v445 = vld [vmem:[%s309 + $0x270] sm:$0xff]
        %v446 = vld [vmem:[%s309 + $0x278] sm:$0xff]
        %v447 = vld [vmem:[%s309 + $0x280] sm:$0xff]
        %v448 = vld [vmem:[%s309 + $0x288] sm:$0xff]
        %v449 = vld [vmem:[%s309 + $0x290] sm:$0xff]
        %v450 = vld [vmem:[%s309 + $0x298] sm:$0xff]
        %v451 = vld [vmem:[%s309 + $0x2a0] sm:$0xff]
        %v452 = vld [vmem:[%s309 + $0x2a8] sm:$0xff]
        %v453 = vld [vmem:[%s309 + $0x2b0] sm:$0xff]
        %v454 = vld [vmem:[%s309 + $0x2b8] sm:$0xff]
        %v455 = vld [vmem:[%s309 + $0x2c0] sm:$0xff]
        %v456 = vld [vmem:[%s309 + $0x2c8] sm:$0xff]
        %v457 = vld [vmem:[%s309 + $0x2d0] sm:$0xff]
        %v458 = vld [vmem:[%s309 + $0x2d8] sm:$0xff]
        %v459 = vld [vmem:[%s309 + $0x2e0] sm:$0xff]
        %v460 = vld [vmem:[%s309 + $0x2e8] sm:$0xff]
        %v461 = vld [vmem:[%s309 + $0x2f0] sm:$0xff]
        %v462 = vld [vmem:[%s309 + $0x2f8] sm:$0xff]
        %v463 = vld [vmem:[%s309 + $0x300] sm:$0xff]
        %v464 = vld [vmem:[%s309 + $0x308] sm:$0xff]
        %v465 = vld [vmem:[%s309 + $0x310] sm:$0xff]
        %v466 = vld [vmem:[%s309 + $0x318] sm:$0xff]
        %v467 = vld [vmem:[%s309 + $0x320] sm:$0xff]
        %v468 = vld [vmem:[%s309 + $0x328] sm:$0xff]
        %v469 = vld [vmem:[%s309 + $0x330] sm:$0xff]
        %v470 = vld [vmem:[%s309 + $0x338] sm:$0xff]
        %v471 = vld [vmem:[%s309 + $0x340] sm:$0xff]
        %v472 = vld [vmem:[%s309 + $0x348] sm:$0xff]
        %v473 = vld [vmem:[%s309 + $0x350] sm:$0xff]
        %v474 = vld [vmem:[%s309 + $0x358] sm:$0xff]
        %v475 = vld [vmem:[%s309 + $0x360] sm:$0xff]
        %v476 = vld [vmem:[%s309 + $0x368] sm:$0xff]
        %v477 = vld [vmem:[%s309 + $0x370] sm:$0xff]
        %v478 = vld [vmem:[%s309 + $0x378] sm:$0xff]
        %v479 = vld [vmem:[%s309 + $0x380] sm:$0xff]
        %v480 = vld [vmem:[%s309 + $0x388] sm:$0xff]
        %v481 = vld [vmem:[%s309 + $0x390] sm:$0xff]
        %v482 = vld [vmem:[%s309 + $0x398] sm:$0xff]
        %v483 = vld [vmem:[%s309 + $0x3a0] sm:$0xff]
        %v484 = vld [vmem:[%s309 + $0x3a8] sm:$0xff]
        %v485 = vld [vmem:[%s309 + $0x3b0] sm:$0xff]
        %v486 = vld [vmem:[%s309 + $0x3b8] sm:$0xff]
        %v487 = vld [vmem:[%s309 + $0x3c0] sm:$0xff]
        %v488 = vld [vmem:[%s309 + $0x3c8] sm:$0xff]
        %v489 = vld [vmem:[%s309 + $0x3d0] sm:$0xff]
        %v490 = vld [vmem:[%s309 + $0x3d8] sm:$0xff]
        %v491 = vld [vmem:[%s309 + $0x3e0] sm:$0xff]
        %v492 = vld [vmem:[%s309 + $0x3e8] sm:$0xff]
        %v493 = vld [vmem:[%s309 + $0x3f0] sm:$0xff]
        %v494 = vld [vmem:[%s309 + $0x3f8] sm:$0xff]
        %v495 = vld [vmem:[%s309 + $0x400] sm:$0xff]
        %v496 = vld [vmem:[%s309 + $0x408] sm:$0xff]
        %v497 = vld [vmem:[%s309 + $0x410] sm:$0xff]
        %v498 = vld [vmem:[%s309 + $0x418] sm:$0xff]
        %v499 = vld [vmem:[%s309 + $0x420] sm:$0xff]
        %v500 = vld [vmem:[%s309 + $0x428] sm:$0xff]
        %v501 = vld [vmem:[%s309 + $0x430] sm:$0xff]
        %v502 = vld [vmem:[%s309 + $0x438] sm:$0xff]
        %v503 = vld [vmem:[%s309 + $0x440] sm:$0xff]
        %v504 = vld [vmem:[%s309 + $0x448] sm:$0xff]
        %v505 = vld [vmem:[%s309 + $0x450] sm:$0xff]
        %v506 = vld [vmem:[%s309 + $0x458] sm:$0xff]
        %v507 = vld [vmem:[%s309 + $0x460] sm:$0xff]
        %v508 = vld [vmem:[%s309 + $0x468] sm:$0xff]
        %v509 = vld [vmem:[%s309 + $0x470] sm:$0xff]
        %v510 = vld [vmem:[%s309 + $0x478] sm:$0xff]
        %v511 = vld [vmem:[%s309 + $0x480] sm:$0xff]
        %v512 = vld [vmem:[%s309 + $0x488] sm:$0xff]
        %v513 = vld [vmem:[%s309 + $0x490] sm:$0xff]
        %v514 = vld [vmem:[%s309 + $0x498] sm:$0xff]
        %v515 = vld [vmem:[%s309 + $0x4a0] sm:$0xff]
        %v516 = vld [vmem:[%s309 + $0x4a8] sm:$0xff]
        %v517 = vld [vmem:[%s309 + $0x4b0] sm:$0xff]
        %v518 = vld [vmem:[%s309 + $0x4b8] sm:$0xff]
        %v519 = vld [vmem:[%s309 + $0x4c0] sm:$0xff]
        %v520 = vld [vmem:[%s309 + $0x4c8] sm:$0xff]
        %v521 = vld [vmem:[%s309 + $0x4d0] sm:$0xff]
        %v522 = vld [vmem:[%s309 + $0x4d8] sm:$0xff]
        %v523 = vld [vmem:[%s309 + $0x4e0] sm:$0xff]
        %v524 = vld [vmem:[%s309 + $0x4e8] sm:$0xff]
        %v525 = vld [vmem:[%s309 + $0x4f0] sm:$0xff]
        %v526 = vld [vmem:[%s309 + $0x4f8] sm:$0xff]
        %v527 = vld [vmem:[%s309 + $0x500] sm:$0xff]
        %v528 = vld [vmem:[%s309 + $0x508] sm:$0xff]
        %v529 = vld [vmem:[%s309 + $0x510] sm:$0xff]
        %v530 = vld [vmem:[%s309 + $0x518] sm:$0xff]
        %v531 = vld [vmem:[%s309 + $0x520] sm:$0xff]
        %v532 = vld [vmem:[%s309 + $0x528] sm:$0xff]
        %v533 = vld [vmem:[%s309 + $0x530] sm:$0xff]
        %v534 = vld [vmem:[%s309 + $0x538] sm:$0xff]
        %v535 = vld [vmem:[%s309 + $0x540] sm:$0xff]
        %v536 = vld [vmem:[%s309 + $0x548] sm:$0xff]
        %v537 = vld [vmem:[%s309 + $0x550] sm:$0xff]
        %v538 = vld [vmem:[%s309 + $0x558] sm:$0xff]
        %v539 = vld [vmem:[%s309 + $0x560] sm:$0xff]
        %v540 = vld [vmem:[%s309 + $0x568] sm:$0xff]
        %v541 = vld [vmem:[%s309 + $0x570] sm:$0xff]
        %v542 = vld [vmem:[%s309 + $0x578] sm:$0xff]
        %v543 = vld [vmem:[%s309 + $0x580] sm:$0xff]
        %v544 = vld [vmem:[%s309 + $0x588] sm:$0xff]
        %v545 = vld [vmem:[%s309 + $0x590] sm:$0xff]
        %v546 = vld [vmem:[%s309 + $0x598] sm:$0xff]
        %v547 = vld [vmem:[%s309 + $0x5a0] sm:$0xff]
        %v548 = vld [vmem:[%s309 + $0x5a8] sm:$0xff]
        %v549 = vld [vmem:[%s309 + $0x5b0] sm:$0xff]
        %v550 = vld [vmem:[%s309 + $0x5b8] sm:$0xff]
        %v551 = vld [vmem:[%s309 + $0x5c0] sm:$0xff]
        %v552 = vld [vmem:[%s309 + $0x5c8] sm:$0xff]
        %v553 = vld [vmem:[%s309 + $0x5d0] sm:$0xff]
        %v554 = vld [vmem:[%s309 + $0x5d8] sm:$0xff]
        %v555 = vld [vmem:[%s309 + $0x5e0] sm:$0xff]
        %v556 = vld [vmem:[%s309 + $0x5e8] sm:$0xff]
        %v557 = vld [vmem:[%s309 + $0x5f0] sm:$0xff]
        %v558 = vld [vmem:[%s309 + $0x5f8] sm:$0xff]
        %v559 = vld [vmem:[%s309 + $0x600] sm:$0xff]
        %v560 = vld [vmem:[%s309 + $0x608] sm:$0xff]
        %v561 = vld [vmem:[%s309 + $0x610] sm:$0xff]
        %v562 = vld [vmem:[%s309 + $0x618] sm:$0xff]
        %v563 = vld [vmem:[%s309 + $0x620] sm:$0xff]
        %v564 = vld [vmem:[%s309 + $0x628] sm:$0xff]
        %v565 = vld [vmem:[%s309 + $0x630] sm:$0xff]
        %v566 = vld [vmem:[%s309 + $0x638] sm:$0xff]
        %v567 = vld [vmem:[%s309 + $0x640] sm:$0xff]
        %v568 = vld [vmem:[%s309 + $0x648] sm:$0xff]
        %v569 = vld [vmem:[%s309 + $0x650] sm:$0xff]
        %v570 = vld [vmem:[%s309 + $0x658] sm:$0xff]
        %v571 = vld [vmem:[%s309 + $0x660] sm:$0xff]
        %v572 = vld [vmem:[%s309 + $0x668] sm:$0xff]
        %v573 = vld [vmem:[%s309 + $0x670] sm:$0xff]
        %v574 = vld [vmem:[%s309 + $0x678] sm:$0xff]
        %v575 = vld [vmem:[%s309 + $0x680] sm:$0xff]
        %v576 = vld [vmem:[%s309 + $0x688] sm:$0xff]
        %v577 = vld [vmem:[%s309 + $0x690] sm:$0xff]
        %v578 = vld [vmem:[%s309 + $0x698] sm:$0xff]
        %v579 = vld [vmem:[%s309 + $0x6a0] sm:$0xff]
        %v580 = vld [vmem:[%s309 + $0x6a8] sm:$0xff]
        %v581 = vld [vmem:[%s309 + $0x6b0] sm:$0xff]
        %v582 = vld [vmem:[%s309 + $0x6b8] sm:$0xff]
        %v583 = vld [vmem:[%s309 + $0x6c0] sm:$0xff]
        %v584 = vld [vmem:[%s309 + $0x6c8] sm:$0xff]
        %v585 = vld [vmem:[%s309 + $0x6d0] sm:$0xff]
        %v586 = vld [vmem:[%s309 + $0x6d8] sm:$0xff]
        %v587 = vld [vmem:[%s309 + $0x6e0] sm:$0xff]
        %v588 = vld [vmem:[%s309 + $0x6e8] sm:$0xff]
        %v589 = vld [vmem:[%s309 + $0x6f0] sm:$0xff]
        %v590 = vld [vmem:[%s309 + $0x6f8] sm:$0xff]
        %v591 = vld [vmem:[%s309 + $0x700] sm:$0xff]
        %v592 = vld [vmem:[%s309 + $0x708] sm:$0xff]
        %v593 = vld [vmem:[%s309 + $0x710] sm:$0xff]
        %v594 = vld [vmem:[%s309 + $0x718] sm:$0xff]
        %v595 = vld [vmem:[%s309 + $0x720] sm:$0xff]
        %v596 = vld [vmem:[%s309 + $0x728] sm:$0xff]
        %v597 = vld [vmem:[%s309 + $0x730] sm:$0xff]
        %v598 = vld [vmem:[%s309 + $0x738] sm:$0xff]
        %v599 = vld [vmem:[%s309 + $0x740] sm:$0xff]
        %v600 = vld [vmem:[%s309 + $0x748] sm:$0xff]
        %v601 = vld [vmem:[%s309 + $0x750] sm:$0xff]
        %v602 = vld [vmem:[%s309 + $0x758] sm:$0xff]
        %v603 = vld [vmem:[%s309 + $0x760] sm:$0xff]
        %v604 = vld [vmem:[%s309 + $0x768] sm:$0xff]
        %v605 = vld [vmem:[%s309 + $0x770] sm:$0xff]
        %v606 = vld [vmem:[%s309 + $0x778] sm:$0xff]
        %v607 = vld [vmem:[%s309 + $0x780] sm:$0xff]
        %v608 = vld [vmem:[%s309 + $0x788] sm:$0xff]
        %v609 = vld [vmem:[%s309 + $0x790] sm:$0xff]
        %v610 = vld [vmem:[%s309 + $0x798] sm:$0xff]
        %v611 = vld [vmem:[%s309 + $0x7a0] sm:$0xff]
        %v612 = vld [vmem:[%s309 + $0x7a8] sm:$0xff]
        %v613 = vld [vmem:[%s309 + $0x7b0] sm:$0xff]
        %v614 = vld [vmem:[%s309 + $0x7b8] sm:$0xff]
        %v615 = vld [vmem:[%s309 + $0x7c0] sm:$0xff]
        %v616 = vld [vmem:[%s309 + $0x7c8] sm:$0xff]
        %v617 = vld [vmem:[%s309 + $0x7d0] sm:$0xff]
        %v618 = vld [vmem:[%s309 + $0x7d8] sm:$0xff]
        %v619 = vld [vmem:[%s309 + $0x7e0] sm:$0xff]
        %v620 = vld [vmem:[%s309 + $0x7e8] sm:$0xff]
        %v621 = vld [vmem:[%s309 + $0x7f0] sm:$0xff]
        %v622 = vld [vmem:[%s309 + $0x7f8] sm:$0xff]
        %vm623 = vcmask 408576
        %v624 = vsel %vm623, %v367, -inf
        %v625 = vsel %vm623, %v368, -inf
        %v626 = vmax.f32 %v624, %v625
        %v627 = vrot.slane %v626, 4
        %v628 = vmax.f32 %v626, %v627
        %v629 = vrot.slane %v628, 2
        %v630 = vmax.f32 %v628, %v629
        %v631 = vrot.slane %v630, 1
        %v632 = vmax.f32 %v630, %v631
        %v633 = vsel %vm623, %v369, -inf
        %v634 = vsel %vm623, %v370, -inf
        %v635 = vmax.f32 %v633, %v634
        %v636 = vrot.slane %v635, 4
        %v637 = vmax.f32 %v635, %v636
        %v638 = vrot.slane %v637, 2
        %v639 = vmax.f32 %v637, %v638
        %v640 = vrot.slane %v639, 1
        %v641 = vmax.f32 %v639, %v640
        %v642 = vsel %vm623, %v371, -inf
        %v643 = vsel %vm623, %v372, -inf
        %v644 = vmax.f32 %v642, %v643
        %v645 = vrot.slane %v644, 4
        %v646 = vmax.f32 %v644, %v645
        %v647 = vrot.slane %v646, 2
        %v648 = vmax.f32 %v646, %v647
        %v649 = vrot.slane %v648, 1
        %v650 = vmax.f32 %v648, %v649
        %v651 = vsel %vm623, %v373, -inf
        %v652 = vsel %vm623, %v374, -inf
        %v653 = vmax.f32 %v651, %v652
        %v654 = vrot.slane %v653, 4
        %v655 = vmax.f32 %v653, %v654
        %v656 = vrot.slane %v655, 2
        %v657 = vmax.f32 %v655, %v656
        %v658 = vrot.slane %v657, 1
        %v659 = vmax.f32 %v657, %v658
        %v660 = vsel %vm623, %v375, -inf
        %v661 = vsel %vm623, %v376, -inf
        %v662 = vmax.f32 %v660, %v661
        %v663 = vrot.slane %v662, 4
        %v664 = vmax.f32 %v662, %v663
        %v665 = vrot.slane %v664, 2
        %v666 = vmax.f32 %v664, %v665
        %v667 = vrot.slane %v666, 1
        %v668 = vmax.f32 %v666, %v667
        %v669 = vsel %vm623, %v377, -inf
        %v670 = vsel %vm623, %v378, -inf
        %v671 = vmax.f32 %v669, %v670
        %v672 = vrot.slane %v671, 4
        %v673 = vmax.f32 %v671, %v672
        %v674 = vrot.slane %v673, 2
        %v675 = vmax.f32 %v673, %v674
        %v676 = vrot.slane %v675, 1
        %v677 = vmax.f32 %v675, %v676
        %v678 = vsel %vm623, %v379, -inf
        %v679 = vsel %vm623, %v380, -inf
        %v680 = vmax.f32 %v678, %v679
        %v681 = vrot.slane %v680, 4
        %v682 = vmax.f32 %v680, %v681
        %v683 = vrot.slane %v682, 2
        %v684 = vmax.f32 %v682, %v683
        %v685 = vrot.slane %v684, 1
        %v686 = vmax.f32 %v684, %v685
        %v687 = vsel %vm623, %v381, -inf
        %v688 = vsel %vm623, %v382, -inf
        %v689 = vmax.f32 %v687, %v688
        %v690 = vrot.slane %v689, 4
        %v691 = vmax.f32 %v689, %v690
        %v692 = vrot.slane %v691, 2
        %v693 = vmax.f32 %v691, %v692
        %v694 = vrot.slane %v693, 1
        %v695 = vmax.f32 %v693, %v694
        %v696 = vsel %vm623, %v383, -inf
        %v697 = vsel %vm623, %v384, -inf
        %v698 = vmax.f32 %v696, %v697
        %v699 = vrot.slane %v698, 4
        %v700 = vmax.f32 %v698, %v699
        %v701 = vrot.slane %v700, 2
        %v702 = vmax.f32 %v700, %v701
        %v703 = vrot.slane %v702, 1
        %v704 = vmax.f32 %v702, %v703
        %v705 = vsel %vm623, %v385, -inf
        %v706 = vsel %vm623, %v386, -inf
        %v707 = vmax.f32 %v705, %v706
        %v708 = vrot.slane %v707, 4
        %v709 = vmax.f32 %v707, %v708
        %v710 = vrot.slane %v709, 2
        %v711 = vmax.f32 %v709, %v710
        %v712 = vrot.slane %v711, 1
        %v713 = vmax.f32 %v711, %v712
        %v714 = vsel %vm623, %v387, -inf
        %v715 = vsel %vm623, %v388, -inf
        %v716 = vmax.f32 %v714, %v715
        %v717 = vrot.slane %v716, 4
        %v718 = vmax.f32 %v716, %v717
        %v719 = vrot.slane %v718, 2
        %v720 = vmax.f32 %v718, %v719
        %v721 = vrot.slane %v720, 1
        %v722 = vmax.f32 %v720, %v721
        %v723 = vsel %vm623, %v389, -inf
        %v724 = vsel %vm623, %v390, -inf
        %v725 = vmax.f32 %v723, %v724
        %v726 = vrot.slane %v725, 4
        %v727 = vmax.f32 %v725, %v726
        %v728 = vrot.slane %v727, 2
        %v729 = vmax.f32 %v727, %v728
        %v730 = vrot.slane %v729, 1
        %v731 = vmax.f32 %v729, %v730
        %v732 = vsel %vm623, %v391, -inf
        %v733 = vsel %vm623, %v392, -inf
        %v734 = vmax.f32 %v732, %v733
        %v735 = vrot.slane %v734, 4
        %v736 = vmax.f32 %v734, %v735
        %v737 = vrot.slane %v736, 2
        %v738 = vmax.f32 %v736, %v737
        %v739 = vrot.slane %v738, 1
        %v740 = vmax.f32 %v738, %v739
        %v741 = vsel %vm623, %v393, -inf
        %v742 = vsel %vm623, %v394, -inf
        %v743 = vmax.f32 %v741, %v742
        %v744 = vrot.slane %v743, 4
        %v745 = vmax.f32 %v743, %v744
        %v746 = vrot.slane %v745, 2
        %v747 = vmax.f32 %v745, %v746
        %v748 = vrot.slane %v747, 1
        %v749 = vmax.f32 %v747, %v748
        %v750 = vsel %vm623, %v395, -inf
        %v751 = vsel %vm623, %v396, -inf
        %v752 = vmax.f32 %v750, %v751
        %v753 = vrot.slane %v752, 4
        %v754 = vmax.f32 %v752, %v753
        %v755 = vrot.slane %v754, 2
        %v756 = vmax.f32 %v754, %v755
        %v757 = vrot.slane %v756, 1
        %v758 = vmax.f32 %v756, %v757
        %v759 = vsel %vm623, %v397, -inf
        %v760 = vsel %vm623, %v398, -inf
        %v761 = vmax.f32 %v759, %v760
        %v762 = vrot.slane %v761, 4
        %v763 = vmax.f32 %v761, %v762
        %v764 = vrot.slane %v763, 2
        %v765 = vmax.f32 %v763, %v764
        %v766 = vrot.slane %v765, 1
        %v767 = vmax.f32 %v765, %v766
        %v768 = vsel %vm623, %v399, -inf
        %v769 = vsel %vm623, %v400, -inf
        %v770 = vmax.f32 %v768, %v769
        %v771 = vrot.slane %v770, 4
        %v772 = vmax.f32 %v770, %v771
        %v773 = vrot.slane %v772, 2
        %v774 = vmax.f32 %v772, %v773
        %v775 = vrot.slane %v774, 1
        %v776 = vmax.f32 %v774, %v775
        %v777 = vsel %vm623, %v401, -inf
        %v778 = vsel %vm623, %v402, -inf
        %v779 = vmax.f32 %v777, %v778
        %v780 = vrot.slane %v779, 4
        %v781 = vmax.f32 %v779, %v780
        %v782 = vrot.slane %v781, 2
        %v783 = vmax.f32 %v781, %v782
        %v784 = vrot.slane %v783, 1
        %v785 = vmax.f32 %v783, %v784
        %v786 = vsel %vm623, %v403, -inf
        %v787 = vsel %vm623, %v404, -inf
        %v788 = vmax.f32 %v786, %v787
        %v789 = vrot.slane %v788, 4
        %v790 = vmax.f32 %v788, %v789
        %v791 = vrot.slane %v790, 2
        %v792 = vmax.f32 %v790, %v791
        %v793 = vrot.slane %v792, 1
        %v794 = vmax.f32 %v792, %v793
        %v795 = vsel %vm623, %v405, -inf
        %v796 = vsel %vm623, %v406, -inf
        %v797 = vmax.f32 %v795, %v796
        %v798 = vrot.slane %v797, 4
        %v799 = vmax.f32 %v797, %v798
        %v800 = vrot.slane %v799, 2
        %v801 = vmax.f32 %v799, %v800
        %v802 = vrot.slane %v801, 1
        %v803 = vmax.f32 %v801, %v802
        %v804 = vsel %vm623, %v407, -inf
        %v805 = vsel %vm623, %v408, -inf
        %v806 = vmax.f32 %v804, %v805
        %v807 = vrot.slane %v806, 4
        %v808 = vmax.f32 %v806, %v807
        %v809 = vrot.slane %v808, 2
        %v810 = vmax.f32 %v808, %v809
        %v811 = vrot.slane %v810, 1
        %v812 = vmax.f32 %v810, %v811
        %v813 = vsel %vm623, %v409, -inf
        %v814 = vsel %vm623, %v410, -inf
        %v815 = vmax.f32 %v813, %v814
        %v816 = vrot.slane %v815, 4
        %v817 = vmax.f32 %v815, %v816
        %v818 = vrot.slane %v817, 2
        %v819 = vmax.f32 %v817, %v818
        %v820 = vrot.slane %v819, 1
        %v821 = vmax.f32 %v819, %v820
        %v822 = vsel %vm623, %v411, -inf
        %v823 = vsel %vm623, %v412, -inf
        %v824 = vmax.f32 %v822, %v823
        %v825 = vrot.slane %v824, 4
        %v826 = vmax.f32 %v824, %v825
        %v827 = vrot.slane %v826, 2
        %v828 = vmax.f32 %v826, %v827
        %v829 = vrot.slane %v828, 1
        %v830 = vmax.f32 %v828, %v829
        %v831 = vsel %vm623, %v413, -inf
        %v832 = vsel %vm623, %v414, -inf
        %v833 = vmax.f32 %v831, %v832
        %v834 = vrot.slane %v833, 4
        %v835 = vmax.f32 %v833, %v834
        %v836 = vrot.slane %v835, 2
        %v837 = vmax.f32 %v835, %v836
        %v838 = vrot.slane %v837, 1
        %v839 = vmax.f32 %v837, %v838
        %v840 = vsel %vm623, %v415, -inf
        %v841 = vsel %vm623, %v416, -inf
        %v842 = vmax.f32 %v840, %v841
        %v843 = vrot.slane %v842, 4
        %v844 = vmax.f32 %v842, %v843
        %v845 = vrot.slane %v844, 2
        %v846 = vmax.f32 %v844, %v845
        %v847 = vrot.slane %v846, 1
        %v848 = vmax.f32 %v846, %v847
        %v849 = vsel %vm623, %v417, -inf
        %v850 = vsel %vm623, %v418, -inf
        %v851 = vmax.f32 %v849, %v850
        %v852 = vrot.slane %v851, 4
        %v853 = vmax.f32 %v851, %v852
        %v854 = vrot.slane %v853, 2
        %v855 = vmax.f32 %v853, %v854
        %v856 = vrot.slane %v855, 1
        %v857 = vmax.f32 %v855, %v856
        %v858 = vsel %vm623, %v419, -inf
        %v859 = vsel %vm623, %v420, -inf
        %v860 = vmax.f32 %v858, %v859
        %v861 = vrot.slane %v860, 4
        %v862 = vmax.f32 %v860, %v861
        %v863 = vrot.slane %v862, 2
        %v864 = vmax.f32 %v862, %v863
        %v865 = vrot.slane %v864, 1
        %v866 = vmax.f32 %v864, %v865
        %v867 = vsel %vm623, %v421, -inf
        %v868 = vsel %vm623, %v422, -inf
        %v869 = vmax.f32 %v867, %v868
        %v870 = vrot.slane %v869, 4
        %v871 = vmax.f32 %v869, %v870
        %v872 = vrot.slane %v871, 2
        %v873 = vmax.f32 %v871, %v872
        %v874 = vrot.slane %v873, 1
        %v875 = vmax.f32 %v873, %v874
        %v876 = vsel %vm623, %v423, -inf
        %v877 = vsel %vm623, %v424, -inf
        %v878 = vmax.f32 %v876, %v877
        %v879 = vrot.slane %v878, 4
        %v880 = vmax.f32 %v878, %v879
        %v881 = vrot.slane %v880, 2
        %v882 = vmax.f32 %v880, %v881
        %v883 = vrot.slane %v882, 1
        %v884 = vmax.f32 %v882, %v883
        %v885 = vsel %vm623, %v425, -inf
        %v886 = vsel %vm623, %v426, -inf
        %v887 = vmax.f32 %v885, %v886
        %v888 = vrot.slane %v887, 4
        %v889 = vmax.f32 %v887, %v888
        %v890 = vrot.slane %v889, 2
        %v891 = vmax.f32 %v889, %v890
        %v892 = vrot.slane %v891, 1
        %v893 = vmax.f32 %v891, %v892
        %v894 = vsel %vm623, %v427, -inf
        %v895 = vsel %vm623, %v428, -inf
        %v896 = vmax.f32 %v894, %v895
        %v897 = vrot.slane %v896, 4
        %v898 = vmax.f32 %v896, %v897
        %v899 = vrot.slane %v898, 2
        %v900 = vmax.f32 %v898, %v899
        %v901 = vrot.slane %v900, 1
        %v902 = vmax.f32 %v900, %v901
        %v903 = vsel %vm623, %v429, -inf
        %v904 = vsel %vm623, %v430, -inf
        %v905 = vmax.f32 %v903, %v904
        %v906 = vrot.slane %v905, 4
        %v907 = vmax.f32 %v905, %v906
        %v908 = vrot.slane %v907, 2
        %v909 = vmax.f32 %v907, %v908
        %v910 = vrot.slane %v909, 1
        %v911 = vmax.f32 %v909, %v910
        %v912 = vsel %vm623, %v431, -inf
        %v913 = vsel %vm623, %v432, -inf
        %v914 = vmax.f32 %v912, %v913
        %v915 = vrot.slane %v914, 4
        %v916 = vmax.f32 %v914, %v915
        %v917 = vrot.slane %v916, 2
        %v918 = vmax.f32 %v916, %v917
        %v919 = vrot.slane %v918, 1
        %v920 = vmax.f32 %v918, %v919
        %v921 = vsel %vm623, %v433, -inf
        %v922 = vsel %vm623, %v434, -inf
        %v923 = vmax.f32 %v921, %v922
        %v924 = vrot.slane %v923, 4
        %v925 = vmax.f32 %v923, %v924
        %v926 = vrot.slane %v925, 2
        %v927 = vmax.f32 %v925, %v926
        %v928 = vrot.slane %v927, 1
        %v929 = vmax.f32 %v927, %v928
        %v930 = vsel %vm623, %v435, -inf
        %v931 = vsel %vm623, %v436, -inf
        %v932 = vmax.f32 %v930, %v931
        %v933 = vrot.slane %v932, 4
        %v934 = vmax.f32 %v932, %v933
        %v935 = vrot.slane %v934, 2
        %v936 = vmax.f32 %v934, %v935
        %v937 = vrot.slane %v936, 1
        %v938 = vmax.f32 %v936, %v937
        %v939 = vsel %vm623, %v437, -inf
        %v940 = vsel %vm623, %v438, -inf
        %v941 = vmax.f32 %v939, %v940
        %v942 = vrot.slane %v941, 4
        %v943 = vmax.f32 %v941, %v942
        %v944 = vrot.slane %v943, 2
        %v945 = vmax.f32 %v943, %v944
        %v946 = vrot.slane %v945, 1
        %v947 = vmax.f32 %v945, %v946
        %v948 = vsel %vm623, %v439, -inf
        %v949 = vsel %vm623, %v440, -inf
        %v950 = vmax.f32 %v948, %v949
        %v951 = vrot.slane %v950, 4
        %v952 = vmax.f32 %v950, %v951
        %v953 = vrot.slane %v952, 2
        %v954 = vmax.f32 %v952, %v953
        %v955 = vrot.slane %v954, 1
        %v956 = vmax.f32 %v954, %v955
        %v957 = vsel %vm623, %v441, -inf
        %v958 = vsel %vm623, %v442, -inf
        %v959 = vmax.f32 %v957, %v958
        %v960 = vrot.slane %v959, 4
        %v961 = vmax.f32 %v959, %v960
        %v962 = vrot.slane %v961, 2
        %v963 = vmax.f32 %v961, %v962
        %v964 = vrot.slane %v963, 1
        %v965 = vmax.f32 %v963, %v964
        %v966 = vsel %vm623, %v443, -inf
        %v967 = vsel %vm623, %v444, -inf
        %v968 = vmax.f32 %v966, %v967
        %v969 = vrot.slane %v968, 4
        %v970 = vmax.f32 %v968, %v969
        %v971 = vrot.slane %v970, 2
        %v972 = vmax.f32 %v970, %v971
        %v973 = vrot.slane %v972, 1
        %v974 = vmax.f32 %v972, %v973
        %v975 = vsel %vm623, %v445, -inf
        %v976 = vsel %vm623, %v446, -inf
        %v977 = vmax.f32 %v975, %v976
        %v978 = vrot.slane %v977, 4
        %v979 = vmax.f32 %v977, %v978
        %v980 = vrot.slane %v979, 2
        %v981 = vmax.f32 %v979, %v980
        %v982 = vrot.slane %v981, 1
        %v983 = vmax.f32 %v981, %v982
        %v984 = vsel %vm623, %v447, -inf
        %v985 = vsel %vm623, %v448, -inf
        %v986 = vmax.f32 %v984, %v985
        %v987 = vrot.slane %v986, 4
        %v988 = vmax.f32 %v986, %v987
        %v989 = vrot.slane %v988, 2
        %v990 = vmax.f32 %v988, %v989
        %v991 = vrot.slane %v990, 1
        %v992 = vmax.f32 %v990, %v991
        %v993 = vsel %vm623, %v449, -inf
        %v994 = vsel %vm623, %v450, -inf
        %v995 = vmax.f32 %v993, %v994
        %v996 = vrot.slane %v995, 4
        %v997 = vmax.f32 %v995, %v996
        %v998 = vrot.slane %v997, 2
        %v999 = vmax.f32 %v997, %v998
        %v1000 = vrot.slane %v999, 1
        %v1001 = vmax.f32 %v999, %v1000
        %v1002 = vsel %vm623, %v451, -inf
        %v1003 = vsel %vm623, %v452, -inf
        %v1004 = vmax.f32 %v1002, %v1003
        %v1005 = vrot.slane %v1004, 4
        %v1006 = vmax.f32 %v1004, %v1005
        %v1007 = vrot.slane %v1006, 2
        %v1008 = vmax.f32 %v1006, %v1007
        %v1009 = vrot.slane %v1008, 1
        %v1010 = vmax.f32 %v1008, %v1009
        %v1011 = vsel %vm623, %v453, -inf
        %v1012 = vsel %vm623, %v454, -inf
        %v1013 = vmax.f32 %v1011, %v1012
        %v1014 = vrot.slane %v1013, 4
        %v1015 = vmax.f32 %v1013, %v1014
        %v1016 = vrot.slane %v1015, 2
        %v1017 = vmax.f32 %v1015, %v1016
        %v1018 = vrot.slane %v1017, 1
        %v1019 = vmax.f32 %v1017, %v1018
        %v1020 = vsel %vm623, %v455, -inf
        %v1021 = vsel %vm623, %v456, -inf
        %v1022 = vmax.f32 %v1020, %v1021
        %v1023 = vrot.slane %v1022, 4
        %v1024 = vmax.f32 %v1022, %v1023
        %v1025 = vrot.slane %v1024, 2
        %v1026 = vmax.f32 %v1024, %v1025
        %v1027 = vrot.slane %v1026, 1
        %v1028 = vmax.f32 %v1026, %v1027
        %v1029 = vsel %vm623, %v457, -inf
        %v1030 = vsel %vm623, %v458, -inf
        %v1031 = vmax.f32 %v1029, %v1030
        %v1032 = vrot.slane %v1031, 4
        %v1033 = vmax.f32 %v1031, %v1032
        %v1034 = vrot.slane %v1033, 2
        %v1035 = vmax.f32 %v1033, %v1034
        %v1036 = vrot.slane %v1035, 1
        %v1037 = vmax.f32 %v1035, %v1036
        %v1038 = vsel %vm623, %v459, -inf
        %v1039 = vsel %vm623, %v460, -inf
        %v1040 = vmax.f32 %v1038, %v1039
        %v1041 = vrot.slane %v1040, 4
        %v1042 = vmax.f32 %v1040, %v1041
        %v1043 = vrot.slane %v1042, 2
        %v1044 = vmax.f32 %v1042, %v1043
        %v1045 = vrot.slane %v1044, 1
        %v1046 = vmax.f32 %v1044, %v1045
        %v1047 = vsel %vm623, %v461, -inf
        %v1048 = vsel %vm623, %v462, -inf
        %v1049 = vmax.f32 %v1047, %v1048
        %v1050 = vrot.slane %v1049, 4
        %v1051 = vmax.f32 %v1049, %v1050
        %v1052 = vrot.slane %v1051, 2
        %v1053 = vmax.f32 %v1051, %v1052
        %v1054 = vrot.slane %v1053, 1
        %v1055 = vmax.f32 %v1053, %v1054
        %v1056 = vsel %vm623, %v463, -inf
        %v1057 = vsel %vm623, %v464, -inf
        %v1058 = vmax.f32 %v1056, %v1057
        %v1059 = vrot.slane %v1058, 4
        %v1060 = vmax.f32 %v1058, %v1059
        %v1061 = vrot.slane %v1060, 2
        %v1062 = vmax.f32 %v1060, %v1061
        %v1063 = vrot.slane %v1062, 1
        %v1064 = vmax.f32 %v1062, %v1063
        %v1065 = vsel %vm623, %v465, -inf
        %v1066 = vsel %vm623, %v466, -inf
        %v1067 = vmax.f32 %v1065, %v1066
        %v1068 = vrot.slane %v1067, 4
        %v1069 = vmax.f32 %v1067, %v1068
        %v1070 = vrot.slane %v1069, 2
        %v1071 = vmax.f32 %v1069, %v1070
        %v1072 = vrot.slane %v1071, 1
        %v1073 = vmax.f32 %v1071, %v1072
        %v1074 = vsel %vm623, %v467, -inf
        %v1075 = vsel %vm623, %v468, -inf
        %v1076 = vmax.f32 %v1074, %v1075
        %v1077 = vrot.slane %v1076, 4
        %v1078 = vmax.f32 %v1076, %v1077
        %v1079 = vrot.slane %v1078, 2
        %v1080 = vmax.f32 %v1078, %v1079
        %v1081 = vrot.slane %v1080, 1
        %v1082 = vmax.f32 %v1080, %v1081
        %v1083 = vsel %vm623, %v469, -inf
        %v1084 = vsel %vm623, %v470, -inf
        %v1085 = vmax.f32 %v1083, %v1084
        %v1086 = vrot.slane %v1085, 4
        %v1087 = vmax.f32 %v1085, %v1086
        %v1088 = vrot.slane %v1087, 2
        %v1089 = vmax.f32 %v1087, %v1088
        %v1090 = vrot.slane %v1089, 1
        %v1091 = vmax.f32 %v1089, %v1090
        %v1092 = vsel %vm623, %v471, -inf
        %v1093 = vsel %vm623, %v472, -inf
        %v1094 = vmax.f32 %v1092, %v1093
        %v1095 = vrot.slane %v1094, 4
        %v1096 = vmax.f32 %v1094, %v1095
        %v1097 = vrot.slane %v1096, 2
        %v1098 = vmax.f32 %v1096, %v1097
        %v1099 = vrot.slane %v1098, 1
        %v1100 = vmax.f32 %v1098, %v1099
        %v1101 = vsel %vm623, %v473, -inf
        %v1102 = vsel %vm623, %v474, -inf
        %v1103 = vmax.f32 %v1101, %v1102
        %v1104 = vrot.slane %v1103, 4
        %v1105 = vmax.f32 %v1103, %v1104
        %v1106 = vrot.slane %v1105, 2
        %v1107 = vmax.f32 %v1105, %v1106
        %v1108 = vrot.slane %v1107, 1
        %v1109 = vmax.f32 %v1107, %v1108
        %v1110 = vsel %vm623, %v475, -inf
        %v1111 = vsel %vm623, %v476, -inf
        %v1112 = vmax.f32 %v1110, %v1111
        %v1113 = vrot.slane %v1112, 4
        %v1114 = vmax.f32 %v1112, %v1113
        %v1115 = vrot.slane %v1114, 2
        %v1116 = vmax.f32 %v1114, %v1115
        %v1117 = vrot.slane %v1116, 1
        %v1118 = vmax.f32 %v1116, %v1117
        %v1119 = vsel %vm623, %v477, -inf
        %v1120 = vsel %vm623, %v478, -inf
        %v1121 = vmax.f32 %v1119, %v1120
        %v1122 = vrot.slane %v1121, 4
        %v1123 = vmax.f32 %v1121, %v1122
        %v1124 = vrot.slane %v1123, 2
        %v1125 = vmax.f32 %v1123, %v1124
        %v1126 = vrot.slane %v1125, 1
        %v1127 = vmax.f32 %v1125, %v1126
        %v1128 = vsel %vm623, %v479, -inf
        %v1129 = vsel %vm623, %v480, -inf
        %v1130 = vmax.f32 %v1128, %v1129
        %v1131 = vrot.slane %v1130, 4
        %v1132 = vmax.f32 %v1130, %v1131
        %v1133 = vrot.slane %v1132, 2
        %v1134 = vmax.f32 %v1132, %v1133
        %v1135 = vrot.slane %v1134, 1
        %v1136 = vmax.f32 %v1134, %v1135
        %v1137 = vsel %vm623, %v481, -inf
        %v1138 = vsel %vm623, %v482, -inf
        %v1139 = vmax.f32 %v1137, %v1138
        %v1140 = vrot.slane %v1139, 4
        %v1141 = vmax.f32 %v1139, %v1140
        %v1142 = vrot.slane %v1141, 2
        %v1143 = vmax.f32 %v1141, %v1142
        %v1144 = vrot.slane %v1143, 1
        %v1145 = vmax.f32 %v1143, %v1144
        %v1146 = vsel %vm623, %v483, -inf
        %v1147 = vsel %vm623, %v484, -inf
        %v1148 = vmax.f32 %v1146, %v1147
        %v1149 = vrot.slane %v1148, 4
        %v1150 = vmax.f32 %v1148, %v1149
        %v1151 = vrot.slane %v1150, 2
        %v1152 = vmax.f32 %v1150, %v1151
        %v1153 = vrot.slane %v1152, 1
        %v1154 = vmax.f32 %v1152, %v1153
        %v1155 = vsel %vm623, %v485, -inf
        %v1156 = vsel %vm623, %v486, -inf
        %v1157 = vmax.f32 %v1155, %v1156
        %v1158 = vrot.slane %v1157, 4
        %v1159 = vmax.f32 %v1157, %v1158
        %v1160 = vrot.slane %v1159, 2
        %v1161 = vmax.f32 %v1159, %v1160
        %v1162 = vrot.slane %v1161, 1
        %v1163 = vmax.f32 %v1161, %v1162
        %v1164 = vsel %vm623, %v487, -inf
        %v1165 = vsel %vm623, %v488, -inf
        %v1166 = vmax.f32 %v1164, %v1165
        %v1167 = vrot.slane %v1166, 4
        %v1168 = vmax.f32 %v1166, %v1167
        %v1169 = vrot.slane %v1168, 2
        %v1170 = vmax.f32 %v1168, %v1169
        %v1171 = vrot.slane %v1170, 1
        %v1172 = vmax.f32 %v1170, %v1171
        %v1173 = vsel %vm623, %v489, -inf
        %v1174 = vsel %vm623, %v490, -inf
        %v1175 = vmax.f32 %v1173, %v1174
        %v1176 = vrot.slane %v1175, 4
        %v1177 = vmax.f32 %v1175, %v1176
        %v1178 = vrot.slane %v1177, 2
        %v1179 = vmax.f32 %v1177, %v1178
        %v1180 = vrot.slane %v1179, 1
        %v1181 = vmax.f32 %v1179, %v1180
        %v1182 = vsel %vm623, %v491, -inf
        %v1183 = vsel %vm623, %v492, -inf
        %v1184 = vmax.f32 %v1182, %v1183
        %v1185 = vrot.slane %v1184, 4
        %v1186 = vmax.f32 %v1184, %v1185
        %v1187 = vrot.slane %v1186, 2
        %v1188 = vmax.f32 %v1186, %v1187
        %v1189 = vrot.slane %v1188, 1
        %v1190 = vmax.f32 %v1188, %v1189
        %v1191 = vsel %vm623, %v493, -inf
        %v1192 = vsel %vm623, %v494, -inf
        %v1193 = vmax.f32 %v1191, %v1192
        %v1194 = vrot.slane %v1193, 4
        %v1195 = vmax.f32 %v1193, %v1194
        %v1196 = vrot.slane %v1195, 2
        %v1197 = vmax.f32 %v1195, %v1196
        %v1198 = vrot.slane %v1197, 1
        %v1199 = vmax.f32 %v1197, %v1198
        %v1200 = vsel %vm623, %v495, -inf
        %v1201 = vsel %vm623, %v496, -inf
        %v1202 = vmax.f32 %v1200, %v1201
        %v1203 = vrot.slane %v1202, 4
        %v1204 = vmax.f32 %v1202, %v1203
        %v1205 = vrot.slane %v1204, 2
        %v1206 = vmax.f32 %v1204, %v1205
        %v1207 = vrot.slane %v1206, 1
        %v1208 = vmax.f32 %v1206, %v1207
        %v1209 = vsel %vm623, %v497, -inf
        %v1210 = vsel %vm623, %v498, -inf
        %v1211 = vmax.f32 %v1209, %v1210
        %v1212 = vrot.slane %v1211, 4
        %v1213 = vmax.f32 %v1211, %v1212
        %v1214 = vrot.slane %v1213, 2
        %v1215 = vmax.f32 %v1213, %v1214
        %v1216 = vrot.slane %v1215, 1
        %v1217 = vmax.f32 %v1215, %v1216
        %v1218 = vsel %vm623, %v499, -inf
        %v1219 = vsel %vm623, %v500, -inf
        %v1220 = vmax.f32 %v1218, %v1219
        %v1221 = vrot.slane %v1220, 4
        %v1222 = vmax.f32 %v1220, %v1221
        %v1223 = vrot.slane %v1222, 2
        %v1224 = vmax.f32 %v1222, %v1223
        %v1225 = vrot.slane %v1224, 1
        %v1226 = vmax.f32 %v1224, %v1225
        %v1227 = vsel %vm623, %v501, -inf
        %v1228 = vsel %vm623, %v502, -inf
        %v1229 = vmax.f32 %v1227, %v1228
        %v1230 = vrot.slane %v1229, 4
        %v1231 = vmax.f32 %v1229, %v1230
        %v1232 = vrot.slane %v1231, 2
        %v1233 = vmax.f32 %v1231, %v1232
        %v1234 = vrot.slane %v1233, 1
        %v1235 = vmax.f32 %v1233, %v1234
        %v1236 = vsel %vm623, %v503, -inf
        %v1237 = vsel %vm623, %v504, -inf
        %v1238 = vmax.f32 %v1236, %v1237
        %v1239 = vrot.slane %v1238, 4
        %v1240 = vmax.f32 %v1238, %v1239
        %v1241 = vrot.slane %v1240, 2
        %v1242 = vmax.f32 %v1240, %v1241
        %v1243 = vrot.slane %v1242, 1
        %v1244 = vmax.f32 %v1242, %v1243
        %v1245 = vsel %vm623, %v505, -inf
        %v1246 = vsel %vm623, %v506, -inf
        %v1247 = vmax.f32 %v1245, %v1246
        %v1248 = vrot.slane %v1247, 4
        %v1249 = vmax.f32 %v1247, %v1248
        %v1250 = vrot.slane %v1249, 2
        %v1251 = vmax.f32 %v1249, %v1250
        %v1252 = vrot.slane %v1251, 1
        %v1253 = vmax.f32 %v1251, %v1252
        %v1254 = vsel %vm623, %v507, -inf
        %v1255 = vsel %vm623, %v508, -inf
        %v1256 = vmax.f32 %v1254, %v1255
        %v1257 = vrot.slane %v1256, 4
        %v1258 = vmax.f32 %v1256, %v1257
        %v1259 = vrot.slane %v1258, 2
        %v1260 = vmax.f32 %v1258, %v1259
        %v1261 = vrot.slane %v1260, 1
        %v1262 = vmax.f32 %v1260, %v1261
        %v1263 = vsel %vm623, %v509, -inf
        %v1264 = vsel %vm623, %v510, -inf
        %v1265 = vmax.f32 %v1263, %v1264
        %v1266 = vrot.slane %v1265, 4
        %v1267 = vmax.f32 %v1265, %v1266
        %v1268 = vrot.slane %v1267, 2
        %v1269 = vmax.f32 %v1267, %v1268
        %v1270 = vrot.slane %v1269, 1
        %v1271 = vmax.f32 %v1269, %v1270
        %v1272 = vsel %vm623, %v511, -inf
        %v1273 = vsel %vm623, %v512, -inf
        %v1274 = vmax.f32 %v1272, %v1273
        %v1275 = vrot.slane %v1274, 4
        %v1276 = vmax.f32 %v1274, %v1275
        %v1277 = vrot.slane %v1276, 2
        %v1278 = vmax.f32 %v1276, %v1277
        %v1279 = vrot.slane %v1278, 1
        %v1280 = vmax.f32 %v1278, %v1279
        %v1281 = vsel %vm623, %v513, -inf
        %v1282 = vsel %vm623, %v514, -inf
        %v1283 = vmax.f32 %v1281, %v1282
        %v1284 = vrot.slane %v1283, 4
        %v1285 = vmax.f32 %v1283, %v1284
        %v1286 = vrot.slane %v1285, 2
        %v1287 = vmax.f32 %v1285, %v1286
        %v1288 = vrot.slane %v1287, 1
        %v1289 = vmax.f32 %v1287, %v1288
        %v1290 = vsel %vm623, %v515, -inf
        %v1291 = vsel %vm623, %v516, -inf
        %v1292 = vmax.f32 %v1290, %v1291
        %v1293 = vrot.slane %v1292, 4
        %v1294 = vmax.f32 %v1292, %v1293
        %v1295 = vrot.slane %v1294, 2
        %v1296 = vmax.f32 %v1294, %v1295
        %v1297 = vrot.slane %v1296, 1
        %v1298 = vmax.f32 %v1296, %v1297
        %v1299 = vsel %vm623, %v517, -inf
        %v1300 = vsel %vm623, %v518, -inf
        %v1301 = vmax.f32 %v1299, %v1300
        %v1302 = vrot.slane %v1301, 4
        %v1303 = vmax.f32 %v1301, %v1302
        %v1304 = vrot.slane %v1303, 2
        %v1305 = vmax.f32 %v1303, %v1304
        %v1306 = vrot.slane %v1305, 1
        %v1307 = vmax.f32 %v1305, %v1306
        %v1308 = vsel %vm623, %v519, -inf
        %v1309 = vsel %vm623, %v520, -inf
        %v1310 = vmax.f32 %v1308, %v1309
        %v1311 = vrot.slane %v1310, 4
        %v1312 = vmax.f32 %v1310, %v1311
        %v1313 = vrot.slane %v1312, 2
        %v1314 = vmax.f32 %v1312, %v1313
        %v1315 = vrot.slane %v1314, 1
        %v1316 = vmax.f32 %v1314, %v1315
        %v1317 = vsel %vm623, %v521, -inf
        %v1318 = vsel %vm623, %v522, -inf
        %v1319 = vmax.f32 %v1317, %v1318
        %v1320 = vrot.slane %v1319, 4
        %v1321 = vmax.f32 %v1319, %v1320
        %v1322 = vrot.slane %v1321, 2
        %v1323 = vmax.f32 %v1321, %v1322
        %v1324 = vrot.slane %v1323, 1
        %v1325 = vmax.f32 %v1323, %v1324
        %v1326 = vsel %vm623, %v523, -inf
        %v1327 = vsel %vm623, %v524, -inf
        %v1328 = vmax.f32 %v1326, %v1327
        %v1329 = vrot.slane %v1328, 4
        %v1330 = vmax.f32 %v1328, %v1329
        %v1331 = vrot.slane %v1330, 2
        %v1332 = vmax.f32 %v1330, %v1331
        %v1333 = vrot.slane %v1332, 1
        %v1334 = vmax.f32 %v1332, %v1333
        %v1335 = vsel %vm623, %v525, -inf
        %v1336 = vsel %vm623, %v526, -inf
        %v1337 = vmax.f32 %v1335, %v1336
        %v1338 = vrot.slane %v1337, 4
        %v1339 = vmax.f32 %v1337, %v1338
        %v1340 = vrot.slane %v1339, 2
        %v1341 = vmax.f32 %v1339, %v1340
        %v1342 = vrot.slane %v1341, 1
        %v1343 = vmax.f32 %v1341, %v1342
        %v1344 = vsel %vm623, %v527, -inf
        %v1345 = vsel %vm623, %v528, -inf
        %v1346 = vmax.f32 %v1344, %v1345
        %v1347 = vrot.slane %v1346, 4
        %v1348 = vmax.f32 %v1346, %v1347
        %v1349 = vrot.slane %v1348, 2
        %v1350 = vmax.f32 %v1348, %v1349
        %v1351 = vrot.slane %v1350, 1
        %v1352 = vmax.f32 %v1350, %v1351
        %v1353 = vsel %vm623, %v529, -inf
        %v1354 = vsel %vm623, %v530, -inf
        %v1355 = vmax.f32 %v1353, %v1354
        %v1356 = vrot.slane %v1355, 4
        %v1357 = vmax.f32 %v1355, %v1356
        %v1358 = vrot.slane %v1357, 2
        %v1359 = vmax.f32 %v1357, %v1358
        %v1360 = vrot.slane %v1359, 1
        %v1361 = vmax.f32 %v1359, %v1360
        %v1362 = vsel %vm623, %v531, -inf
        %v1363 = vsel %vm623, %v532, -inf
        %v1364 = vmax.f32 %v1362, %v1363
        %v1365 = vrot.slane %v1364, 4
        %v1366 = vmax.f32 %v1364, %v1365
        %v1367 = vrot.slane %v1366, 2
        %v1368 = vmax.f32 %v1366, %v1367
        %v1369 = vrot.slane %v1368, 1
        %v1370 = vmax.f32 %v1368, %v1369
        %v1371 = vsel %vm623, %v533, -inf
        %v1372 = vsel %vm623, %v534, -inf
        %v1373 = vmax.f32 %v1371, %v1372
        %v1374 = vrot.slane %v1373, 4
        %v1375 = vmax.f32 %v1373, %v1374
        %v1376 = vrot.slane %v1375, 2
        %v1377 = vmax.f32 %v1375, %v1376
        %v1378 = vrot.slane %v1377, 1
        %v1379 = vmax.f32 %v1377, %v1378
        %v1380 = vsel %vm623, %v535, -inf
        %v1381 = vsel %vm623, %v536, -inf
        %v1382 = vmax.f32 %v1380, %v1381
        %v1383 = vrot.slane %v1382, 4
        %v1384 = vmax.f32 %v1382, %v1383
        %v1385 = vrot.slane %v1384, 2
        %v1386 = vmax.f32 %v1384, %v1385
        %v1387 = vrot.slane %v1386, 1
        %v1388 = vmax.f32 %v1386, %v1387
        %v1389 = vsel %vm623, %v537, -inf
        %v1390 = vsel %vm623, %v538, -inf
        %v1391 = vmax.f32 %v1389, %v1390
        %v1392 = vrot.slane %v1391, 4
        %v1393 = vmax.f32 %v1391, %v1392
        %v1394 = vrot.slane %v1393, 2
        %v1395 = vmax.f32 %v1393, %v1394
        %v1396 = vrot.slane %v1395, 1
        %v1397 = vmax.f32 %v1395, %v1396
        %v1398 = vsel %vm623, %v539, -inf
        %v1399 = vsel %vm623, %v540, -inf
        %v1400 = vmax.f32 %v1398, %v1399
        %v1401 = vrot.slane %v1400, 4
        %v1402 = vmax.f32 %v1400, %v1401
        %v1403 = vrot.slane %v1402, 2
        %v1404 = vmax.f32 %v1402, %v1403
        %v1405 = vrot.slane %v1404, 1
        %v1406 = vmax.f32 %v1404, %v1405
        %v1407 = vsel %vm623, %v541, -inf
        %v1408 = vsel %vm623, %v542, -inf
        %v1409 = vmax.f32 %v1407, %v1408
        %v1410 = vrot.slane %v1409, 4
        %v1411 = vmax.f32 %v1409, %v1410
        %v1412 = vrot.slane %v1411, 2
        %v1413 = vmax.f32 %v1411, %v1412
        %v1414 = vrot.slane %v1413, 1
        %v1415 = vmax.f32 %v1413, %v1414
        %v1416 = vsel %vm623, %v543, -inf
        %v1417 = vsel %vm623, %v544, -inf
        %v1418 = vmax.f32 %v1416, %v1417
        %v1419 = vrot.slane %v1418, 4
        %v1420 = vmax.f32 %v1418, %v1419
        %v1421 = vrot.slane %v1420, 2
        %v1422 = vmax.f32 %v1420, %v1421
        %v1423 = vrot.slane %v1422, 1
        %v1424 = vmax.f32 %v1422, %v1423
        %v1425 = vsel %vm623, %v545, -inf
        %v1426 = vsel %vm623, %v546, -inf
        %v1427 = vmax.f32 %v1425, %v1426
        %v1428 = vrot.slane %v1427, 4
        %v1429 = vmax.f32 %v1427, %v1428
        %v1430 = vrot.slane %v1429, 2
        %v1431 = vmax.f32 %v1429, %v1430
        %v1432 = vrot.slane %v1431, 1
        %v1433 = vmax.f32 %v1431, %v1432
        %v1434 = vsel %vm623, %v547, -inf
        %v1435 = vsel %vm623, %v548, -inf
        %v1436 = vmax.f32 %v1434, %v1435
        %v1437 = vrot.slane %v1436, 4
        %v1438 = vmax.f32 %v1436, %v1437
        %v1439 = vrot.slane %v1438, 2
        %v1440 = vmax.f32 %v1438, %v1439
        %v1441 = vrot.slane %v1440, 1
        %v1442 = vmax.f32 %v1440, %v1441
        %v1443 = vsel %vm623, %v549, -inf
        %v1444 = vsel %vm623, %v550, -inf
        %v1445 = vmax.f32 %v1443, %v1444
        %v1446 = vrot.slane %v1445, 4
        %v1447 = vmax.f32 %v1445, %v1446
        %v1448 = vrot.slane %v1447, 2
        %v1449 = vmax.f32 %v1447, %v1448
        %v1450 = vrot.slane %v1449, 1
        %v1451 = vmax.f32 %v1449, %v1450
        %v1452 = vsel %vm623, %v551, -inf
        %v1453 = vsel %vm623, %v552, -inf
        %v1454 = vmax.f32 %v1452, %v1453
        %v1455 = vrot.slane %v1454, 4
        %v1456 = vmax.f32 %v1454, %v1455
        %v1457 = vrot.slane %v1456, 2
        %v1458 = vmax.f32 %v1456, %v1457
        %v1459 = vrot.slane %v1458, 1
        %v1460 = vmax.f32 %v1458, %v1459
        %v1461 = vsel %vm623, %v553, -inf
        %v1462 = vsel %vm623, %v554, -inf
        %v1463 = vmax.f32 %v1461, %v1462
        %v1464 = vrot.slane %v1463, 4
        %v1465 = vmax.f32 %v1463, %v1464
        %v1466 = vrot.slane %v1465, 2
        %v1467 = vmax.f32 %v1465, %v1466
        %v1468 = vrot.slane %v1467, 1
        %v1469 = vmax.f32 %v1467, %v1468
        %v1470 = vsel %vm623, %v555, -inf
        %v1471 = vsel %vm623, %v556, -inf
        %v1472 = vmax.f32 %v1470, %v1471
        %v1473 = vrot.slane %v1472, 4
        %v1474 = vmax.f32 %v1472, %v1473
        %v1475 = vrot.slane %v1474, 2
        %v1476 = vmax.f32 %v1474, %v1475
        %v1477 = vrot.slane %v1476, 1
        %v1478 = vmax.f32 %v1476, %v1477
        %v1479 = vsel %vm623, %v557, -inf
        %v1480 = vsel %vm623, %v558, -inf
        %v1481 = vmax.f32 %v1479, %v1480
        %v1482 = vrot.slane %v1481, 4
        %v1483 = vmax.f32 %v1481, %v1482
        %v1484 = vrot.slane %v1483, 2
        %v1485 = vmax.f32 %v1483, %v1484
        %v1486 = vrot.slane %v1485, 1
        %v1487 = vmax.f32 %v1485, %v1486
        %v1488 = vsel %vm623, %v559, -inf
        %v1489 = vsel %vm623, %v560, -inf
        %v1490 = vmax.f32 %v1488, %v1489
        %v1491 = vrot.slane %v1490, 4
        %v1492 = vmax.f32 %v1490, %v1491
        %v1493 = vrot.slane %v1492, 2
        %v1494 = vmax.f32 %v1492, %v1493
        %v1495 = vrot.slane %v1494, 1
        %v1496 = vmax.f32 %v1494, %v1495
        %v1497 = vsel %vm623, %v561, -inf
        %v1498 = vsel %vm623, %v562, -inf
        %v1499 = vmax.f32 %v1497, %v1498
        %v1500 = vrot.slane %v1499, 4
        %v1501 = vmax.f32 %v1499, %v1500
        %v1502 = vrot.slane %v1501, 2
        %v1503 = vmax.f32 %v1501, %v1502
        %v1504 = vrot.slane %v1503, 1
        %v1505 = vmax.f32 %v1503, %v1504
        %v1506 = vsel %vm623, %v563, -inf
        %v1507 = vsel %vm623, %v564, -inf
        %v1508 = vmax.f32 %v1506, %v1507
        %v1509 = vrot.slane %v1508, 4
        %v1510 = vmax.f32 %v1508, %v1509
        %v1511 = vrot.slane %v1510, 2
        %v1512 = vmax.f32 %v1510, %v1511
        %v1513 = vrot.slane %v1512, 1
        %v1514 = vmax.f32 %v1512, %v1513
        %v1515 = vsel %vm623, %v565, -inf
        %v1516 = vsel %vm623, %v566, -inf
        %v1517 = vmax.f32 %v1515, %v1516
        %v1518 = vrot.slane %v1517, 4
        %v1519 = vmax.f32 %v1517, %v1518
        %v1520 = vrot.slane %v1519, 2
        %v1521 = vmax.f32 %v1519, %v1520
        %v1522 = vrot.slane %v1521, 1
        %v1523 = vmax.f32 %v1521, %v1522
        %v1524 = vsel %vm623, %v567, -inf
        %v1525 = vsel %vm623, %v568, -inf
        %v1526 = vmax.f32 %v1524, %v1525
        %v1527 = vrot.slane %v1526, 4
        %v1528 = vmax.f32 %v1526, %v1527
        %v1529 = vrot.slane %v1528, 2
        %v1530 = vmax.f32 %v1528, %v1529
        %v1531 = vrot.slane %v1530, 1
        %v1532 = vmax.f32 %v1530, %v1531
        %v1533 = vsel %vm623, %v569, -inf
        %v1534 = vsel %vm623, %v570, -inf
        %v1535 = vmax.f32 %v1533, %v1534
        %v1536 = vrot.slane %v1535, 4
        %v1537 = vmax.f32 %v1535, %v1536
        %v1538 = vrot.slane %v1537, 2
        %v1539 = vmax.f32 %v1537, %v1538
        %v1540 = vrot.slane %v1539, 1
        %v1541 = vmax.f32 %v1539, %v1540
        %v1542 = vsel %vm623, %v571, -inf
        %v1543 = vsel %vm623, %v572, -inf
        %v1544 = vmax.f32 %v1542, %v1543
        %v1545 = vrot.slane %v1544, 4
        %v1546 = vmax.f32 %v1544, %v1545
        %v1547 = vrot.slane %v1546, 2
        %v1548 = vmax.f32 %v1546, %v1547
        %v1549 = vrot.slane %v1548, 1
        %v1550 = vmax.f32 %v1548, %v1549
        %v1551 = vsel %vm623, %v573, -inf
        %v1552 = vsel %vm623, %v574, -inf
        %v1553 = vmax.f32 %v1551, %v1552
        %v1554 = vrot.slane %v1553, 4
        %v1555 = vmax.f32 %v1553, %v1554
        %v1556 = vrot.slane %v1555, 2
        %v1557 = vmax.f32 %v1555, %v1556
        %v1558 = vrot.slane %v1557, 1
        %v1559 = vmax.f32 %v1557, %v1558
        %v1560 = vsel %vm623, %v575, -inf
        %v1561 = vsel %vm623, %v576, -inf
        %v1562 = vmax.f32 %v1560, %v1561
        %v1563 = vrot.slane %v1562, 4
        %v1564 = vmax.f32 %v1562, %v1563
        %v1565 = vrot.slane %v1564, 2
        %v1566 = vmax.f32 %v1564, %v1565
        %v1567 = vrot.slane %v1566, 1
        %v1568 = vmax.f32 %v1566, %v1567
        %v1569 = vsel %vm623, %v577, -inf
        %v1570 = vsel %vm623, %v578, -inf
        %v1571 = vmax.f32 %v1569, %v1570
        %v1572 = vrot.slane %v1571, 4
        %v1573 = vmax.f32 %v1571, %v1572
        %v1574 = vrot.slane %v1573, 2
        %v1575 = vmax.f32 %v1573, %v1574
        %v1576 = vrot.slane %v1575, 1
        %v1577 = vmax.f32 %v1575, %v1576
        %v1578 = vsel %vm623, %v579, -inf
        %v1579 = vsel %vm623, %v580, -inf
        %v1580 = vmax.f32 %v1578, %v1579
        %v1581 = vrot.slane %v1580, 4
        %v1582 = vmax.f32 %v1580, %v1581
        %v1583 = vrot.slane %v1582, 2
        %v1584 = vmax.f32 %v1582, %v1583
        %v1585 = vrot.slane %v1584, 1
        %v1586 = vmax.f32 %v1584, %v1585
        %v1587 = vsel %vm623, %v581, -inf
        %v1588 = vsel %vm623, %v582, -inf
        %v1589 = vmax.f32 %v1587, %v1588
        %v1590 = vrot.slane %v1589, 4
        %v1591 = vmax.f32 %v1589, %v1590
        %v1592 = vrot.slane %v1591, 2
        %v1593 = vmax.f32 %v1591, %v1592
        %v1594 = vrot.slane %v1593, 1
        %v1595 = vmax.f32 %v1593, %v1594
        %v1596 = vsel %vm623, %v583, -inf
        %v1597 = vsel %vm623, %v584, -inf
        %v1598 = vmax.f32 %v1596, %v1597
        %v1599 = vrot.slane %v1598, 4
        %v1600 = vmax.f32 %v1598, %v1599
        %v1601 = vrot.slane %v1600, 2
        %v1602 = vmax.f32 %v1600, %v1601
        %v1603 = vrot.slane %v1602, 1
        %v1604 = vmax.f32 %v1602, %v1603
        %v1605 = vsel %vm623, %v585, -inf
        %v1606 = vsel %vm623, %v586, -inf
        %v1607 = vmax.f32 %v1605, %v1606
        %v1608 = vrot.slane %v1607, 4
        %v1609 = vmax.f32 %v1607, %v1608
        %v1610 = vrot.slane %v1609, 2
        %v1611 = vmax.f32 %v1609, %v1610
        %v1612 = vrot.slane %v1611, 1
        %v1613 = vmax.f32 %v1611, %v1612
        %v1614 = vsel %vm623, %v587, -inf
        %v1615 = vsel %vm623, %v588, -inf
        %v1616 = vmax.f32 %v1614, %v1615
        %v1617 = vrot.slane %v1616, 4
        %v1618 = vmax.f32 %v1616, %v1617
        %v1619 = vrot.slane %v1618, 2
        %v1620 = vmax.f32 %v1618, %v1619
        %v1621 = vrot.slane %v1620, 1
        %v1622 = vmax.f32 %v1620, %v1621
        %v1623 = vsel %vm623, %v589, -inf
        %v1624 = vsel %vm623, %v590, -inf
        %v1625 = vmax.f32 %v1623, %v1624
        %v1626 = vrot.slane %v1625, 4
        %v1627 = vmax.f32 %v1625, %v1626
        %v1628 = vrot.slane %v1627, 2
        %v1629 = vmax.f32 %v1627, %v1628
        %v1630 = vrot.slane %v1629, 1
        %v1631 = vmax.f32 %v1629, %v1630
        %v1632 = vsel %vm623, %v591, -inf
        %v1633 = vsel %vm623, %v592, -inf
        %v1634 = vmax.f32 %v1632, %v1633
        %v1635 = vrot.slane %v1634, 4
        %v1636 = vmax.f32 %v1634, %v1635
        %v1637 = vrot.slane %v1636, 2
        %v1638 = vmax.f32 %v1636, %v1637
        %v1639 = vrot.slane %v1638, 1
        %v1640 = vmax.f32 %v1638, %v1639
        %v1641 = vsel %vm623, %v593, -inf
        %v1642 = vsel %vm623, %v594, -inf
        %v1643 = vmax.f32 %v1641, %v1642
        %v1644 = vrot.slane %v1643, 4
        %v1645 = vmax.f32 %v1643, %v1644
        %v1646 = vrot.slane %v1645, 2
        %v1647 = vmax.f32 %v1645, %v1646
        %v1648 = vrot.slane %v1647, 1
        %v1649 = vmax.f32 %v1647, %v1648
        %v1650 = vsel %vm623, %v595, -inf
        %v1651 = vsel %vm623, %v596, -inf
        %v1652 = vmax.f32 %v1650, %v1651
        %v1653 = vrot.slane %v1652, 4
        %v1654 = vmax.f32 %v1652, %v1653
        %v1655 = vrot.slane %v1654, 2
        %v1656 = vmax.f32 %v1654, %v1655
        %v1657 = vrot.slane %v1656, 1
        %v1658 = vmax.f32 %v1656, %v1657
        %v1659 = vsel %vm623, %v597, -inf
        %v1660 = vsel %vm623, %v598, -inf
        %v1661 = vmax.f32 %v1659, %v1660
        %v1662 = vrot.slane %v1661, 4
        %v1663 = vmax.f32 %v1661, %v1662
        %v1664 = vrot.slane %v1663, 2
        %v1665 = vmax.f32 %v1663, %v1664
        %v1666 = vrot.slane %v1665, 1
        %v1667 = vmax.f32 %v1665, %v1666
        %v1668 = vsel %vm623, %v599, -inf
        %v1669 = vsel %vm623, %v600, -inf
        %v1670 = vmax.f32 %v1668, %v1669
        %v1671 = vrot.slane %v1670, 4
        %v1672 = vmax.f32 %v1670, %v1671
        %v1673 = vrot.slane %v1672, 2
        %v1674 = vmax.f32 %v1672, %v1673
        %v1675 = vrot.slane %v1674, 1
        %v1676 = vmax.f32 %v1674, %v1675
        %v1677 = vsel %vm623, %v601, -inf
        %v1678 = vsel %vm623, %v602, -inf
        %v1679 = vmax.f32 %v1677, %v1678
        %v1680 = vrot.slane %v1679, 4
        %v1681 = vmax.f32 %v1679, %v1680
        %v1682 = vrot.slane %v1681, 2
        %v1683 = vmax.f32 %v1681, %v1682
        %v1684 = vrot.slane %v1683, 1
        %v1685 = vmax.f32 %v1683, %v1684
        %v1686 = vsel %vm623, %v603, -inf
        %v1687 = vsel %vm623, %v604, -inf
        %v1688 = vmax.f32 %v1686, %v1687
        %v1689 = vrot.slane %v1688, 4
        %v1690 = vmax.f32 %v1688, %v1689
        %v1691 = vrot.slane %v1690, 2
        %v1692 = vmax.f32 %v1690, %v1691
        %v1693 = vrot.slane %v1692, 1
        %v1694 = vmax.f32 %v1692, %v1693
        %v1695 = vsel %vm623, %v605, -inf
        %v1696 = vsel %vm623, %v606, -inf
        %v1697 = vmax.f32 %v1695, %v1696
        %v1698 = vrot.slane %v1697, 4
        %v1699 = vmax.f32 %v1697, %v1698
        %v1700 = vrot.slane %v1699, 2
        %v1701 = vmax.f32 %v1699, %v1700
        %v1702 = vrot.slane %v1701, 1
        %v1703 = vmax.f32 %v1701, %v1702
        %v1704 = vsel %vm623, %v607, -inf
        %v1705 = vsel %vm623, %v608, -inf
        %v1706 = vmax.f32 %v1704, %v1705
        %v1707 = vrot.slane %v1706, 4
        %v1708 = vmax.f32 %v1706, %v1707
        %v1709 = vrot.slane %v1708, 2
        %v1710 = vmax.f32 %v1708, %v1709
        %v1711 = vrot.slane %v1710, 1
        %v1712 = vmax.f32 %v1710, %v1711
        %v1713 = vsel %vm623, %v609, -inf
        %v1714 = vsel %vm623, %v610, -inf
        %v1715 = vmax.f32 %v1713, %v1714
        %v1716 = vrot.slane %v1715, 4
        %v1717 = vmax.f32 %v1715, %v1716
        %v1718 = vrot.slane %v1717, 2
        %v1719 = vmax.f32 %v1717, %v1718
        %v1720 = vrot.slane %v1719, 1
        %v1721 = vmax.f32 %v1719, %v1720
        %v1722 = vsel %vm623, %v611, -inf
        %v1723 = vsel %vm623, %v612, -inf
        %v1724 = vmax.f32 %v1722, %v1723
        %v1725 = vrot.slane %v1724, 4
        %v1726 = vmax.f32 %v1724, %v1725
        %v1727 = vrot.slane %v1726, 2
        %v1728 = vmax.f32 %v1726, %v1727
        %v1729 = vrot.slane %v1728, 1
        %v1730 = vmax.f32 %v1728, %v1729
        %v1731 = vsel %vm623, %v613, -inf
        %v1732 = vsel %vm623, %v614, -inf
        %v1733 = vmax.f32 %v1731, %v1732
        %v1734 = vrot.slane %v1733, 4
        %v1735 = vmax.f32 %v1733, %v1734
        %v1736 = vrot.slane %v1735, 2
        %v1737 = vmax.f32 %v1735, %v1736
        %v1738 = vrot.slane %v1737, 1
        %v1739 = vmax.f32 %v1737, %v1738
        %v1740 = vsel %vm623, %v615, -inf
        %v1741 = vsel %vm623, %v616, -inf
        %v1742 = vmax.f32 %v1740, %v1741
        %v1743 = vrot.slane %v1742, 4
        %v1744 = vmax.f32 %v1742, %v1743
        %v1745 = vrot.slane %v1744, 2
        %v1746 = vmax.f32 %v1744, %v1745
        %v1747 = vrot.slane %v1746, 1
        %v1748 = vmax.f32 %v1746, %v1747
        %v1749 = vsel %vm623, %v617, -inf
        %v1750 = vsel %vm623, %v618, -inf
        %v1751 = vmax.f32 %v1749, %v1750
        %v1752 = vrot.slane %v1751, 4
        %v1753 = vmax.f32 %v1751, %v1752
        %v1754 = vrot.slane %v1753, 2
        %v1755 = vmax.f32 %v1753, %v1754
        %v1756 = vrot.slane %v1755, 1
        %v1757 = vmax.f32 %v1755, %v1756
        %v1758 = vsel %vm623, %v619, -inf
        %v1759 = vsel %vm623, %v620, -inf
        %v1760 = vmax.f32 %v1758, %v1759
        %v1761 = vrot.slane %v1760, 4
        %v1762 = vmax.f32 %v1760, %v1761
        %v1763 = vrot.slane %v1762, 2
        %v1764 = vmax.f32 %v1762, %v1763
        %v1765 = vrot.slane %v1764, 1
        %v1766 = vmax.f32 %v1764, %v1765
        %v1767 = vsel %vm623, %v621, -inf
        %v1768 = vsel %vm623, %v622, -inf
        %v1769 = vmax.f32 %v1767, %v1768
        %v1770 = vrot.slane %v1769, 4
        %v1771 = vmax.f32 %v1769, %v1770
        %v1772 = vrot.slane %v1771, 2
        %v1773 = vmax.f32 %v1771, %v1772
        %v1774 = vrot.slane %v1773, 1
        %v1775 = vmax.f32 %v1773, %v1774
        %vm1904 = vcmask 1041409
        %v1905 = vsel %vm1904, %v641, %v632
        %vm1906 = vcmask 1042434
        %v1907 = vsel %vm1906, %v650, %v1905
        %vm1908 = vcmask 1043459
        %v1909 = vsel %vm1908, %v659, %v1907
        %vm1910 = vcmask 1044484
        %v1911 = vsel %vm1910, %v668, %v1909
        %vm1912 = vcmask 1045509
        %v1913 = vsel %vm1912, %v677, %v1911
        %vm1914 = vcmask 1046534
        %v1915 = vsel %vm1914, %v686, %v1913
        %vm1916 = vcmask 1047559
        %v1917 = vsel %vm1916, %v695, %v1915
        %v1918 = vsel %vm1904, %v713, %v704
        %v1919 = vsel %vm1906, %v722, %v1918
        %v1920 = vsel %vm1908, %v731, %v1919
        %v1921 = vsel %vm1910, %v740, %v1920
        %v1922 = vsel %vm1912, %v749, %v1921
        %v1923 = vsel %vm1914, %v758, %v1922
        %v1924 = vsel %vm1916, %v767, %v1923
        %v1925 = vsel %vm1904, %v785, %v776
        %v1926 = vsel %vm1906, %v794, %v1925
        %v1927 = vsel %vm1908, %v803, %v1926
        %v1928 = vsel %vm1910, %v812, %v1927
        %v1929 = vsel %vm1912, %v821, %v1928
        %v1930 = vsel %vm1914, %v830, %v1929
        %v1931 = vsel %vm1916, %v839, %v1930
        %v1932 = vsel %vm1904, %v857, %v848
        %v1933 = vsel %vm1906, %v866, %v1932
        %v1934 = vsel %vm1908, %v875, %v1933
        %v1935 = vsel %vm1910, %v884, %v1934
        %v1936 = vsel %vm1912, %v893, %v1935
        %v1937 = vsel %vm1914, %v902, %v1936
        %v1938 = vsel %vm1916, %v911, %v1937
        %v1939 = vsel %vm1904, %v929, %v920
        %v1940 = vsel %vm1906, %v938, %v1939
        %v1941 = vsel %vm1908, %v947, %v1940
        %v1942 = vsel %vm1910, %v956, %v1941
        %v1943 = vsel %vm1912, %v965, %v1942
        %v1944 = vsel %vm1914, %v974, %v1943
        %v1945 = vsel %vm1916, %v983, %v1944
        %v1946 = vsel %vm1904, %v1001, %v992
        %v1947 = vsel %vm1906, %v1010, %v1946
        %v1948 = vsel %vm1908, %v1019, %v1947
        %v1949 = vsel %vm1910, %v1028, %v1948
        %v1950 = vsel %vm1912, %v1037, %v1949
        %v1951 = vsel %vm1914, %v1046, %v1950
        %v1952 = vsel %vm1916, %v1055, %v1951
        %v1953 = vsel %vm1904, %v1073, %v1064
        %v1954 = vsel %vm1906, %v1082, %v1953
        %v1955 = vsel %vm1908, %v1091, %v1954
        %v1956 = vsel %vm1910, %v1100, %v1955
        %v1957 = vsel %vm1912, %v1109, %v1956
        %v1958 = vsel %vm1914, %v1118, %v1957
        %v1959 = vsel %vm1916, %v1127, %v1958
        %v1960 = vsel %vm1904, %v1145, %v1136
        %v1961 = vsel %vm1906, %v1154, %v1960
        %v1962 = vsel %vm1908, %v1163, %v1961
        %v1963 = vsel %vm1910, %v1172, %v1962
        %v1964 = vsel %vm1912, %v1181, %v1963
        %v1965 = vsel %vm1914, %v1190, %v1964
        %v1966 = vsel %vm1916, %v1199, %v1965
        %v1967 = vsel %vm1904, %v1217, %v1208
        %v1968 = vsel %vm1906, %v1226, %v1967
        %v1969 = vsel %vm1908, %v1235, %v1968
        %v1970 = vsel %vm1910, %v1244, %v1969
        %v1971 = vsel %vm1912, %v1253, %v1970
        %v1972 = vsel %vm1914, %v1262, %v1971
        %v1973 = vsel %vm1916, %v1271, %v1972
        %v1974 = vsel %vm1904, %v1289, %v1280
        %v1975 = vsel %vm1906, %v1298, %v1974
        %v1976 = vsel %vm1908, %v1307, %v1975
        %v1977 = vsel %vm1910, %v1316, %v1976
        %v1978 = vsel %vm1912, %v1325, %v1977
        %v1979 = vsel %vm1914, %v1334, %v1978
        %v1980 = vsel %vm1916, %v1343, %v1979
        %v1981 = vsel %vm1904, %v1361, %v1352
        %v1982 = vsel %vm1906, %v1370, %v1981
        %v1983 = vsel %vm1908, %v1379, %v1982
        %v1984 = vsel %vm1910, %v1388, %v1983
        %v1985 = vsel %vm1912, %v1397, %v1984
        %v1986 = vsel %vm1914, %v1406, %v1985
        %v1987 = vsel %vm1916, %v1415, %v1986
        %v1988 = vsel %vm1904, %v1433, %v1424
        %v1989 = vsel %vm1906, %v1442, %v1988
        %v1990 = vsel %vm1908, %v1451, %v1989
        %v1991 = vsel %vm1910, %v1460, %v1990
        %v1992 = vsel %vm1912, %v1469, %v1991
        %v1993 = vsel %vm1914, %v1478, %v1992
        %v1994 = vsel %vm1916, %v1487, %v1993
        %v1995 = vsel %vm1904, %v1505, %v1496
        %v1996 = vsel %vm1906, %v1514, %v1995
        %v1997 = vsel %vm1908, %v1523, %v1996
        %v1998 = vsel %vm1910, %v1532, %v1997
        %v1999 = vsel %vm1912, %v1541, %v1998
        %v2000 = vsel %vm1914, %v1550, %v1999
        %v2001 = vsel %vm1916, %v1559, %v2000
        %v2002 = vsel %vm1904, %v1577, %v1568
        %v2003 = vsel %vm1906, %v1586, %v2002
        %v2004 = vsel %vm1908, %v1595, %v2003
        %v2005 = vsel %vm1910, %v1604, %v2004
        %v2006 = vsel %vm1912, %v1613, %v2005
        %v2007 = vsel %vm1914, %v1622, %v2006
        %v2008 = vsel %vm1916, %v1631, %v2007
        %v2009 = vsel %vm1904, %v1649, %v1640
        %v2010 = vsel %vm1906, %v1658, %v2009
        %v2011 = vsel %vm1908, %v1667, %v2010
        %v2012 = vsel %vm1910, %v1676, %v2011
        %v2013 = vsel %vm1912, %v1685, %v2012
        %v2014 = vsel %vm1914, %v1694, %v2013
        %v2015 = vsel %vm1916, %v1703, %v2014
        %v2016 = vsel %vm1904, %v1721, %v1712
        %v2017 = vsel %vm1906, %v1730, %v2016
        %v2018 = vsel %vm1908, %v1739, %v2017
        %v2019 = vsel %vm1910, %v1748, %v2018
        %v2020 = vsel %vm1912, %v1757, %v2019
        %v2021 = vsel %vm1914, %v1766, %v2020
        %v2022 = vsel %vm1916, %v1775, %v2021
        %vm2039 = vcmask 23552
        %v2040 = vsel %vm2039, %v1917, -inf
        %2041 = vmax.xlane.f32.xlu0 %v2040
        %v2042 = vpop.xlane.xlu0 %2041
        %v2043 = vsel %vm2039, %v1924, -inf
        %2044 = vmax.xlane.f32.xlu0 %v2043
        %v2045 = vpop.xlane.xlu0 %2044
        %v2046 = vsel %vm2039, %v1931, -inf
        %2047 = vmax.xlane.f32.xlu0 %v2046
        %v2048 = vpop.xlane.xlu0 %2047
        %v2049 = vsel %vm2039, %v1938, -inf
        %2050 = vmax.xlane.f32.xlu0 %v2049
        %v2051 = vpop.xlane.xlu0 %2050
        %v2052 = vsel %vm2039, %v1945, -inf
        %2053 = vmax.xlane.f32.xlu0 %v2052
        %v2054 = vpop.xlane.xlu0 %2053
        %v2055 = vsel %vm2039, %v1952, -inf
        %2056 = vmax.xlane.f32.xlu0 %v2055
        %v2057 = vpop.xlane.xlu0 %2056
        %v2058 = vsel %vm2039, %v1959, -inf
        %2059 = vmax.xlane.f32.xlu0 %v2058
        %v2060 = vpop.xlane.xlu0 %2059
        %v2061 = vsel %vm2039, %v1966, -inf
        %2062 = vmax.xlane.f32.xlu0 %v2061
        %v2063 = vpop.xlane.xlu0 %2062
        %v2064 = vsel %vm2039, %v1973, -inf
        %2065 = vmax.xlane.f32.xlu0 %v2064
        %v2066 = vpop.xlane.xlu0 %2065
        %v2067 = vsel %vm2039, %v1980, -inf
        %2068 = vmax.xlane.f32.xlu0 %v2067
        %v2069 = vpop.xlane.xlu0 %2068
        %v2070 = vsel %vm2039, %v1987, -inf
        %2071 = vmax.xlane.f32.xlu0 %v2070
        %v2072 = vpop.xlane.xlu0 %2071
        %v2073 = vsel %vm2039, %v1994, -inf
        %2074 = vmax.xlane.f32.xlu0 %v2073
        %v2075 = vpop.xlane.xlu0 %2074
        %v2076 = vsel %vm2039, %v2001, -inf
        %2077 = vmax.xlane.f32.xlu0 %v2076
        %v2078 = vpop.xlane.xlu0 %2077
        %v2079 = vsel %vm2039, %v2008, -inf
        %2080 = vmax.xlane.f32.xlu0 %v2079
        %v2081 = vpop.xlane.xlu0 %2080
        %v2082 = vsel %vm2039, %v2015, -inf
        %2083 = vmax.xlane.f32.xlu0 %v2082
        %v2084 = vpop.xlane.xlu0 %2083
        %v2085 = vsel %vm2039, %v2022, -inf
        %2086 = vmax.xlane.f32.xlu0 %v2085
        %v2087 = vpop.xlane.xlu0 %2086
        %vm2088 = vcmask 39952
        %v2089 = vsel %vm2088, %v1917, -inf
        %2090 = vmax.xlane.f32.xlu0 %v2089
        %v2091 = vpop.xlane.xlu0 %2090
        %v2092 = vsel %vm2088, %v1924, -inf
        %2093 = vmax.xlane.f32.xlu0 %v2092
        %v2094 = vpop.xlane.xlu0 %2093
        %v2095 = vsel %vm2088, %v1931, -inf
        %2096 = vmax.xlane.f32.xlu0 %v2095
        %v2097 = vpop.xlane.xlu0 %2096
        %v2098 = vsel %vm2088, %v1938, -inf
        %2099 = vmax.xlane.f32.xlu0 %v2098
        %v2100 = vpop.xlane.xlu0 %2099
        %v2101 = vsel %vm2088, %v1945, -inf
        %2102 = vmax.xlane.f32.xlu0 %v2101
        %v2103 = vpop.xlane.xlu0 %2102
        %v2104 = vsel %vm2088, %v1952, -inf
        %2105 = vmax.xlane.f32.xlu0 %v2104
        %v2106 = vpop.xlane.xlu0 %2105
        %v2107 = vsel %vm2088, %v1959, -inf
        %2108 = vmax.xlane.f32.xlu0 %v2107
        %v2109 = vpop.xlane.xlu0 %2108
        %v2110 = vsel %vm2088, %v1966, -inf
        %2111 = vmax.xlane.f32.xlu0 %v2110
        %v2112 = vpop.xlane.xlu0 %2111
        %v2113 = vsel %vm2088, %v1973, -inf
        %2114 = vmax.xlane.f32.xlu0 %v2113
        %v2115 = vpop.xlane.xlu0 %2114
        %v2116 = vsel %vm2088, %v1980, -inf
        %2117 = vmax.xlane.f32.xlu0 %v2116
        %v2118 = vpop.xlane.xlu0 %2117
        %v2119 = vsel %vm2088, %v1987, -inf
        %2120 = vmax.xlane.f32.xlu0 %v2119
        %v2121 = vpop.xlane.xlu0 %2120
        %v2122 = vsel %vm2088, %v1994, -inf
        %2123 = vmax.xlane.f32.xlu0 %v2122
        %v2124 = vpop.xlane.xlu0 %2123
        %v2125 = vsel %vm2088, %v2001, -inf
        %2126 = vmax.xlane.f32.xlu0 %v2125
        %v2127 = vpop.xlane.xlu0 %2126
        %v2128 = vsel %vm2088, %v2008, -inf
        %2129 = vmax.xlane.f32.xlu0 %v2128
        %v2130 = vpop.xlane.xlu0 %2129
        %v2131 = vsel %vm2088, %v2015, -inf
        %2132 = vmax.xlane.f32.xlu0 %v2131
        %v2133 = vpop.xlane.xlu0 %2132
        %v2134 = vsel %vm2088, %v2022, -inf
        %2135 = vmax.xlane.f32.xlu0 %v2134
        %v2136 = vpop.xlane.xlu0 %2135
        %vm2137 = vcmask 64552
        %v2138 = vsel %vm2137, %v1917, -inf
        %2139 = vmax.xlane.f32.xlu0 %v2138
        %v2140 = vpop.xlane.xlu0 %2139
        %v2141 = vsel %vm2137, %v1924, -inf
        %2142 = vmax.xlane.f32.xlu0 %v2141
        %v2143 = vpop.xlane.xlu0 %2142
        %v2144 = vsel %vm2137, %v1931, -inf
        %2145 = vmax.xlane.f32.xlu0 %v2144
        %v2146 = vpop.xlane.xlu0 %2145
        %v2147 = vsel %vm2137, %v1938, -inf
        %2148 = vmax.xlane.f32.xlu0 %v2147
        %v2149 = vpop.xlane.xlu0 %2148
        %v2150 = vsel %vm2137, %v1945, -inf
        %2151 = vmax.xlane.f32.xlu0 %v2150
        %v2152 = vpop.xlane.xlu0 %2151
        %v2153 = vsel %vm2137, %v1952, -inf
        %2154 = vmax.xlane.f32.xlu0 %v2153
        %v2155 = vpop.xlane.xlu0 %2154
        %v2156 = vsel %vm2137, %v1959, -inf
        %2157 = vmax.xlane.f32.xlu0 %v2156
        %v2158 = vpop.xlane.xlu0 %2157
        %v2159 = vsel %vm2137, %v1966, -inf
        %2160 = vmax.xlane.f32.xlu0 %v2159
        %v2161 = vpop.xlane.xlu0 %2160
        %v2162 = vsel %vm2137, %v1973, -inf
        %2163 = vmax.xlane.f32.xlu0 %v2162
        %v2164 = vpop.xlane.xlu0 %2163
        %v2165 = vsel %vm2137, %v1980, -inf
        %2166 = vmax.xlane.f32.xlu0 %v2165
        %v2167 = vpop.xlane.xlu0 %2166
        %v2168 = vsel %vm2137, %v1987, -inf
        %2169 = vmax.xlane.f32.xlu0 %v2168
        %v2170 = vpop.xlane.xlu0 %2169
        %v2171 = vsel %vm2137, %v1994, -inf
        %2172 = vmax.xlane.f32.xlu0 %v2171
        %v2173 = vpop.xlane.xlu0 %2172
        %v2174 = vsel %vm2137, %v2001, -inf
        %2175 = vmax.xlane.f32.xlu0 %v2174
        %v2176 = vpop.xlane.xlu0 %2175
        %v2177 = vsel %vm2137, %v2008, -inf
        %2178 = vmax.xlane.f32.xlu0 %v2177
        %v2179 = vpop.xlane.xlu0 %2178
        %v2180 = vsel %vm2137, %v2015, -inf
        %2181 = vmax.xlane.f32.xlu0 %v2180
        %v2182 = vpop.xlane.xlu0 %2181
        %v2183 = vsel %vm2137, %v2022, -inf
        %2184 = vmax.xlane.f32.xlu0 %v2183
        %v2185 = vpop.xlane.xlu0 %2184
        %vm2186 = vcmask 80952
        %v2187 = vsel %vm2186, %v1917, -inf
        %2188 = vmax.xlane.f32.xlu0 %v2187
        %v2189 = vpop.xlane.xlu0 %2188
        %v2190 = vsel %vm2186, %v1924, -inf
        %2191 = vmax.xlane.f32.xlu0 %v2190
        %v2192 = vpop.xlane.xlu0 %2191
        %v2193 = vsel %vm2186, %v1931, -inf
        %2194 = vmax.xlane.f32.xlu0 %v2193
        %v2195 = vpop.xlane.xlu0 %2194
        %v2196 = vsel %vm2186, %v1938, -inf
        %2197 = vmax.xlane.f32.xlu0 %v2196
        %v2198 = vpop.xlane.xlu0 %2197
        %v2199 = vsel %vm2186, %v1945, -inf
        %2200 = vmax.xlane.f32.xlu0 %v2199
        %v2201 = vpop.xlane.xlu0 %2200
        %v2202 = vsel %vm2186, %v1952, -inf
        %2203 = vmax.xlane.f32.xlu0 %v2202
        %v2204 = vpop.xlane.xlu0 %2203
        %v2205 = vsel %vm2186, %v1959, -inf
        %2206 = vmax.xlane.f32.xlu0 %v2205
        %v2207 = vpop.xlane.xlu0 %2206
        %v2208 = vsel %vm2186, %v1966, -inf
        %2209 = vmax.xlane.f32.xlu0 %v2208
        %v2210 = vpop.xlane.xlu0 %2209
        %v2211 = vsel %vm2186, %v1973, -inf
        %2212 = vmax.xlane.f32.xlu0 %v2211
        %v2213 = vpop.xlane.xlu0 %2212
        %v2214 = vsel %vm2186, %v1980, -inf
        %2215 = vmax.xlane.f32.xlu0 %v2214
        %v2216 = vpop.xlane.xlu0 %2215
        %v2217 = vsel %vm2186, %v1987, -inf
        %2218 = vmax.xlane.f32.xlu0 %v2217
        %v2219 = vpop.xlane.xlu0 %2218
        %v2220 = vsel %vm2186, %v1994, -inf
        %2221 = vmax.xlane.f32.xlu0 %v2220
        %v2222 = vpop.xlane.xlu0 %2221
        %v2223 = vsel %vm2186, %v2001, -inf
        %2224 = vmax.xlane.f32.xlu0 %v2223
        %v2225 = vpop.xlane.xlu0 %2224
        %v2226 = vsel %vm2186, %v2008, -inf
        %2227 = vmax.xlane.f32.xlu0 %v2226
        %v2228 = vpop.xlane.xlu0 %2227
        %v2229 = vsel %vm2186, %v2015, -inf
        %2230 = vmax.xlane.f32.xlu0 %v2229
        %v2231 = vpop.xlane.xlu0 %2230
        %v2232 = vsel %vm2186, %v2022, -inf
        %2233 = vmax.xlane.f32.xlu0 %v2232
        %v2234 = vpop.xlane.xlu0 %2233
        %vm2235 = vcmask 105552
        %v2236 = vsel %vm2235, %v1917, -inf
        %2237 = vmax.xlane.f32.xlu0 %v2236
        %v2238 = vpop.xlane.xlu0 %2237
        %v2239 = vsel %vm2235, %v1924, -inf
        %2240 = vmax.xlane.f32.xlu0 %v2239
        %v2241 = vpop.xlane.xlu0 %2240
        %v2242 = vsel %vm2235, %v1931, -inf
        %2243 = vmax.xlane.f32.xlu0 %v2242
        %v2244 = vpop.xlane.xlu0 %2243
        %v2245 = vsel %vm2235, %v1938, -inf
        %2246 = vmax.xlane.f32.xlu0 %v2245
        %v2247 = vpop.xlane.xlu0 %2246
        %v2248 = vsel %vm2235, %v1945, -inf
        %2249 = vmax.xlane.f32.xlu0 %v2248
        %v2250 = vpop.xlane.xlu0 %2249
        %v2251 = vsel %vm2235, %v1952, -inf
        %2252 = vmax.xlane.f32.xlu0 %v2251
        %v2253 = vpop.xlane.xlu0 %2252
        %v2254 = vsel %vm2235, %v1959, -inf
        %2255 = vmax.xlane.f32.xlu0 %v2254
        %v2256 = vpop.xlane.xlu0 %2255
        %v2257 = vsel %vm2235, %v1966, -inf
        %2258 = vmax.xlane.f32.xlu0 %v2257
        %v2259 = vpop.xlane.xlu0 %2258
        %v2260 = vsel %vm2235, %v1973, -inf
        %2261 = vmax.xlane.f32.xlu0 %v2260
        %v2262 = vpop.xlane.xlu0 %2261
        %v2263 = vsel %vm2235, %v1980, -inf
        %2264 = vmax.xlane.f32.xlu0 %v2263
        %v2265 = vpop.xlane.xlu0 %2264
        %v2266 = vsel %vm2235, %v1987, -inf
        %2267 = vmax.xlane.f32.xlu0 %v2266
        %v2268 = vpop.xlane.xlu0 %2267
        %v2269 = vsel %vm2235, %v1994, -inf
        %2270 = vmax.xlane.f32.xlu0 %v2269
        %v2271 = vpop.xlane.xlu0 %2270
        %v2272 = vsel %vm2235, %v2001, -inf
        %2273 = vmax.xlane.f32.xlu0 %v2272
        %v2274 = vpop.xlane.xlu0 %2273
        %v2275 = vsel %vm2235, %v2008, -inf
        %2276 = vmax.xlane.f32.xlu0 %v2275
        %v2277 = vpop.xlane.xlu0 %2276
        %v2278 = vsel %vm2235, %v2015, -inf
        %2279 = vmax.xlane.f32.xlu0 %v2278
        %v2280 = vpop.xlane.xlu0 %2279
        %v2281 = vsel %vm2235, %v2022, -inf
        %2282 = vmax.xlane.f32.xlu0 %v2281
        %v2283 = vpop.xlane.xlu0 %2282
        %vm2284 = vcmask 121952
        %v2285 = vsel %vm2284, %v1917, -inf
        %2286 = vmax.xlane.f32.xlu0 %v2285
        %v2287 = vpop.xlane.xlu0 %2286
        %v2288 = vsel %vm2284, %v1924, -inf
        %2289 = vmax.xlane.f32.xlu0 %v2288
        %v2290 = vpop.xlane.xlu0 %2289
        %v2291 = vsel %vm2284, %v1931, -inf
        %2292 = vmax.xlane.f32.xlu0 %v2291
        %v2293 = vpop.xlane.xlu0 %2292
        %v2294 = vsel %vm2284, %v1938, -inf
        %2295 = vmax.xlane.f32.xlu0 %v2294
        %v2296 = vpop.xlane.xlu0 %2295
        %v2297 = vsel %vm2284, %v1945, -inf
        %2298 = vmax.xlane.f32.xlu0 %v2297
        %v2299 = vpop.xlane.xlu0 %2298
        %v2300 = vsel %vm2284, %v1952, -inf
        %2301 = vmax.xlane.f32.xlu0 %v2300
        %v2302 = vpop.xlane.xlu0 %2301
        %v2303 = vsel %vm2284, %v1959, -inf
        %2304 = vmax.xlane.f32.xlu0 %v2303
        %v2305 = vpop.xlane.xlu0 %2304
        %v2306 = vsel %vm2284, %v1966, -inf
        %2307 = vmax.xlane.f32.xlu0 %v2306
        %v2308 = vpop.xlane.xlu0 %2307
        %v2309 = vsel %vm2284, %v1973, -inf
        %2310 = vmax.xlane.f32.xlu0 %v2309
        %v2311 = vpop.xlane.xlu0 %2310
        %v2312 = vsel %vm2284, %v1980, -inf
        %2313 = vmax.xlane.f32.xlu0 %v2312
        %v2314 = vpop.xlane.xlu0 %2313
        %v2315 = vsel %vm2284, %v1987, -inf
        %2316 = vmax.xlane.f32.xlu0 %v2315
        %v2317 = vpop.xlane.xlu0 %2316
        %v2318 = vsel %vm2284, %v1994, -inf
        %2319 = vmax.xlane.f32.xlu0 %v2318
        %v2320 = vpop.xlane.xlu0 %2319
        %v2321 = vsel %vm2284, %v2001, -inf
        %2322 = vmax.xlane.f32.xlu0 %v2321
        %v2323 = vpop.xlane.xlu0 %2322
        %v2324 = vsel %vm2284, %v2008, -inf
        %2325 = vmax.xlane.f32.xlu0 %v2324
        %v2326 = vpop.xlane.xlu0 %2325
        %v2327 = vsel %vm2284, %v2015, -inf
        %2328 = vmax.xlane.f32.xlu0 %v2327
        %v2329 = vpop.xlane.xlu0 %2328
        %v2330 = vsel %vm2284, %v2022, -inf
        %2331 = vmax.xlane.f32.xlu0 %v2330
        %v2332 = vpop.xlane.xlu0 %2331
        %vm2333 = vcmask 146552
        %v2334 = vsel %vm2333, %v1917, -inf
        %2335 = vmax.xlane.f32.xlu0 %v2334
        %v2336 = vpop.xlane.xlu0 %2335
        %v2337 = vsel %vm2333, %v1924, -inf
        %2338 = vmax.xlane.f32.xlu0 %v2337
        %v2339 = vpop.xlane.xlu0 %2338
        %v2340 = vsel %vm2333, %v1931, -inf
        %2341 = vmax.xlane.f32.xlu0 %v2340
        %v2342 = vpop.xlane.xlu0 %2341
        %v2343 = vsel %vm2333, %v1938, -inf
        %2344 = vmax.xlane.f32.xlu0 %v2343
        %v2345 = vpop.xlane.xlu0 %2344
        %v2346 = vsel %vm2333, %v1945, -inf
        %2347 = vmax.xlane.f32.xlu0 %v2346
        %v2348 = vpop.xlane.xlu0 %2347
        %v2349 = vsel %vm2333, %v1952, -inf
        %2350 = vmax.xlane.f32.xlu0 %v2349
        %v2351 = vpop.xlane.xlu0 %2350
        %v2352 = vsel %vm2333, %v1959, -inf
        %2353 = vmax.xlane.f32.xlu0 %v2352
        %v2354 = vpop.xlane.xlu0 %2353
        %v2355 = vsel %vm2333, %v1966, -inf
        %2356 = vmax.xlane.f32.xlu0 %v2355
        %v2357 = vpop.xlane.xlu0 %2356
        %v2358 = vsel %vm2333, %v1973, -inf
        %2359 = vmax.xlane.f32.xlu0 %v2358
        %v2360 = vpop.xlane.xlu0 %2359
        %v2361 = vsel %vm2333, %v1980, -inf
        %2362 = vmax.xlane.f32.xlu0 %v2361
        %v2363 = vpop.xlane.xlu0 %2362
        %v2364 = vsel %vm2333, %v1987, -inf
        %2365 = vmax.xlane.f32.xlu0 %v2364
        %v2366 = vpop.xlane.xlu0 %2365
        %v2367 = vsel %vm2333, %v1994, -inf
        %2368 = vmax.xlane.f32.xlu0 %v2367
        %v2369 = vpop.xlane.xlu0 %2368
        %v2370 = vsel %vm2333, %v2001, -inf
        %2371 = vmax.xlane.f32.xlu0 %v2370
        %v2372 = vpop.xlane.xlu0 %2371
        %v2373 = vsel %vm2333, %v2008, -inf
        %2374 = vmax.xlane.f32.xlu0 %v2373
        %v2375 = vpop.xlane.xlu0 %2374
        %v2376 = vsel %vm2333, %v2015, -inf
        %2377 = vmax.xlane.f32.xlu0 %v2376
        %v2378 = vpop.xlane.xlu0 %2377
        %v2379 = vsel %vm2333, %v2022, -inf
        %2380 = vmax.xlane.f32.xlu0 %v2379
        %v2381 = vpop.xlane.xlu0 %2380
        %vm2382 = vcmask 162952
        %v2383 = vsel %vm2382, %v1917, -inf
        %2384 = vmax.xlane.f32.xlu0 %v2383
        %v2385 = vpop.xlane.xlu0 %2384
        %v2386 = vsel %vm2382, %v1924, -inf
        %2387 = vmax.xlane.f32.xlu0 %v2386
        %v2388 = vpop.xlane.xlu0 %2387
        %v2389 = vsel %vm2382, %v1931, -inf
        %2390 = vmax.xlane.f32.xlu0 %v2389
        %v2391 = vpop.xlane.xlu0 %2390
        %v2392 = vsel %vm2382, %v1938, -inf
        %2393 = vmax.xlane.f32.xlu0 %v2392
        %v2394 = vpop.xlane.xlu0 %2393
        %v2395 = vsel %vm2382, %v1945, -inf
        %2396 = vmax.xlane.f32.xlu0 %v2395
        %v2397 = vpop.xlane.xlu0 %2396
        %v2398 = vsel %vm2382, %v1952, -inf
        %2399 = vmax.xlane.f32.xlu0 %v2398
        %v2400 = vpop.xlane.xlu0 %2399
        %v2401 = vsel %vm2382, %v1959, -inf
        %2402 = vmax.xlane.f32.xlu0 %v2401
        %v2403 = vpop.xlane.xlu0 %2402
        %v2404 = vsel %vm2382, %v1966, -inf
        %2405 = vmax.xlane.f32.xlu0 %v2404
        %v2406 = vpop.xlane.xlu0 %2405
        %v2407 = vsel %vm2382, %v1973, -inf
        %2408 = vmax.xlane.f32.xlu0 %v2407
        %v2409 = vpop.xlane.xlu0 %2408
        %v2410 = vsel %vm2382, %v1980, -inf
        %2411 = vmax.xlane.f32.xlu0 %v2410
        %v2412 = vpop.xlane.xlu0 %2411
        %v2413 = vsel %vm2382, %v1987, -inf
        %2414 = vmax.xlane.f32.xlu0 %v2413
        %v2415 = vpop.xlane.xlu0 %2414
        %v2416 = vsel %vm2382, %v1994, -inf
        %2417 = vmax.xlane.f32.xlu0 %v2416
        %v2418 = vpop.xlane.xlu0 %2417
        %v2419 = vsel %vm2382, %v2001, -inf
        %2420 = vmax.xlane.f32.xlu0 %v2419
        %v2421 = vpop.xlane.xlu0 %2420
        %v2422 = vsel %vm2382, %v2008, -inf
        %2423 = vmax.xlane.f32.xlu0 %v2422
        %v2424 = vpop.xlane.xlu0 %2423
        %v2425 = vsel %vm2382, %v2015, -inf
        %2426 = vmax.xlane.f32.xlu0 %v2425
        %v2427 = vpop.xlane.xlu0 %2426
        %v2428 = vsel %vm2382, %v2022, -inf
        %2429 = vmax.xlane.f32.xlu0 %v2428
        %v2430 = vpop.xlane.xlu0 %2429
        %vm2431 = vcmask 187552
        %v2432 = vsel %vm2431, %v1917, -inf
        %2433 = vmax.xlane.f32.xlu0 %v2432
        %v2434 = vpop.xlane.xlu0 %2433
        %v2435 = vsel %vm2431, %v1924, -inf
        %2436 = vmax.xlane.f32.xlu0 %v2435
        %v2437 = vpop.xlane.xlu0 %2436
        %v2438 = vsel %vm2431, %v1931, -inf
        %2439 = vmax.xlane.f32.xlu0 %v2438
        %v2440 = vpop.xlane.xlu0 %2439
        %v2441 = vsel %vm2431, %v1938, -inf
        %2442 = vmax.xlane.f32.xlu0 %v2441
        %v2443 = vpop.xlane.xlu0 %2442
        %v2444 = vsel %vm2431, %v1945, -inf
        %2445 = vmax.xlane.f32.xlu0 %v2444
        %v2446 = vpop.xlane.xlu0 %2445
        %v2447 = vsel %vm2431, %v1952, -inf
        %2448 = vmax.xlane.f32.xlu0 %v2447
        %v2449 = vpop.xlane.xlu0 %2448
        %v2450 = vsel %vm2431, %v1959, -inf
        %2451 = vmax.xlane.f32.xlu0 %v2450
        %v2452 = vpop.xlane.xlu0 %2451
        %v2453 = vsel %vm2431, %v1966, -inf
        %2454 = vmax.xlane.f32.xlu0 %v2453
        %v2455 = vpop.xlane.xlu0 %2454
        %v2456 = vsel %vm2431, %v1973, -inf
        %2457 = vmax.xlane.f32.xlu0 %v2456
        %v2458 = vpop.xlane.xlu0 %2457
        %v2459 = vsel %vm2431, %v1980, -inf
        %2460 = vmax.xlane.f32.xlu0 %v2459
        %v2461 = vpop.xlane.xlu0 %2460
        %v2462 = vsel %vm2431, %v1987, -inf
        %2463 = vmax.xlane.f32.xlu0 %v2462
        %v2464 = vpop.xlane.xlu0 %2463
        %v2465 = vsel %vm2431, %v1994, -inf
        %2466 = vmax.xlane.f32.xlu0 %v2465
        %v2467 = vpop.xlane.xlu0 %2466
        %v2468 = vsel %vm2431, %v2001, -inf
        %2469 = vmax.xlane.f32.xlu0 %v2468
        %v2470 = vpop.xlane.xlu0 %2469
        %v2471 = vsel %vm2431, %v2008, -inf
        %2472 = vmax.xlane.f32.xlu0 %v2471
        %v2473 = vpop.xlane.xlu0 %2472
        %v2474 = vsel %vm2431, %v2015, -inf
        %2475 = vmax.xlane.f32.xlu0 %v2474
        %v2476 = vpop.xlane.xlu0 %2475
        %v2477 = vsel %vm2431, %v2022, -inf
        %2478 = vmax.xlane.f32.xlu0 %v2477
        %v2479 = vpop.xlane.xlu0 %2478
        %vm2480 = vcmask 203952
        %v2481 = vsel %vm2480, %v1917, -inf
        %2482 = vmax.xlane.f32.xlu0 %v2481
        %v2483 = vpop.xlane.xlu0 %2482
        %v2484 = vsel %vm2480, %v1924, -inf
        %2485 = vmax.xlane.f32.xlu0 %v2484
        %v2486 = vpop.xlane.xlu0 %2485
        %v2487 = vsel %vm2480, %v1931, -inf
        %2488 = vmax.xlane.f32.xlu0 %v2487
        %v2489 = vpop.xlane.xlu0 %2488
        %v2490 = vsel %vm2480, %v1938, -inf
        %2491 = vmax.xlane.f32.xlu0 %v2490
        %v2492 = vpop.xlane.xlu0 %2491
        %v2493 = vsel %vm2480, %v1945, -inf
        %2494 = vmax.xlane.f32.xlu0 %v2493
        %v2495 = vpop.xlane.xlu0 %2494
        %v2496 = vsel %vm2480, %v1952, -inf
        %2497 = vmax.xlane.f32.xlu0 %v2496
        %v2498 = vpop.xlane.xlu0 %2497
        %v2499 = vsel %vm2480, %v1959, -inf
        %2500 = vmax.xlane.f32.xlu0 %v2499
        %v2501 = vpop.xlane.xlu0 %2500
        %v2502 = vsel %vm2480, %v1966, -inf
        %2503 = vmax.xlane.f32.xlu0 %v2502
        %v2504 = vpop.xlane.xlu0 %2503
        %v2505 = vsel %vm2480, %v1973, -inf
        %2506 = vmax.xlane.f32.xlu0 %v2505
        %v2507 = vpop.xlane.xlu0 %2506
        %v2508 = vsel %vm2480, %v1980, -inf
        %2509 = vmax.xlane.f32.xlu0 %v2508
        %v2510 = vpop.xlane.xlu0 %2509
        %v2511 = vsel %vm2480, %v1987, -inf
        %2512 = vmax.xlane.f32.xlu0 %v2511
        %v2513 = vpop.xlane.xlu0 %2512
        %v2514 = vsel %vm2480, %v1994, -inf
        %2515 = vmax.xlane.f32.xlu0 %v2514
        %v2516 = vpop.xlane.xlu0 %2515
        %v2517 = vsel %vm2480, %v2001, -inf
        %2518 = vmax.xlane.f32.xlu0 %v2517
        %v2519 = vpop.xlane.xlu0 %2518
        %v2520 = vsel %vm2480, %v2008, -inf
        %2521 = vmax.xlane.f32.xlu0 %v2520
        %v2522 = vpop.xlane.xlu0 %2521
        %v2523 = vsel %vm2480, %v2015, -inf
        %2524 = vmax.xlane.f32.xlu0 %v2523
        %v2525 = vpop.xlane.xlu0 %2524
        %v2526 = vsel %vm2480, %v2022, -inf
        %2527 = vmax.xlane.f32.xlu0 %v2526
        %v2528 = vpop.xlane.xlu0 %2527
        %vm2529 = vcmask 228552
        %v2530 = vsel %vm2529, %v1917, -inf
        %2531 = vmax.xlane.f32.xlu0 %v2530
        %v2532 = vpop.xlane.xlu0 %2531
        %v2533 = vsel %vm2529, %v1924, -inf
        %2534 = vmax.xlane.f32.xlu0 %v2533
        %v2535 = vpop.xlane.xlu0 %2534
        %v2536 = vsel %vm2529, %v1931, -inf
        %2537 = vmax.xlane.f32.xlu0 %v2536
        %v2538 = vpop.xlane.xlu0 %2537
        %v2539 = vsel %vm2529, %v1938, -inf
        %2540 = vmax.xlane.f32.xlu0 %v2539
        %v2541 = vpop.xlane.xlu0 %2540
        %v2542 = vsel %vm2529, %v1945, -inf
        %2543 = vmax.xlane.f32.xlu0 %v2542
        %v2544 = vpop.xlane.xlu0 %2543
        %v2545 = vsel %vm2529, %v1952, -inf
        %2546 = vmax.xlane.f32.xlu0 %v2545
        %v2547 = vpop.xlane.xlu0 %2546
        %v2548 = vsel %vm2529, %v1959, -inf
        %2549 = vmax.xlane.f32.xlu0 %v2548
        %v2550 = vpop.xlane.xlu0 %2549
        %v2551 = vsel %vm2529, %v1966, -inf
        %2552 = vmax.xlane.f32.xlu0 %v2551
        %v2553 = vpop.xlane.xlu0 %2552
        %v2554 = vsel %vm2529, %v1973, -inf
        %2555 = vmax.xlane.f32.xlu0 %v2554
        %v2556 = vpop.xlane.xlu0 %2555
        %v2557 = vsel %vm2529, %v1980, -inf
        %2558 = vmax.xlane.f32.xlu0 %v2557
        %v2559 = vpop.xlane.xlu0 %2558
        %v2560 = vsel %vm2529, %v1987, -inf
        %2561 = vmax.xlane.f32.xlu0 %v2560
        %v2562 = vpop.xlane.xlu0 %2561
        %v2563 = vsel %vm2529, %v1994, -inf
        %2564 = vmax.xlane.f32.xlu0 %v2563
        %v2565 = vpop.xlane.xlu0 %2564
        %v2566 = vsel %vm2529, %v2001, -inf
        %2567 = vmax.xlane.f32.xlu0 %v2566
        %v2568 = vpop.xlane.xlu0 %2567
        %v2569 = vsel %vm2529, %v2008, -inf
        %2570 = vmax.xlane.f32.xlu0 %v2569
        %v2571 = vpop.xlane.xlu0 %2570
        %v2572 = vsel %vm2529, %v2015, -inf
        %2573 = vmax.xlane.f32.xlu0 %v2572
        %v2574 = vpop.xlane.xlu0 %2573
        %v2575 = vsel %vm2529, %v2022, -inf
        %2576 = vmax.xlane.f32.xlu0 %v2575
        %v2577 = vpop.xlane.xlu0 %2576
        %vm2578 = vcmask 244952
        %v2579 = vsel %vm2578, %v1917, -inf
        %2580 = vmax.xlane.f32.xlu0 %v2579
        %v2581 = vpop.xlane.xlu0 %2580
        %v2582 = vsel %vm2578, %v1924, -inf
        %2583 = vmax.xlane.f32.xlu0 %v2582
        %v2584 = vpop.xlane.xlu0 %2583
        %v2585 = vsel %vm2578, %v1931, -inf
        %2586 = vmax.xlane.f32.xlu0 %v2585
        %v2587 = vpop.xlane.xlu0 %2586
        %v2588 = vsel %vm2578, %v1938, -inf
        %2589 = vmax.xlane.f32.xlu0 %v2588
        %v2590 = vpop.xlane.xlu0 %2589
        %v2591 = vsel %vm2578, %v1945, -inf
        %2592 = vmax.xlane.f32.xlu0 %v2591
        %v2593 = vpop.xlane.xlu0 %2592
        %v2594 = vsel %vm2578, %v1952, -inf
        %2595 = vmax.xlane.f32.xlu0 %v2594
        %v2596 = vpop.xlane.xlu0 %2595
        %v2597 = vsel %vm2578, %v1959, -inf
        %2598 = vmax.xlane.f32.xlu0 %v2597
        %v2599 = vpop.xlane.xlu0 %2598
        %v2600 = vsel %vm2578, %v1966, -inf
        %2601 = vmax.xlane.f32.xlu0 %v2600
        %v2602 = vpop.xlane.xlu0 %2601
        %v2603 = vsel %vm2578, %v1973, -inf
        %2604 = vmax.xlane.f32.xlu0 %v2603
        %v2605 = vpop.xlane.xlu0 %2604
        %v2606 = vsel %vm2578, %v1980, -inf
        %2607 = vmax.xlane.f32.xlu0 %v2606
        %v2608 = vpop.xlane.xlu0 %2607
        %v2609 = vsel %vm2578, %v1987, -inf
        %2610 = vmax.xlane.f32.xlu0 %v2609
        %v2611 = vpop.xlane.xlu0 %2610
        %v2612 = vsel %vm2578, %v1994, -inf
        %2613 = vmax.xlane.f32.xlu0 %v2612
        %v2614 = vpop.xlane.xlu0 %2613
        %v2615 = vsel %vm2578, %v2001, -inf
        %2616 = vmax.xlane.f32.xlu0 %v2615
        %v2617 = vpop.xlane.xlu0 %2616
        %v2618 = vsel %vm2578, %v2008, -inf
        %2619 = vmax.xlane.f32.xlu0 %v2618
        %v2620 = vpop.xlane.xlu0 %2619
        %v2621 = vsel %vm2578, %v2015, -inf
        %2622 = vmax.xlane.f32.xlu0 %v2621
        %v2623 = vpop.xlane.xlu0 %2622
        %v2624 = vsel %vm2578, %v2022, -inf
        %2625 = vmax.xlane.f32.xlu0 %v2624
        %v2626 = vpop.xlane.xlu0 %2625
        %vm2627 = vcmask 269552
        %v2628 = vsel %vm2627, %v1917, -inf
        %2629 = vmax.xlane.f32.xlu0 %v2628
        %v2630 = vpop.xlane.xlu0 %2629
        %v2631 = vsel %vm2627, %v1924, -inf
        %2632 = vmax.xlane.f32.xlu0 %v2631
        %v2633 = vpop.xlane.xlu0 %2632
        %v2634 = vsel %vm2627, %v1931, -inf
        %2635 = vmax.xlane.f32.xlu0 %v2634
        %v2636 = vpop.xlane.xlu0 %2635
        %v2637 = vsel %vm2627, %v1938, -inf
        %2638 = vmax.xlane.f32.xlu0 %v2637
        %v2639 = vpop.xlane.xlu0 %2638
        %v2640 = vsel %vm2627, %v1945, -inf
        %2641 = vmax.xlane.f32.xlu0 %v2640
        %v2642 = vpop.xlane.xlu0 %2641
        %v2643 = vsel %vm2627, %v1952, -inf
        %2644 = vmax.xlane.f32.xlu0 %v2643
        %v2645 = vpop.xlane.xlu0 %2644
        %v2646 = vsel %vm2627, %v1959, -inf
        %2647 = vmax.xlane.f32.xlu0 %v2646
        %v2648 = vpop.xlane.xlu0 %2647
        %v2649 = vsel %vm2627, %v1966, -inf
        %2650 = vmax.xlane.f32.xlu0 %v2649
        %v2651 = vpop.xlane.xlu0 %2650
        %v2652 = vsel %vm2627, %v1973, -inf
        %2653 = vmax.xlane.f32.xlu0 %v2652
        %v2654 = vpop.xlane.xlu0 %2653
        %v2655 = vsel %vm2627, %v1980, -inf
        %2656 = vmax.xlane.f32.xlu0 %v2655
        %v2657 = vpop.xlane.xlu0 %2656
        %v2658 = vsel %vm2627, %v1987, -inf
        %2659 = vmax.xlane.f32.xlu0 %v2658
        %v2660 = vpop.xlane.xlu0 %2659
        %v2661 = vsel %vm2627, %v1994, -inf
        %2662 = vmax.xlane.f32.xlu0 %v2661
        %v2663 = vpop.xlane.xlu0 %2662
        %v2664 = vsel %vm2627, %v2001, -inf
        %2665 = vmax.xlane.f32.xlu0 %v2664
        %v2666 = vpop.xlane.xlu0 %2665
        %v2667 = vsel %vm2627, %v2008, -inf
        %2668 = vmax.xlane.f32.xlu0 %v2667
        %v2669 = vpop.xlane.xlu0 %2668
        %v2670 = vsel %vm2627, %v2015, -inf
        %2671 = vmax.xlane.f32.xlu0 %v2670
        %v2672 = vpop.xlane.xlu0 %2671
        %v2673 = vsel %vm2627, %v2022, -inf
        %2674 = vmax.xlane.f32.xlu0 %v2673
        %v2675 = vpop.xlane.xlu0 %2674
        %vm2676 = vcmask 285952
        %v2677 = vsel %vm2676, %v1917, -inf
        %2678 = vmax.xlane.f32.xlu0 %v2677
        %v2679 = vpop.xlane.xlu0 %2678
        %v2680 = vsel %vm2676, %v1924, -inf
        %2681 = vmax.xlane.f32.xlu0 %v2680
        %v2682 = vpop.xlane.xlu0 %2681
        %v2683 = vsel %vm2676, %v1931, -inf
        %2684 = vmax.xlane.f32.xlu0 %v2683
        %v2685 = vpop.xlane.xlu0 %2684
        %v2686 = vsel %vm2676, %v1938, -inf
        %2687 = vmax.xlane.f32.xlu0 %v2686
        %v2688 = vpop.xlane.xlu0 %2687
        %v2689 = vsel %vm2676, %v1945, -inf
        %2690 = vmax.xlane.f32.xlu0 %v2689
        %v2691 = vpop.xlane.xlu0 %2690
        %v2692 = vsel %vm2676, %v1952, -inf
        %2693 = vmax.xlane.f32.xlu0 %v2692
        %v2694 = vpop.xlane.xlu0 %2693
        %v2695 = vsel %vm2676, %v1959, -inf
        %2696 = vmax.xlane.f32.xlu0 %v2695
        %v2697 = vpop.xlane.xlu0 %2696
        %v2698 = vsel %vm2676, %v1966, -inf
        %2699 = vmax.xlane.f32.xlu0 %v2698
        %v2700 = vpop.xlane.xlu0 %2699
        %v2701 = vsel %vm2676, %v1973, -inf
        %2702 = vmax.xlane.f32.xlu0 %v2701
        %v2703 = vpop.xlane.xlu0 %2702
        %v2704 = vsel %vm2676, %v1980, -inf
        %2705 = vmax.xlane.f32.xlu0 %v2704
        %v2706 = vpop.xlane.xlu0 %2705
        %v2707 = vsel %vm2676, %v1987, -inf
        %2708 = vmax.xlane.f32.xlu0 %v2707
        %v2709 = vpop.xlane.xlu0 %2708
        %v2710 = vsel %vm2676, %v1994, -inf
        %2711 = vmax.xlane.f32.xlu0 %v2710
        %v2712 = vpop.xlane.xlu0 %2711
        %v2713 = vsel %vm2676, %v2001, -inf
        %2714 = vmax.xlane.f32.xlu0 %v2713
        %v2715 = vpop.xlane.xlu0 %2714
        %v2716 = vsel %vm2676, %v2008, -inf
        %2717 = vmax.xlane.f32.xlu0 %v2716
        %v2718 = vpop.xlane.xlu0 %2717
        %v2719 = vsel %vm2676, %v2015, -inf
        %2720 = vmax.xlane.f32.xlu0 %v2719
        %v2721 = vpop.xlane.xlu0 %2720
        %v2722 = vsel %vm2676, %v2022, -inf
        %2723 = vmax.xlane.f32.xlu0 %v2722
        %v2724 = vpop.xlane.xlu0 %2723
        %vm2725 = vcmask 310552
        %v2726 = vsel %vm2725, %v1917, -inf
        %2727 = vmax.xlane.f32.xlu0 %v2726
        %v2728 = vpop.xlane.xlu0 %2727
        %v2729 = vsel %vm2725, %v1924, -inf
        %2730 = vmax.xlane.f32.xlu0 %v2729
        %v2731 = vpop.xlane.xlu0 %2730
        %v2732 = vsel %vm2725, %v1931, -inf
        %2733 = vmax.xlane.f32.xlu0 %v2732
        %v2734 = vpop.xlane.xlu0 %2733
        %v2735 = vsel %vm2725, %v1938, -inf
        %2736 = vmax.xlane.f32.xlu0 %v2735
        %v2737 = vpop.xlane.xlu0 %2736
        %v2738 = vsel %vm2725, %v1945, -inf
        %2739 = vmax.xlane.f32.xlu0 %v2738
        %v2740 = vpop.xlane.xlu0 %2739
        %v2741 = vsel %vm2725, %v1952, -inf
        %2742 = vmax.xlane.f32.xlu0 %v2741
        %v2743 = vpop.xlane.xlu0 %2742
        %v2744 = vsel %vm2725, %v1959, -inf
        %2745 = vmax.xlane.f32.xlu0 %v2744
        %v2746 = vpop.xlane.xlu0 %2745
        %v2747 = vsel %vm2725, %v1966, -inf
        %2748 = vmax.xlane.f32.xlu0 %v2747
        %v2749 = vpop.xlane.xlu0 %2748
        %v2750 = vsel %vm2725, %v1973, -inf
        %2751 = vmax.xlane.f32.xlu0 %v2750
        %v2752 = vpop.xlane.xlu0 %2751
        %v2753 = vsel %vm2725, %v1980, -inf
        %2754 = vmax.xlane.f32.xlu0 %v2753
        %v2755 = vpop.xlane.xlu0 %2754
        %v2756 = vsel %vm2725, %v1987, -inf
        %2757 = vmax.xlane.f32.xlu0 %v2756
        %v2758 = vpop.xlane.xlu0 %2757
        %v2759 = vsel %vm2725, %v1994, -inf
        %2760 = vmax.xlane.f32.xlu0 %v2759
        %v2761 = vpop.xlane.xlu0 %2760
        %v2762 = vsel %vm2725, %v2001, -inf
        %2763 = vmax.xlane.f32.xlu0 %v2762
        %v2764 = vpop.xlane.xlu0 %2763
        %v2765 = vsel %vm2725, %v2008, -inf
        %2766 = vmax.xlane.f32.xlu0 %v2765
        %v2767 = vpop.xlane.xlu0 %2766
        %v2768 = vsel %vm2725, %v2015, -inf
        %2769 = vmax.xlane.f32.xlu0 %v2768
        %v2770 = vpop.xlane.xlu0 %2769
        %v2771 = vsel %vm2725, %v2022, -inf
        %2772 = vmax.xlane.f32.xlu0 %v2771
        %v2773 = vpop.xlane.xlu0 %2772
        %vm2774 = vcmask 326952
        %v2775 = vsel %vm2774, %v1917, -inf
        %2776 = vmax.xlane.f32.xlu0 %v2775
        %v2777 = vpop.xlane.xlu0 %2776
        %v2778 = vsel %vm2774, %v1924, -inf
        %2779 = vmax.xlane.f32.xlu0 %v2778
        %v2780 = vpop.xlane.xlu0 %2779
        %v2781 = vsel %vm2774, %v1931, -inf
        %2782 = vmax.xlane.f32.xlu0 %v2781
        %v2783 = vpop.xlane.xlu0 %2782
        %v2784 = vsel %vm2774, %v1938, -inf
        %2785 = vmax.xlane.f32.xlu0 %v2784
        %v2786 = vpop.xlane.xlu0 %2785
        %v2787 = vsel %vm2774, %v1945, -inf
        %2788 = vmax.xlane.f32.xlu0 %v2787
        %v2789 = vpop.xlane.xlu0 %2788
        %v2790 = vsel %vm2774, %v1952, -inf
        %2791 = vmax.xlane.f32.xlu0 %v2790
        %v2792 = vpop.xlane.xlu0 %2791
        %v2793 = vsel %vm2774, %v1959, -inf
        %2794 = vmax.xlane.f32.xlu0 %v2793
        %v2795 = vpop.xlane.xlu0 %2794
        %v2796 = vsel %vm2774, %v1966, -inf
        %2797 = vmax.xlane.f32.xlu0 %v2796
        %v2798 = vpop.xlane.xlu0 %2797
        %v2799 = vsel %vm2774, %v1973, -inf
        %2800 = vmax.xlane.f32.xlu0 %v2799
        %v2801 = vpop.xlane.xlu0 %2800
        %v2802 = vsel %vm2774, %v1980, -inf
        %2803 = vmax.xlane.f32.xlu0 %v2802
        %v2804 = vpop.xlane.xlu0 %2803
        %v2805 = vsel %vm2774, %v1987, -inf
        %2806 = vmax.xlane.f32.xlu0 %v2805
        %v2807 = vpop.xlane.xlu0 %2806
        %v2808 = vsel %vm2774, %v1994, -inf
        %2809 = vmax.xlane.f32.xlu0 %v2808
        %v2810 = vpop.xlane.xlu0 %2809
        %v2811 = vsel %vm2774, %v2001, -inf
        %2812 = vmax.xlane.f32.xlu0 %v2811
        %v2813 = vpop.xlane.xlu0 %2812
        %v2814 = vsel %vm2774, %v2008, -inf
        %2815 = vmax.xlane.f32.xlu0 %v2814
        %v2816 = vpop.xlane.xlu0 %2815
        %v2817 = vsel %vm2774, %v2015, -inf
        %2818 = vmax.xlane.f32.xlu0 %v2817
        %v2819 = vpop.xlane.xlu0 %2818
        %v2820 = vsel %vm2774, %v2022, -inf
        %2821 = vmax.xlane.f32.xlu0 %v2820
        %v2822 = vpop.xlane.xlu0 %2821
        %vm2823 = vcmask 351552
        %v2824 = vsel %vm2823, %v1917, -inf
        %2825 = vmax.xlane.f32.xlu0 %v2824
        %v2826 = vpop.xlane.xlu0 %2825
        %v2827 = vsel %vm2823, %v1924, -inf
        %2828 = vmax.xlane.f32.xlu0 %v2827
        %v2829 = vpop.xlane.xlu0 %2828
        %v2830 = vsel %vm2823, %v1931, -inf
        %2831 = vmax.xlane.f32.xlu0 %v2830
        %v2832 = vpop.xlane.xlu0 %2831
        %v2833 = vsel %vm2823, %v1938, -inf
        %2834 = vmax.xlane.f32.xlu0 %v2833
        %v2835 = vpop.xlane.xlu0 %2834
        %v2836 = vsel %vm2823, %v1945, -inf
        %2837 = vmax.xlane.f32.xlu0 %v2836
        %v2838 = vpop.xlane.xlu0 %2837
        %v2839 = vsel %vm2823, %v1952, -inf
        %2840 = vmax.xlane.f32.xlu0 %v2839
        %v2841 = vpop.xlane.xlu0 %2840
        %v2842 = vsel %vm2823, %v1959, -inf
        %2843 = vmax.xlane.f32.xlu0 %v2842
        %v2844 = vpop.xlane.xlu0 %2843
        %v2845 = vsel %vm2823, %v1966, -inf
        %2846 = vmax.xlane.f32.xlu0 %v2845
        %v2847 = vpop.xlane.xlu0 %2846
        %v2848 = vsel %vm2823, %v1973, -inf
        %2849 = vmax.xlane.f32.xlu0 %v2848
        %v2850 = vpop.xlane.xlu0 %2849
        %v2851 = vsel %vm2823, %v1980, -inf
        %2852 = vmax.xlane.f32.xlu0 %v2851
        %v2853 = vpop.xlane.xlu0 %2852
        %v2854 = vsel %vm2823, %v1987, -inf
        %2855 = vmax.xlane.f32.xlu0 %v2854
        %v2856 = vpop.xlane.xlu0 %2855
        %v2857 = vsel %vm2823, %v1994, -inf
        %2858 = vmax.xlane.f32.xlu0 %v2857
        %v2859 = vpop.xlane.xlu0 %2858
        %v2860 = vsel %vm2823, %v2001, -inf
        %2861 = vmax.xlane.f32.xlu0 %v2860
        %v2862 = vpop.xlane.xlu0 %2861
        %v2863 = vsel %vm2823, %v2008, -inf
        %2864 = vmax.xlane.f32.xlu0 %v2863
        %v2865 = vpop.xlane.xlu0 %2864
        %v2866 = vsel %vm2823, %v2015, -inf
        %2867 = vmax.xlane.f32.xlu0 %v2866
        %v2868 = vpop.xlane.xlu0 %2867
        %v2869 = vsel %vm2823, %v2022, -inf
        %2870 = vmax.xlane.f32.xlu0 %v2869
        %v2871 = vpop.xlane.xlu0 %2870
        %vm2872 = vcmask 367952
        %v2873 = vsel %vm2872, %v1917, -inf
        %2874 = vmax.xlane.f32.xlu0 %v2873
        %v2875 = vpop.xlane.xlu0 %2874
        %v2876 = vsel %vm2872, %v1924, -inf
        %2877 = vmax.xlane.f32.xlu0 %v2876
        %v2878 = vpop.xlane.xlu0 %2877
        %v2879 = vsel %vm2872, %v1931, -inf
        %2880 = vmax.xlane.f32.xlu0 %v2879
        %v2881 = vpop.xlane.xlu0 %2880
        %v2882 = vsel %vm2872, %v1938, -inf
        %2883 = vmax.xlane.f32.xlu0 %v2882
        %v2884 = vpop.xlane.xlu0 %2883
        %v2885 = vsel %vm2872, %v1945, -inf
        %2886 = vmax.xlane.f32.xlu0 %v2885
        %v2887 = vpop.xlane.xlu0 %2886
        %v2888 = vsel %vm2872, %v1952, -inf
        %2889 = vmax.xlane.f32.xlu0 %v2888
        %v2890 = vpop.xlane.xlu0 %2889
        %v2891 = vsel %vm2872, %v1959, -inf
        %2892 = vmax.xlane.f32.xlu0 %v2891
        %v2893 = vpop.xlane.xlu0 %2892
        %v2894 = vsel %vm2872, %v1966, -inf
        %2895 = vmax.xlane.f32.xlu0 %v2894
        %v2896 = vpop.xlane.xlu0 %2895
        %v2897 = vsel %vm2872, %v1973, -inf
        %2898 = vmax.xlane.f32.xlu0 %v2897
        %v2899 = vpop.xlane.xlu0 %2898
        %v2900 = vsel %vm2872, %v1980, -inf
        %2901 = vmax.xlane.f32.xlu0 %v2900
        %v2902 = vpop.xlane.xlu0 %2901
        %v2903 = vsel %vm2872, %v1987, -inf
        %2904 = vmax.xlane.f32.xlu0 %v2903
        %v2905 = vpop.xlane.xlu0 %2904
        %v2906 = vsel %vm2872, %v1994, -inf
        %2907 = vmax.xlane.f32.xlu0 %v2906
        %v2908 = vpop.xlane.xlu0 %2907
        %v2909 = vsel %vm2872, %v2001, -inf
        %2910 = vmax.xlane.f32.xlu0 %v2909
        %v2911 = vpop.xlane.xlu0 %2910
        %v2912 = vsel %vm2872, %v2008, -inf
        %2913 = vmax.xlane.f32.xlu0 %v2912
        %v2914 = vpop.xlane.xlu0 %2913
        %v2915 = vsel %vm2872, %v2015, -inf
        %2916 = vmax.xlane.f32.xlu0 %v2915
        %v2917 = vpop.xlane.xlu0 %2916
        %v2918 = vsel %vm2872, %v2022, -inf
        %2919 = vmax.xlane.f32.xlu0 %v2918
        %v2920 = vpop.xlane.xlu0 %2919
        %vm2921 = vcmask 392552
        %v2922 = vsel %vm2921, %v1917, -inf
        %2923 = vmax.xlane.f32.xlu0 %v2922
        %v2924 = vpop.xlane.xlu0 %2923
        %v2925 = vsel %vm2921, %v1924, -inf
        %2926 = vmax.xlane.f32.xlu0 %v2925
        %v2927 = vpop.xlane.xlu0 %2926
        %v2928 = vsel %vm2921, %v1931, -inf
        %2929 = vmax.xlane.f32.xlu0 %v2928
        %v2930 = vpop.xlane.xlu0 %2929
        %v2931 = vsel %vm2921, %v1938, -inf
        %2932 = vmax.xlane.f32.xlu0 %v2931
        %v2933 = vpop.xlane.xlu0 %2932
        %v2934 = vsel %vm2921, %v1945, -inf
        %2935 = vmax.xlane.f32.xlu0 %v2934
        %v2936 = vpop.xlane.xlu0 %2935
        %v2937 = vsel %vm2921, %v1952, -inf
        %2938 = vmax.xlane.f32.xlu0 %v2937
        %v2939 = vpop.xlane.xlu0 %2938
        %v2940 = vsel %vm2921, %v1959, -inf
        %2941 = vmax.xlane.f32.xlu0 %v2940
        %v2942 = vpop.xlane.xlu0 %2941
        %v2943 = vsel %vm2921, %v1966, -inf
        %2944 = vmax.xlane.f32.xlu0 %v2943
        %v2945 = vpop.xlane.xlu0 %2944
        %v2946 = vsel %vm2921, %v1973, -inf
        %2947 = vmax.xlane.f32.xlu0 %v2946
        %v2948 = vpop.xlane.xlu0 %2947
        %v2949 = vsel %vm2921, %v1980, -inf
        %2950 = vmax.xlane.f32.xlu0 %v2949
        %v2951 = vpop.xlane.xlu0 %2950
        %v2952 = vsel %vm2921, %v1987, -inf
        %2953 = vmax.xlane.f32.xlu0 %v2952
        %v2954 = vpop.xlane.xlu0 %2953
        %v2955 = vsel %vm2921, %v1994, -inf
        %2956 = vmax.xlane.f32.xlu0 %v2955
        %v2957 = vpop.xlane.xlu0 %2956
        %v2958 = vsel %vm2921, %v2001, -inf
        %2959 = vmax.xlane.f32.xlu0 %v2958
        %v2960 = vpop.xlane.xlu0 %2959
        %v2961 = vsel %vm2921, %v2008, -inf
        %2962 = vmax.xlane.f32.xlu0 %v2961
        %v2963 = vpop.xlane.xlu0 %2962
        %v2964 = vsel %vm2921, %v2015, -inf
        %2965 = vmax.xlane.f32.xlu0 %v2964
        %v2966 = vpop.xlane.xlu0 %2965
        %v2967 = vsel %vm2921, %v2022, -inf
        %2968 = vmax.xlane.f32.xlu0 %v2967
        %v2969 = vpop.xlane.xlu0 %2968
        %vm2970 = vcmask 408952
        %v2971 = vsel %vm2970, %v1917, -inf
        %2972 = vmax.xlane.f32.xlu0 %v2971
        %v2973 = vpop.xlane.xlu0 %2972
        %v2974 = vsel %vm2970, %v1924, -inf
        %2975 = vmax.xlane.f32.xlu0 %v2974
        %v2976 = vpop.xlane.xlu0 %2975
        %v2977 = vsel %vm2970, %v1931, -inf
        %2978 = vmax.xlane.f32.xlu0 %v2977
        %v2979 = vpop.xlane.xlu0 %2978
        %v2980 = vsel %vm2970, %v1938, -inf
        %2981 = vmax.xlane.f32.xlu0 %v2980
        %v2982 = vpop.xlane.xlu0 %2981
        %v2983 = vsel %vm2970, %v1945, -inf
        %2984 = vmax.xlane.f32.xlu0 %v2983
        %v2985 = vpop.xlane.xlu0 %2984
        %v2986 = vsel %vm2970, %v1952, -inf
        %2987 = vmax.xlane.f32.xlu0 %v2986
        %v2988 = vpop.xlane.xlu0 %2987
        %v2989 = vsel %vm2970, %v1959, -inf
        %2990 = vmax.xlane.f32.xlu0 %v2989
        %v2991 = vpop.xlane.xlu0 %2990
        %v2992 = vsel %vm2970, %v1966, -inf
        %2993 = vmax.xlane.f32.xlu0 %v2992
        %v2994 = vpop.xlane.xlu0 %2993
        %v2995 = vsel %vm2970, %v1973, -inf
        %2996 = vmax.xlane.f32.xlu0 %v2995
        %v2997 = vpop.xlane.xlu0 %2996
        %v2998 = vsel %vm2970, %v1980, -inf
        %2999 = vmax.xlane.f32.xlu0 %v2998
        %v3000 = vpop.xlane.xlu0 %2999
        %v3001 = vsel %vm2970, %v1987, -inf
        %3002 = vmax.xlane.f32.xlu0 %v3001
        %v3003 = vpop.xlane.xlu0 %3002
        %v3004 = vsel %vm2970, %v1994, -inf
        %3005 = vmax.xlane.f32.xlu0 %v3004
        %v3006 = vpop.xlane.xlu0 %3005
        %v3007 = vsel %vm2970, %v2001, -inf
        %3008 = vmax.xlane.f32.xlu0 %v3007
        %v3009 = vpop.xlane.xlu0 %3008
        %v3010 = vsel %vm2970, %v2008, -inf
        %3011 = vmax.xlane.f32.xlu0 %v3010
        %v3012 = vpop.xlane.xlu0 %3011
        %v3013 = vsel %vm2970, %v2015, -inf
        %3014 = vmax.xlane.f32.xlu0 %v3013
        %v3015 = vpop.xlane.xlu0 %3014
        %v3016 = vsel %vm2970, %v2022, -inf
        %3017 = vmax.xlane.f32.xlu0 %v3016
        %v3018 = vpop.xlane.xlu0 %3017
        %vm3019 = vcmask 7168
        %v3020 = vsel %vm3019, %v2042, %v2091
        %v3021 = vsel %vm3019, %v2045, %v2094
        %v3022 = vsel %vm3019, %v2048, %v2097
        %v3023 = vsel %vm3019, %v2051, %v2100
        %v3024 = vsel %vm3019, %v2054, %v2103
        %v3025 = vsel %vm3019, %v2057, %v2106
        %v3026 = vsel %vm3019, %v2060, %v2109
        %v3027 = vsel %vm3019, %v2063, %v2112
        %v3028 = vsel %vm3019, %v2066, %v2115
        %v3029 = vsel %vm3019, %v2069, %v2118
        %v3030 = vsel %vm3019, %v2072, %v2121
        %v3031 = vsel %vm3019, %v2075, %v2124
        %v3032 = vsel %vm3019, %v2078, %v2127
        %v3033 = vsel %vm3019, %v2081, %v2130
        %v3034 = vsel %vm3019, %v2084, %v2133
        %v3035 = vsel %vm3019, %v2087, %v2136
        %vm3036 = vcmask 15360
        %v3037 = vsel %vm3036, %v3020, %v2140
        %v3038 = vsel %vm3036, %v3021, %v2143
        %v3039 = vsel %vm3036, %v3022, %v2146
        %v3040 = vsel %vm3036, %v3023, %v2149
        %v3041 = vsel %vm3036, %v3024, %v2152
        %v3042 = vsel %vm3036, %v3025, %v2155
        %v3043 = vsel %vm3036, %v3026, %v2158
        %v3044 = vsel %vm3036, %v3027, %v2161
        %v3045 = vsel %vm3036, %v3028, %v2164
        %v3046 = vsel %vm3036, %v3029, %v2167
        %v3047 = vsel %vm3036, %v3030, %v2170
        %v3048 = vsel %vm3036, %v3031, %v2173
        %v3049 = vsel %vm3036, %v3032, %v2176
        %v3050 = vsel %vm3036, %v3033, %v2179
        %v3051 = vsel %vm3036, %v3034, %v2182
        %v3052 = vsel %vm3036, %v3035, %v2185
        %v3053 = vsel %vm2039, %v3037, %v2189
        %v3054 = vsel %vm2039, %v3038, %v2192
        %v3055 = vsel %vm2039, %v3039, %v2195
        %v3056 = vsel %vm2039, %v3040, %v2198
        %v3057 = vsel %vm2039, %v3041, %v2201
        %v3058 = vsel %vm2039, %v3042, %v2204
        %v3059 = vsel %vm2039, %v3043, %v2207
        %v3060 = vsel %vm2039, %v3044, %v2210
        %v3061 = vsel %vm2039, %v3045, %v2213
        %v3062 = vsel %vm2039, %v3046, %v2216
        %v3063 = vsel %vm2039, %v3047, %v2219
        %v3064 = vsel %vm2039, %v3048, %v2222
        %v3065 = vsel %vm2039, %v3049, %v2225
        %v3066 = vsel %vm2039, %v3050, %v2228
        %v3067 = vsel %vm2039, %v3051, %v2231
        %v3068 = vsel %vm2039, %v3052, %v2234
        %vm3069 = vcmask 31744
        %v3070 = vsel %vm3069, %v3053, %v2238
        %v3071 = vsel %vm3069, %v3054, %v2241
        %v3072 = vsel %vm3069, %v3055, %v2244
        %v3073 = vsel %vm3069, %v3056, %v2247
        %v3074 = vsel %vm3069, %v3057, %v2250
        %v3075 = vsel %vm3069, %v3058, %v2253
        %v3076 = vsel %vm3069, %v3059, %v2256
        %v3077 = vsel %vm3069, %v3060, %v2259
        %v3078 = vsel %vm3069, %v3061, %v2262
        %v3079 = vsel %vm3069, %v3062, %v2265
        %v3080 = vsel %vm3069, %v3063, %v2268
        %v3081 = vsel %vm3069, %v3064, %v2271
        %v3082 = vsel %vm3069, %v3065, %v2274
        %v3083 = vsel %vm3069, %v3066, %v2277
        %v3084 = vsel %vm3069, %v3067, %v2280
        %v3085 = vsel %vm3069, %v3068, %v2283
        %vm3086 = vcmask 39936
        %v3087 = vsel %vm3086, %v3070, %v2287
        %v3088 = vsel %vm3086, %v3071, %v2290
        %v3089 = vsel %vm3086, %v3072, %v2293
        %v3090 = vsel %vm3086, %v3073, %v2296
        %v3091 = vsel %vm3086, %v3074, %v2299
        %v3092 = vsel %vm3086, %v3075, %v2302
        %v3093 = vsel %vm3086, %v3076, %v2305
        %v3094 = vsel %vm3086, %v3077, %v2308
        %v3095 = vsel %vm3086, %v3078, %v2311
        %v3096 = vsel %vm3086, %v3079, %v2314
        %v3097 = vsel %vm3086, %v3080, %v2317
        %v3098 = vsel %vm3086, %v3081, %v2320
        %v3099 = vsel %vm3086, %v3082, %v2323
        %v3100 = vsel %vm3086, %v3083, %v2326
        %v3101 = vsel %vm3086, %v3084, %v2329
        %v3102 = vsel %vm3086, %v3085, %v2332
        %vm3103 = vcmask 48128
        %v3104 = vsel %vm3103, %v3087, %v2336
        %v3105 = vsel %vm3103, %v3088, %v2339
        %v3106 = vsel %vm3103, %v3089, %v2342
        %v3107 = vsel %vm3103, %v3090, %v2345
        %v3108 = vsel %vm3103, %v3091, %v2348
        %v3109 = vsel %vm3103, %v3092, %v2351
        %v3110 = vsel %vm3103, %v3093, %v2354
        %v3111 = vsel %vm3103, %v3094, %v2357
        %v3112 = vsel %vm3103, %v3095, %v2360
        %v3113 = vsel %vm3103, %v3096, %v2363
        %v3114 = vsel %vm3103, %v3097, %v2366
        %v3115 = vsel %vm3103, %v3098, %v2369
        %v3116 = vsel %vm3103, %v3099, %v2372
        %v3117 = vsel %vm3103, %v3100, %v2375
        %v3118 = vsel %vm3103, %v3101, %v2378
        %v3119 = vsel %vm3103, %v3102, %v2381
        %vm3120 = vcmask 56320
        %v3121 = vsel %vm3120, %v3104, %v2385
        %v3122 = vsel %vm3120, %v3105, %v2388
        %v3123 = vsel %vm3120, %v3106, %v2391
        %v3124 = vsel %vm3120, %v3107, %v2394
        %v3125 = vsel %vm3120, %v3108, %v2397
        %v3126 = vsel %vm3120, %v3109, %v2400
        %v3127 = vsel %vm3120, %v3110, %v2403
        %v3128 = vsel %vm3120, %v3111, %v2406
        %v3129 = vsel %vm3120, %v3112, %v2409
        %v3130 = vsel %vm3120, %v3113, %v2412
        %v3131 = vsel %vm3120, %v3114, %v2415
        %v3132 = vsel %vm3120, %v3115, %v2418
        %v3133 = vsel %vm3120, %v3116, %v2421
        %v3134 = vsel %vm3120, %v3117, %v2424
        %v3135 = vsel %vm3120, %v3118, %v2427
        %v3136 = vsel %vm3120, %v3119, %v2430
        %vm3137 = vcmask 64512
        %v3138 = vsel %vm3137, %v3121, %v2434
        %v3139 = vsel %vm3137, %v3122, %v2437
        %v3140 = vsel %vm3137, %v3123, %v2440
        %v3141 = vsel %vm3137, %v3124, %v2443
        %v3142 = vsel %vm3137, %v3125, %v2446
        %v3143 = vsel %vm3137, %v3126, %v2449
        %v3144 = vsel %vm3137, %v3127, %v2452
        %v3145 = vsel %vm3137, %v3128, %v2455
        %v3146 = vsel %vm3137, %v3129, %v2458
        %v3147 = vsel %vm3137, %v3130, %v2461
        %v3148 = vsel %vm3137, %v3131, %v2464
        %v3149 = vsel %vm3137, %v3132, %v2467
        %v3150 = vsel %vm3137, %v3133, %v2470
        %v3151 = vsel %vm3137, %v3134, %v2473
        %v3152 = vsel %vm3137, %v3135, %v2476
        %v3153 = vsel %vm3137, %v3136, %v2479
        %vm3154 = vcmask 72704
        %v3155 = vsel %vm3154, %v3138, %v2483
        %v3156 = vsel %vm3154, %v3139, %v2486
        %v3157 = vsel %vm3154, %v3140, %v2489
        %v3158 = vsel %vm3154, %v3141, %v2492
        %v3159 = vsel %vm3154, %v3142, %v2495
        %v3160 = vsel %vm3154, %v3143, %v2498
        %v3161 = vsel %vm3154, %v3144, %v2501
        %v3162 = vsel %vm3154, %v3145, %v2504
        %v3163 = vsel %vm3154, %v3146, %v2507
        %v3164 = vsel %vm3154, %v3147, %v2510
        %v3165 = vsel %vm3154, %v3148, %v2513
        %v3166 = vsel %vm3154, %v3149, %v2516
        %v3167 = vsel %vm3154, %v3150, %v2519
        %v3168 = vsel %vm3154, %v3151, %v2522
        %v3169 = vsel %vm3154, %v3152, %v2525
        %v3170 = vsel %vm3154, %v3153, %v2528
        %vm3171 = vcmask 80896
        %v3172 = vsel %vm3171, %v3155, %v2532
        %v3173 = vsel %vm3171, %v3156, %v2535
        %v3174 = vsel %vm3171, %v3157, %v2538
        %v3175 = vsel %vm3171, %v3158, %v2541
        %v3176 = vsel %vm3171, %v3159, %v2544
        %v3177 = vsel %vm3171, %v3160, %v2547
        %v3178 = vsel %vm3171, %v3161, %v2550
        %v3179 = vsel %vm3171, %v3162, %v2553
        %v3180 = vsel %vm3171, %v3163, %v2556
        %v3181 = vsel %vm3171, %v3164, %v2559
        %v3182 = vsel %vm3171, %v3165, %v2562
        %v3183 = vsel %vm3171, %v3166, %v2565
        %v3184 = vsel %vm3171, %v3167, %v2568
        %v3185 = vsel %vm3171, %v3168, %v2571
        %v3186 = vsel %vm3171, %v3169, %v2574
        %v3187 = vsel %vm3171, %v3170, %v2577
        %vm3188 = vcmask 89088
        %v3189 = vsel %vm3188, %v3172, %v2581
        %v3190 = vsel %vm3188, %v3173, %v2584
        %v3191 = vsel %vm3188, %v3174, %v2587
        %v3192 = vsel %vm3188, %v3175, %v2590
        %v3193 = vsel %vm3188, %v3176, %v2593
        %v3194 = vsel %vm3188, %v3177, %v2596
        %v3195 = vsel %vm3188, %v3178, %v2599
        %v3196 = vsel %vm3188, %v3179, %v2602
        %v3197 = vsel %vm3188, %v3180, %v2605
        %v3198 = vsel %vm3188, %v3181, %v2608
        %v3199 = vsel %vm3188, %v3182, %v2611
        %v3200 = vsel %vm3188, %v3183, %v2614
        %v3201 = vsel %vm3188, %v3184, %v2617
        %v3202 = vsel %vm3188, %v3185, %v2620
        %v3203 = vsel %vm3188, %v3186, %v2623
        %v3204 = vsel %vm3188, %v3187, %v2626
        %vm3205 = vcmask 97280
        %v3206 = vsel %vm3205, %v3189, %v2630
        %v3207 = vsel %vm3205, %v3190, %v2633
        %v3208 = vsel %vm3205, %v3191, %v2636
        %v3209 = vsel %vm3205, %v3192, %v2639
        %v3210 = vsel %vm3205, %v3193, %v2642
        %v3211 = vsel %vm3205, %v3194, %v2645
        %v3212 = vsel %vm3205, %v3195, %v2648
        %v3213 = vsel %vm3205, %v3196, %v2651
        %v3214 = vsel %vm3205, %v3197, %v2654
        %v3215 = vsel %vm3205, %v3198, %v2657
        %v3216 = vsel %vm3205, %v3199, %v2660
        %v3217 = vsel %vm3205, %v3200, %v2663
        %v3218 = vsel %vm3205, %v3201, %v2666
        %v3219 = vsel %vm3205, %v3202, %v2669
        %v3220 = vsel %vm3205, %v3203, %v2672
        %v3221 = vsel %vm3205, %v3204, %v2675
        %vm3222 = vcmask 105472
        %v3223 = vsel %vm3222, %v3206, %v2679
        %v3224 = vsel %vm3222, %v3207, %v2682
        %v3225 = vsel %vm3222, %v3208, %v2685
        %v3226 = vsel %vm3222, %v3209, %v2688
        %v3227 = vsel %vm3222, %v3210, %v2691
        %v3228 = vsel %vm3222, %v3211, %v2694
        %v3229 = vsel %vm3222, %v3212, %v2697
        %v3230 = vsel %vm3222, %v3213, %v2700
        %v3231 = vsel %vm3222, %v3214, %v2703
        %v3232 = vsel %vm3222, %v3215, %v2706
        %v3233 = vsel %vm3222, %v3216, %v2709
        %v3234 = vsel %vm3222, %v3217, %v2712
        %v3235 = vsel %vm3222, %v3218, %v2715
        %v3236 = vsel %vm3222, %v3219, %v2718
        %v3237 = vsel %vm3222, %v3220, %v2721
        %v3238 = vsel %vm3222, %v3221, %v2724
        %vm3239 = vcmask 113664
        %v3240 = vsel %vm3239, %v3223, %v2728
        %v3241 = vsel %vm3239, %v3224, %v2731
        %v3242 = vsel %vm3239, %v3225, %v2734
        %v3243 = vsel %vm3239, %v3226, %v2737
        %v3244 = vsel %vm3239, %v3227, %v2740
        %v3245 = vsel %vm3239, %v3228, %v2743
        %v3246 = vsel %vm3239, %v3229, %v2746
        %v3247 = vsel %vm3239, %v3230, %v2749
        %v3248 = vsel %vm3239, %v3231, %v2752
        %v3249 = vsel %vm3239, %v3232, %v2755
        %v3250 = vsel %vm3239, %v3233, %v2758
        %v3251 = vsel %vm3239, %v3234, %v2761
        %v3252 = vsel %vm3239, %v3235, %v2764
        %v3253 = vsel %vm3239, %v3236, %v2767
        %v3254 = vsel %vm3239, %v3237, %v2770
        %v3255 = vsel %vm3239, %v3238, %v2773
        %vm3256 = vcmask 121856
        %v3257 = vsel %vm3256, %v3240, %v2777
        %v3258 = vsel %vm3256, %v3241, %v2780
        %v3259 = vsel %vm3256, %v3242, %v2783
        %v3260 = vsel %vm3256, %v3243, %v2786
        %v3261 = vsel %vm3256, %v3244, %v2789
        %v3262 = vsel %vm3256, %v3245, %v2792
        %v3263 = vsel %vm3256, %v3246, %v2795
        %v3264 = vsel %vm3256, %v3247, %v2798
        %v3265 = vsel %vm3256, %v3248, %v2801
        %v3266 = vsel %vm3256, %v3249, %v2804
        %v3267 = vsel %vm3256, %v3250, %v2807
        %v3268 = vsel %vm3256, %v3251, %v2810
        %v3269 = vsel %vm3256, %v3252, %v2813
        %v3270 = vsel %vm3256, %v3253, %v2816
        %v3271 = vsel %vm3256, %v3254, %v2819
        %v3272 = vsel %vm3256, %v3255, %v2822
        %v3273 = vsel %vm3019, %v2826, %v2875
        %v3274 = vsel %vm3019, %v2829, %v2878
        %v3275 = vsel %vm3019, %v2832, %v2881
        %v3276 = vsel %vm3019, %v2835, %v2884
        %v3277 = vsel %vm3019, %v2838, %v2887
        %v3278 = vsel %vm3019, %v2841, %v2890
        %v3279 = vsel %vm3019, %v2844, %v2893
        %v3280 = vsel %vm3019, %v2847, %v2896
        %v3281 = vsel %vm3019, %v2850, %v2899
        %v3282 = vsel %vm3019, %v2853, %v2902
        %v3283 = vsel %vm3019, %v2856, %v2905
        %v3284 = vsel %vm3019, %v2859, %v2908
        %v3285 = vsel %vm3019, %v2862, %v2911
        %v3286 = vsel %vm3019, %v2865, %v2914
        %v3287 = vsel %vm3019, %v2868, %v2917
        %v3288 = vsel %vm3019, %v2871, %v2920
        %v3289 = vsel %vm3036, %v3273, %v2924
        %v3290 = vsel %vm3036, %v3274, %v2927
        %v3291 = vsel %vm3036, %v3275, %v2930
        %v3292 = vsel %vm3036, %v3276, %v2933
        %v3293 = vsel %vm3036, %v3277, %v2936
        %v3294 = vsel %vm3036, %v3278, %v2939
        %v3295 = vsel %vm3036, %v3279, %v2942
        %v3296 = vsel %vm3036, %v3280, %v2945
        %v3297 = vsel %vm3036, %v3281, %v2948
        %v3298 = vsel %vm3036, %v3282, %v2951
        %v3299 = vsel %vm3036, %v3283, %v2954
        %v3300 = vsel %vm3036, %v3284, %v2957
        %v3301 = vsel %vm3036, %v3285, %v2960
        %v3302 = vsel %vm3036, %v3286, %v2963
        %v3303 = vsel %vm3036, %v3287, %v2966
        %v3304 = vsel %vm3036, %v3288, %v2969
        %v3305 = vsel %vm2039, %v3289, %v2973
        %v3306 = vsel %vm2039, %v3290, %v2976
        %v3307 = vsel %vm2039, %v3291, %v2979
        %v3308 = vsel %vm2039, %v3292, %v2982
        %v3309 = vsel %vm2039, %v3293, %v2985
        %v3310 = vsel %vm2039, %v3294, %v2988
        %v3311 = vsel %vm2039, %v3295, %v2991
        %v3312 = vsel %vm2039, %v3296, %v2994
        %v3313 = vsel %vm2039, %v3297, %v2997
        %v3314 = vsel %vm2039, %v3298, %v3000
        %v3315 = vsel %vm2039, %v3299, %v3003
        %v3316 = vsel %vm2039, %v3300, %v3006
        %v3317 = vsel %vm2039, %v3301, %v3009
        %v3318 = vsel %vm2039, %v3302, %v3012
        %v3319 = vsel %vm2039, %v3303, %v3015
        %v3320 = vsel %vm2039, %v3304, %v3018
        %3337 = vrot.lane.b32.xlu0 %v3305, 16
        %v3338 = vpop.permute.xlu0 %3337
        %3339 = vrot.lane.b32.xlu0 %v3306, 16
        %v3340 = vpop.permute.xlu0 %3339
        %3341 = vrot.lane.b32.xlu0 %v3307, 16
        %v3342 = vpop.permute.xlu0 %3341
        %3343 = vrot.lane.b32.xlu0 %v3308, 16
        %v3344 = vpop.permute.xlu0 %3343
        %3345 = vrot.lane.b32.xlu0 %v3309, 16
        %v3346 = vpop.permute.xlu0 %3345
        %3347 = vrot.lane.b32.xlu0 %v3310, 16
        %v3348 = vpop.permute.xlu0 %3347
        %3349 = vrot.lane.b32.xlu0 %v3311, 16
        %v3350 = vpop.permute.xlu0 %3349
        %3351 = vrot.lane.b32.xlu0 %v3312, 16
        %v3352 = vpop.permute.xlu0 %3351
        %3353 = vrot.lane.b32.xlu0 %v3313, 16
        %v3354 = vpop.permute.xlu0 %3353
        %3355 = vrot.lane.b32.xlu0 %v3314, 16
        %v3356 = vpop.permute.xlu0 %3355
        %3357 = vrot.lane.b32.xlu0 %v3315, 16
        %v3358 = vpop.permute.xlu0 %3357
        %3359 = vrot.lane.b32.xlu0 %v3316, 16
        %v3360 = vpop.permute.xlu0 %3359
        %3361 = vrot.lane.b32.xlu0 %v3317, 16
        %v3362 = vpop.permute.xlu0 %3361
        %3363 = vrot.lane.b32.xlu0 %v3318, 16
        %v3364 = vpop.permute.xlu0 %3363
        %3365 = vrot.lane.b32.xlu0 %v3319, 16
        %v3366 = vpop.permute.xlu0 %3365
        %3367 = vrot.lane.b32.xlu0 %v3320, 16
        %v3368 = vpop.permute.xlu0 %3367
        %vm3385 = vcmask 130048
        %v3386 = vsel %vm3385, %v3257, %v3338
        %v3387 = vsel %vm3385, %v3258, %v3340
        %v3388 = vsel %vm3385, %v3259, %v3342
        %v3389 = vsel %vm3385, %v3260, %v3344
        %v3390 = vsel %vm3385, %v3261, %v3346
        %v3391 = vsel %vm3385, %v3262, %v3348
        %v3392 = vsel %vm3385, %v3263, %v3350
        %v3393 = vsel %vm3385, %v3264, %v3352
        %v3394 = vsel %vm3385, %v3265, %v3354
        %v3395 = vsel %vm3385, %v3266, %v3356
        %v3396 = vsel %vm3385, %v3267, %v3358
        %v3397 = vsel %vm3385, %v3268, %v3360
        %v3398 = vsel %vm3385, %v3269, %v3362
        %v3399 = vsel %vm3385, %v3270, %v3364
        %v3400 = vsel %vm3385, %v3271, %v3366
        %v3401 = vsel %vm3385, %v3272, %v3368
        %3402 = vxpose.xlu0.b32.start [1/16] %v3386, 128
        %3403 = vxpose.xlu0.b32.cont [2/16] %v3387, 128
        %3404 = vxpose.xlu0.b32.cont [3/16] %v3388, 128
        %3405 = vxpose.xlu0.b32.cont [4/16] %v3389, 128
        %3406 = vxpose.xlu0.b32.cont [5/16] 0.0, 128
        %3407 = vxpose.xlu0.b32.cont [6/16] 0.0, 128
        %3408 = vxpose.xlu0.b32.cont [7/16] 0.0, 128
        %3409 = vxpose.xlu0.b32.cont [8/16] 0.0, 128
        %3410 = vxpose.xlu0.b32.cont [9/16] 0.0, 128
        %3411 = vxpose.xlu0.b32.cont [10/16] 0.0, 128
        %3412 = vxpose.xlu0.b32.cont [11/16] 0.0, 128
        %3413 = vxpose.xlu0.b32.cont [12/16] 0.0, 128
        %3414 = vxpose.xlu0.b32.cont [13/16] 0.0, 128
        %3415 = vxpose.xlu0.b32.cont [14/16] 0.0, 128
        %3416 = vxpose.xlu0.b32.cont [15/16] 0.0, 128
        %3417 = vxpose.xlu0.b32.end [16/16] 0.0, 128
        %v3418 = vpop.trf.xlu0
        %v3419 = vpop.trf.xlu0
        %v3420 = vpop.trf.xlu0
        %v3421 = vpop.trf.xlu0
        %v3422 = vpop.trf.xlu0
        %v3423 = vpop.trf.xlu0
        %v3424 = vpop.trf.xlu0
        %v3425 = vpop.trf.xlu0
        %v3426 = vpop.trf.xlu0
        %v3427 = vpop.trf.xlu0
        %v3428 = vpop.trf.xlu0
        %v3429 = vpop.trf.xlu0
        %v3430 = vpop.trf.xlu0
        %v3431 = vpop.trf.xlu0
        %v3432 = vpop.trf.xlu0
        %v3433 = vpop.trf.xlu0
        %3434 = vxpose.xlu0.b32.start [1/16] %v3390, 128
        %3435 = vxpose.xlu0.b32.cont [2/16] %v3391, 128
        %3436 = vxpose.xlu0.b32.cont [3/16] %v3392, 128
        %3437 = vxpose.xlu0.b32.cont [4/16] %v3393, 128
        %3438 = vxpose.xlu0.b32.cont [5/16] 0.0, 128
        %3439 = vxpose.xlu0.b32.cont [6/16] 0.0, 128
        %3440 = vxpose.xlu0.b32.cont [7/16] 0.0, 128
        %3441 = vxpose.xlu0.b32.cont [8/16] 0.0, 128
        %3442 = vxpose.xlu0.b32.cont [9/16] 0.0, 128
        %3443 = vxpose.xlu0.b32.cont [10/16] 0.0, 128
        %3444 = vxpose.xlu0.b32.cont [11/16] 0.0, 128
        %3445 = vxpose.xlu0.b32.cont [12/16] 0.0, 128
        %3446 = vxpose.xlu0.b32.cont [13/16] 0.0, 128
        %3447 = vxpose.xlu0.b32.cont [14/16] 0.0, 128
        %3448 = vxpose.xlu0.b32.cont [15/16] 0.0, 128
        %3449 = vxpose.xlu0.b32.end [16/16] 0.0, 128
        %v3450 = vpop.trf.xlu0
        %v3451 = vpop.trf.xlu0
        %v3452 = vpop.trf.xlu0
        %v3453 = vpop.trf.xlu0
        %v3454 = vpop.trf.xlu0
        %v3455 = vpop.trf.xlu0
        %v3456 = vpop.trf.xlu0
        %v3457 = vpop.trf.xlu0
        %v3458 = vpop.trf.xlu0
        %v3459 = vpop.trf.xlu0
        %v3460 = vpop.trf.xlu0
        %v3461 = vpop.trf.xlu0
        %v3462 = vpop.trf.xlu0
        %v3463 = vpop.trf.xlu0
        %v3464 = vpop.trf.xlu0
        %v3465 = vpop.trf.xlu0
        %3466 = vxpose.xlu0.b32.start [1/16] %v3394, 128
        %3467 = vxpose.xlu0.b32.cont [2/16] %v3395, 128
        %3468 = vxpose.xlu0.b32.cont [3/16] %v3396, 128
        %3469 = vxpose.xlu0.b32.cont [4/16] %v3397, 128
        %3470 = vxpose.xlu0.b32.cont [5/16] 0.0, 128
        %3471 = vxpose.xlu0.b32.cont [6/16] 0.0, 128
        %3472 = vxpose.xlu0.b32.cont [7/16] 0.0, 128
        %3473 = vxpose.xlu0.b32.cont [8/16] 0.0, 128
        %3474 = vxpose.xlu0.b32.cont [9/16] 0.0, 128
        %3475 = vxpose.xlu0.b32.cont [10/16] 0.0, 128
        %3476 = vxpose.xlu0.b32.cont [11/16] 0.0, 128
        %3477 = vxpose.xlu0.b32.cont [12/16] 0.0, 128
        %3478 = vxpose.xlu0.b32.cont [13/16] 0.0, 128
        %3479 = vxpose.xlu0.b32.cont [14/16] 0.0, 128
        %3480 = vxpose.xlu0.b32.cont [15/16] 0.0, 128
        %3481 = vxpose.xlu0.b32.end [16/16] 0.0, 128
        %v3482 = vpop.trf.xlu0
        %v3483 = vpop.trf.xlu0
        %v3484 = vpop.trf.xlu0
        %v3485 = vpop.trf.xlu0
        %v3486 = vpop.trf.xlu0
        %v3487 = vpop.trf.xlu0
        %v3488 = vpop.trf.xlu0
        %v3489 = vpop.trf.xlu0
        %v3490 = vpop.trf.xlu0
        %v3491 = vpop.trf.xlu0
        %v3492 = vpop.trf.xlu0
        %v3493 = vpop.trf.xlu0
        %v3494 = vpop.trf.xlu0
        %v3495 = vpop.trf.xlu0
        %v3496 = vpop.trf.xlu0
        %v3497 = vpop.trf.xlu0
        %3498 = vxpose.xlu0.b32.start [1/16] %v3398, 128
        %3499 = vxpose.xlu0.b32.cont [2/16] %v3399, 128
        %3500 = vxpose.xlu0.b32.cont [3/16] %v3400, 128
        %3501 = vxpose.xlu0.b32.cont [4/16] %v3401, 128
        %3502 = vxpose.xlu0.b32.cont [5/16] 0.0, 128
        %3503 = vxpose.xlu0.b32.cont [6/16] 0.0, 128
        %3504 = vxpose.xlu0.b32.cont [7/16] 0.0, 128
        %3505 = vxpose.xlu0.b32.cont [8/16] 0.0, 128
        %3506 = vxpose.xlu0.b32.cont [9/16] 0.0, 128
        %3507 = vxpose.xlu0.b32.cont [10/16] 0.0, 128
        %3508 = vxpose.xlu0.b32.cont [11/16] 0.0, 128
        %3509 = vxpose.xlu0.b32.cont [12/16] 0.0, 128
        %3510 = vxpose.xlu0.b32.cont [13/16] 0.0, 128
        %3511 = vxpose.xlu0.b32.cont [14/16] 0.0, 128
        %3512 = vxpose.xlu0.b32.cont [15/16] 0.0, 128
        %3513 = vxpose.xlu0.b32.end [16/16] 0.0, 128
        %v3514 = vpop.trf.xlu0
        %v3515 = vpop.trf.xlu0
        %v3516 = vpop.trf.xlu0
        %v3517 = vpop.trf.xlu0
        %v3518 = vpop.trf.xlu0
        %v3519 = vpop.trf.xlu0
        %v3520 = vpop.trf.xlu0
        %v3521 = vpop.trf.xlu0
        %v3522 = vpop.trf.xlu0
        %v3523 = vpop.trf.xlu0
        %v3524 = vpop.trf.xlu0
        %v3525 = vpop.trf.xlu0
        %v3526 = vpop.trf.xlu0
        %v3527 = vpop.trf.xlu0
        %v3528 = vpop.trf.xlu0
        %v3529 = vpop.trf.xlu0
        %vm3542 = vcmask 1040384
        %v3543 = vrot.slane %v3418, 7
        %v3544 = vrot.slane %v3419, 7
        %v3545 = vsel %vm3542, %v3543, %v3544
        %v3546 = vrot.slane %v3420, 7
        %v3547 = vsel %vm3542, %v3544, %v3546
        %v3548 = vrot.slane %v3450, 7
        %v3549 = vrot.slane %v3451, 7
        %v3550 = vsel %vm3542, %v3548, %v3549
        %v3551 = vrot.slane %v3452, 7
        %v3552 = vsel %vm3542, %v3549, %v3551
        %v3553 = vrot.slane %v3482, 7
        %v3554 = vrot.slane %v3483, 7
        %v3555 = vsel %vm3542, %v3553, %v3554
        %v3556 = vrot.slane %v3484, 7
        %v3557 = vsel %vm3542, %v3554, %v3556
        %v3558 = vrot.slane %v3514, 7
        %v3559 = vrot.slane %v3515, 7
        %v3560 = vsel %vm3542, %v3558, %v3559
        %v3561 = vrot.slane %v3516, 7
        %v3562 = vsel %vm3542, %v3559, %v3561
        %v3575 = vsel %vm3542, 0.0, %v3543
        %v3576 = vsel %vm3542, 0.0, %v3548
        %v3577 = vsel %vm3542, 0.0, %v3553
        %v3578 = vsel %vm3542, 0.0, %v3558
        %vm3579 = vcmask 1044480
        %v3580 = vsel %vm3579, %v3547, 0.0
        %v3581 = vsel %vm3579, %v3552, 0.0
        %v3582 = vsel %vm3579, %v3557, 0.0
        %v3583 = vsel %vm3579, %v3562, 0.0
        %vm3592 = vcmask 1046528
        %v3593 = vrot.slane %v3575, 1
        %v3594 = vrot.slane %v3545, 1
        %v3595 = vsel %vm3592, %v3593, %v3594
        %v3596 = vrot.slane %v3580, 1
        %v3597 = vsel %vm3592, %v3594, %v3596
        %v3598 = vrot.slane %v3576, 1
        %v3599 = vrot.slane %v3550, 1
        %v3600 = vsel %vm3592, %v3598, %v3599
        %v3601 = vrot.slane %v3581, 1
        %v3602 = vsel %vm3592, %v3599, %v3601
        %v3603 = vrot.slane %v3577, 1
        %v3604 = vrot.slane %v3555, 1
        %v3605 = vsel %vm3592, %v3603, %v3604
        %v3606 = vrot.slane %v3582, 1
        %v3607 = vsel %vm3592, %v3604, %v3606
        %v3608 = vrot.slane %v3578, 1
        %v3609 = vrot.slane %v3560, 1
        %v3610 = vsel %vm3592, %v3608, %v3609
        %v3611 = vrot.slane %v3583, 1
        %v3612 = vsel %vm3592, %v3609, %v3611
        %3613 = vrot.lane.b32.xlu0 %v3595, 32
        %v3614 = vpop.permute.xlu0 %3613
        %3615 = vrot.lane.b32.xlu0 %v3597, 32
        %v3616 = vpop.permute.xlu0 %3615
        %3617 = vrot.lane.b32.xlu0 %v3596, 32
        %v3618 = vpop.permute.xlu0 %3617
        %3619 = vrot.lane.b32.xlu0 %v3600, 32
        %v3620 = vpop.permute.xlu0 %3619
        %3621 = vrot.lane.b32.xlu0 %v3602, 32
        %v3622 = vpop.permute.xlu0 %3621
        %3623 = vrot.lane.b32.xlu0 %v3601, 32
        %v3624 = vpop.permute.xlu0 %3623
        %3625 = vrot.lane.b32.xlu0 %v3605, 32
        %v3626 = vpop.permute.xlu0 %3625
        %3627 = vrot.lane.b32.xlu0 %v3607, 32
        %v3628 = vpop.permute.xlu0 %3627
        %3629 = vrot.lane.b32.xlu0 %v3606, 32
        %v3630 = vpop.permute.xlu0 %3629
        %3631 = vrot.lane.b32.xlu0 %v3610, 32
        %v3632 = vpop.permute.xlu0 %3631
        %3633 = vrot.lane.b32.xlu0 %v3612, 32
        %v3634 = vpop.permute.xlu0 %3633
        %3635 = vrot.lane.b32.xlu0 %v3611, 32
        %v3636 = vpop.permute.xlu0 %3635
        %vm3649 = vcmask 1045504
        %v3650 = vrot.slane %v3575, 2
        %v3651 = vrot.slane %v3545, 2
        %v3652 = vsel %vm3649, %v3650, %v3651
        %v3653 = vrot.slane %v3580, 2
        %v3654 = vsel %vm3649, %v3651, %v3653
        %v3655 = vrot.slane %v3576, 2
        %v3656 = vrot.slane %v3550, 2
        %v3657 = vsel %vm3649, %v3655, %v3656
        %v3658 = vrot.slane %v3581, 2
        %v3659 = vsel %vm3649, %v3656, %v3658
        %v3660 = vrot.slane %v3577, 2
        %v3661 = vrot.slane %v3555, 2
        %v3662 = vsel %vm3649, %v3660, %v3661
        %v3663 = vrot.slane %v3582, 2
        %v3664 = vsel %vm3649, %v3661, %v3663
        %v3665 = vrot.slane %v3578, 2
        %v3666 = vrot.slane %v3560, 2
        %v3667 = vsel %vm3649, %v3665, %v3666
        %v3668 = vrot.slane %v3583, 2
        %v3669 = vsel %vm3649, %v3666, %v3668
        %3670 = vrot.lane.b32.xlu0 %v3652, 64
        %v3671 = vpop.permute.xlu0 %3670
        %3672 = vrot.lane.b32.xlu0 %v3654, 64
        %v3673 = vpop.permute.xlu0 %3672
        %3674 = vrot.lane.b32.xlu0 %v3653, 64
        %v3675 = vpop.permute.xlu0 %3674
        %3676 = vrot.lane.b32.xlu0 %v3657, 64
        %v3677 = vpop.permute.xlu0 %3676
        %3678 = vrot.lane.b32.xlu0 %v3659, 64
        %v3679 = vpop.permute.xlu0 %3678
        %3680 = vrot.lane.b32.xlu0 %v3658, 64
        %v3681 = vpop.permute.xlu0 %3680
        %3682 = vrot.lane.b32.xlu0 %v3662, 64
        %v3683 = vpop.permute.xlu0 %3682
        %3684 = vrot.lane.b32.xlu0 %v3664, 64
        %v3685 = vpop.permute.xlu0 %3684
        %3686 = vrot.lane.b32.xlu0 %v3663, 64
        %v3687 = vpop.permute.xlu0 %3686
        %3688 = vrot.lane.b32.xlu0 %v3667, 64
        %v3689 = vpop.permute.xlu0 %3688
        %3690 = vrot.lane.b32.xlu0 %v3669, 64
        %v3691 = vpop.permute.xlu0 %3690
        %3692 = vrot.lane.b32.xlu0 %v3668, 64
        %v3693 = vpop.permute.xlu0 %3692
        %vm3706 = vcmask 261120
        %v3707 = vsel %vm3706, %v3575, %v3614
        %v3708 = vsel %vm3706, %v3545, %v3616
        %v3709 = vsel %vm3706, %v3580, %v3618
        %v3710 = vsel %vm3706, %v3576, %v3620
        %v3711 = vsel %vm3706, %v3550, %v3622
        %v3712 = vsel %vm3706, %v3581, %v3624
        %v3713 = vsel %vm3706, %v3577, %v3626
        %v3714 = vsel %vm3706, %v3555, %v3628
        %v3715 = vsel %vm3706, %v3582, %v3630
        %v3716 = vsel %vm3706, %v3578, %v3632
        %v3717 = vsel %vm3706, %v3560, %v3634
        %v3718 = vsel %vm3706, %v3583, %v3636
        %vm3719 = vcmask 523264
        %v3720 = vsel %vm3719, %v3707, %v3671
        %v3721 = vsel %vm3719, %v3708, %v3673
        %v3722 = vsel %vm3719, %v3709, %v3675
        %v3723 = vsel %vm3719, %v3710, %v3677
        %v3724 = vsel %vm3719, %v3711, %v3679
        %v3725 = vsel %vm3719, %v3712, %v3681
        %v3726 = vsel %vm3719, %v3713, %v3683
        %v3727 = vsel %vm3719, %v3714, %v3685
        %v3728 = vsel %vm3719, %v3715, %v3687
        %v3729 = vsel %vm3719, %v3716, %v3689
        %v3730 = vsel %vm3719, %v3717, %v3691
        %v3731 = vsel %vm3719, %v3718, %v3693
        %v3744 = vcombine.high %v3720, %v3720
        %v3745 = vcombine.high %v3721, %v3721
        %v3746 = vcombine.high %v3723, %v3723
        %v3747 = vcombine.high %v3724, %v3724
        %v3748 = vcombine.high %v3726, %v3726
        %v3749 = vcombine.high %v3727, %v3727
        %v3750 = vcombine.high %v3729, %v3729
        %v3751 = vcombine.high %v3730, %v3730
        %v3752 = vld [vmem:[%s1] sm:$0xff]
        %v3753 = vld [vmem:[%s1 + $0x8] sm:$0xff]
        %v3754 = vld [vmem:[%s1 + $0x10] sm:$0xff]
        %v3755 = vld [vmem:[%s1 + $0x18] sm:$0xff]
        %v3756 = vld [vmem:[%s1 + $0x20] sm:$0xff]
        %v3757 = vld [vmem:[%s1 + $0x28] sm:$0xff]
        %v3758 = vld [vmem:[%s1 + $0x30] sm:$0xff]
        %v3759 = vld [vmem:[%s1 + $0x38] sm:$0xff]
        %v3760 = vld [vmem:[%s1 + $0x40] sm:$0xff]
        %v3761 = vld [vmem:[%s1 + $0x48] sm:$0xff]
        %v3762 = vld [vmem:[%s1 + $0x50] sm:$0xff]
        %v3763 = vld [vmem:[%s1 + $0x58] sm:$0xff]
        %v3764 = vcombine.low %v3720, %v3744
        %v3765 = vcombine.low %v3721, %v3745
        %v3766 = vcombine.low %v3722, %v3723
        %v3767 = vcombine.low %v3746, %v3724
        %v3768 = vcombine.low %v3747, %v3725
        %v3769 = vcombine.low %v3726, %v3748
        %v3770 = vcombine.low %v3727, %v3749
        %v3771 = vcombine.low %v3728, %v3729
        %v3772 = vcombine.low %v3750, %v3730
        %v3773 = vcombine.low %v3751, %v3731
        %vm3774 = vcmask 785408
        %v3775 = vsel %vm3774, %v3764, 0
        %v3777 = vsel %vm3774, %v3765, 0
        %v3779 = vsel %vm3774, %v3766, 0
        %v3781 = vsel %vm3774, %v3767, 0
        %v3783 = vsel %vm3774, %v3768, 0
        %v3785 = vsel %vm3774, %v3769, 0
        %v3787 = vsel %vm3774, %v3770, 0
        %v3789 = vsel %vm3774, %v3771, 0
        %v3791 = vsel %vm3774, %v3772, 0
        %v3793 = vsel %vm3774, %v3773, 0
        %3795 = vmatprep.subr.mxu0 0.0
        %3796 = vmatpush1.msra.mxu0 %v3752
        %3797 = vmatprep.subr.mxu0 0.0
        %3798 = vmatpush1.msra.mxu0 %v3753
        %3799 = vmatprep.subr.mxu0 0.0
        %3800 = vmatpush1.msra.mxu0 %v3754
        %3801 = vmatprep.subr.mxu0 0.0
        %3802 = vmatpush1.msra.mxu0 %v3755
        %3803 = vmatprep.subr.mxu0 0.0
        %3804 = vmatpush1.msra.mxu0 %v3756
        %3805 = vmatprep.subr.mxu0 0.0
        %3806 = vmatpush1.msra.mxu0 %v3757
        %3807 = vmatprep.subr.mxu0 0.0
        %3808 = vmatpush1.msra.mxu0 %v3758
        %3809 = vmatprep.subr.mxu0 0.0
        %3810 = vmatpush1.msra.mxu0 %v3759
        %3811 = vmatprep.subr.mxu0 0.0
        %3812 = vmatpush1.msra.mxu0 %v3760
        %3813 = vmatprep.subr.mxu0 0.0
        %3814 = vmatpush1.msra.mxu0 %v3761
        %3815 = vmatprep.subr.mxu0 0.0
        %3816 = vmatpush1.msra.mxu0 %v3762
        %3817 = vmatprep.subr.mxu0 0.0
        %3818 = vmatpush1.msra.mxu0 %v3763
        %3819 = vmatprep.subr.mxu0 0.0
        %3820 = vmatpush1.msra.mxu0 0.0
        %3821 = vmatprep.subr.mxu0 0.0
        %3822 = vmatpush1.msra.mxu0 0.0
        %3823 = vmatprep.subr.mxu0 0.0
        %3824 = vmatpush1.msra.mxu0 0.0
        %3825 = vmatprep.subr.mxu0 0.0
        %3826 = vmatpush1.msra.mxu0 0.0
        %3827 = vmatprep.subr.mxu0 0.0
        %3828 = vmatpush1.msra.mxu0 0.0
        %3829 = vmatprep.subr.mxu0 0.0
        %3830 = vmatpush1.msra.mxu0 0.0
        %3831 = vmatprep.subr.mxu0 0.0
        %3832 = vmatpush1.msra.mxu0 0.0
        %3833 = vmatprep.subr.mxu0 0.0
        %3834 = vmatpush1.msra.mxu0 0.0
        %3835 = vmatprep.subr.mxu0 0.0
        %3836 = vmatpush1.msra.mxu0 0.0
        %3837 = vmatprep.subr.mxu0 0.0
        %3838 = vmatpush1.msra.mxu0 0.0
        %3839 = vmatprep.subr.mxu0 0.0
        %3840 = vmatpush1.msra.mxu0 0.0
        %3841 = vmatprep.subr.mxu0 0.0
        %3842 = vmatpush1.msra.mxu0 0.0
        %3843 = vmatprep.subr.mxu0 0.0
        %3844 = vmatpush1.msra.mxu0 0.0
        %3845 = vmatprep.subr.mxu0 0.0
        %3846 = vmatpush1.msra.mxu0 0.0
        %3847 = vmatprep.subr.mxu0 0.0
        %3848 = vmatpush1.msra.mxu0 0.0
        %3849 = vmatprep.subr.mxu0 0.0
        %3850 = vmatpush1.msra.mxu0 0.0
        %3851 = vmatprep.subr.mxu0 0.0
        %3852 = vmatpush1.msra.mxu0 0.0
        %3853 = vmatprep.subr.mxu0 0.0
        %3854 = vmatpush1.msra.mxu0 0.0
        %3855 = vmatprep.subr.mxu0 0.0
        %3856 = vmatpush1.msra.mxu0 0.0
        %3857 = vmatprep.subr.mxu0 0.0
        %3858 = vmatpush1.msra.mxu0 0.0
        %3859 = vmatprep.mubr.f32.mxu0 0.0
        %3860 = vmatmul.mubr.f32.gmra.mrb[0].mxu0 %v3775
        %v3861 = vpop.f32.mrb[0].mxu0
        %v3862 = vadd.f32 0.0, %v3861
        %v3863 = vpop.f32.mrb[0].mxu0
        %3864 = vmatprep.mubr.f32.mxu0 0.0
        %3865 = vmatmul.mubr.f32.gmra.mrb[0].mxu0 %v3777
        %v3866 = vpop.f32.mrb[0].mxu0
        %v3867 = vadd.f32 0.0, %v3866
        %v3868 = vpop.f32.mrb[0].mxu0
        %3869 = vmatprep.mubr.f32.mxu0 0.0
        %3870 = vmatmul.mubr.f32.gmra.mrb[0].mxu0 %v3779
        %v3871 = vpop.f32.mrb[0].mxu0
        %v3872 = vadd.f32 0.0, %v3871
        %v3873 = vpop.f32.mrb[0].mxu0
        %3874 = vmatprep.mubr.f32.mxu0 0.0
        %3875 = vmatmul.mubr.f32.gmra.mrb[0].mxu0 %v3781
        %v3876 = vpop.f32.mrb[0].mxu0
        %v3877 = vadd.f32 0.0, %v3876
        %v3878 = vpop.f32.mrb[0].mxu0
        %3879 = vmatprep.mubr.f32.mxu0 0.0
        %3880 = vmatmul.mubr.f32.gmra.mrb[0].mxu0 %v3783
        %v3881 = vpop.f32.mrb[0].mxu0
        %v3882 = vadd.f32 0.0, %v3881
        %v3883 = vpop.f32.mrb[0].mxu0
        %3884 = vmatprep.mubr.f32.mxu0 0.0
        %3885 = vmatmul.mubr.f32.gmra.mrb[0].mxu0 %v3785
        %v3886 = vpop.f32.mrb[0].mxu0
        %v3887 = vadd.f32 0.0, %v3886
        %v3888 = vpop.f32.mrb[0].mxu0
        %3889 = vmatprep.mubr.f32.mxu0 0.0
        %3890 = vmatmul.mubr.f32.gmra.mrb[0].mxu0 %v3787
        %v3891 = vpop.f32.mrb[0].mxu0
        %v3892 = vadd.f32 0.0, %v3891
        %v3893 = vpop.f32.mrb[0].mxu0
        %3894 = vmatprep.mubr.f32.mxu0 0.0
        %3895 = vmatmul.mubr.f32.gmra.mrb[0].mxu0 %v3789
        %v3896 = vpop.f32.mrb[0].mxu0
        %v3897 = vadd.f32 0.0, %v3896
        %v3898 = vpop.f32.mrb[0].mxu0
        %3899 = vmatprep.mubr.f32.mxu0 0.0
        %3900 = vmatmul.mubr.f32.gmra.mrb[0].mxu0 %v3791
        %v3901 = vpop.f32.mrb[0].mxu0
        %v3902 = vadd.f32 0.0, %v3901
        %v3903 = vpop.f32.mrb[0].mxu0
        %3904 = vmatprep.mubr.f32.mxu0 0.0
        %3905 = vmatmul.mubr.f32.gmra.mrb[0].mxu0 %v3793
        %v3906 = vpop.f32.mrb[0].mxu0
        %v3907 = vadd.f32 0.0, %v3906
        %v3908 = vpop.f32.mrb[0].mxu0
        %3909 = vdwg.mxu0
        %v3910 = vld [vmem:[#allocation6] sm:$0x1]
        %v3912 = vlaneseq
        %v3913 = vshrl.u32 %v3912, 7
        %v3914 = vsub.s32 0, %v3913
        %v3915 = vrot.slane %v3910, %v3914
        %v3917 = vmul.f32 %v3862, %v3915
        %v3918 = vmul.f32 %v3867, %v3915
        %v3919 = vmul.f32 %v3872, %v3915
        %v3920 = vmul.f32 %v3877, %v3915
        %v3921 = vmul.f32 %v3882, %v3915
        %v3922 = vmul.f32 %v3887, %v3915
        %v3923 = vmul.f32 %v3892, %v3915
        %v3924 = vmul.f32 %v3897, %v3915
        %v3925 = vmul.f32 %v3902, %v3915
        %v3926 = vmul.f32 %v3907, %v3915
        %v3927 = vld [vmem:[#allocation7] sm:$0x1]
        %v3929 = vlaneseq
        %v3930 = vshrl.u32 %v3929, 7
        %v3931 = vsub.s32 0, %v3930
        %v3932 = vrot.slane %v3927, %v3931
        %v3934 = vadd.f32 %v3917, %v3932
        %v3935 = vadd.f32 %v3918, %v3932
        %v3936 = vadd.f32 %v3919, %v3932
        %v3937 = vadd.f32 %v3920, %v3932
        %v3938 = vadd.f32 %v3921, %v3932
        %v3939 = vadd.f32 %v3922, %v3932
        %v3940 = vadd.f32 %v3923, %v3932
        %v3941 = vadd.f32 %v3924, %v3932
        %v3942 = vadd.f32 %v3925, %v3932
        %v3943 = vadd.f32 %v3926, %v3932
        %v3944 = vmax.f32 %v3934, 0.0
        %v3945 = vmax.f32 %v3935, 0.0
        %v3946 = vmax.f32 %v3936, 0.0
        %v3947 = vmax.f32 %v3937, 0.0
        %v3948 = vmax.f32 %v3938, 0.0
        %v3949 = vmax.f32 %v3939, 0.0
        %v3950 = vmax.f32 %v3940, 0.0
        %v3951 = vmax.f32 %v3941, 0.0
        %v3952 = vmax.f32 %v3942, 0.0
        %v3953 = vmax.f32 %v3943, 0.0
        %v3954 = vld [vmem:[#allocation4] sm:$0xff]
        %v3955 = vld [vmem:[#allocation4 + $0x8] sm:$0xff]
        %v3956 = vld [vmem:[#allocation4 + $0x10] sm:$0xff]
        %v3957 = vld [vmem:[#allocation4 + $0x18] sm:$0xff]
        %v3959 = vsel %vm3706, %v3944, 0
        %v3962 = vsel %vm3706, %v3945, 0
        %v3965 = vsel %vm3706, %v3946, 0
        %v3968 = vsel %vm3706, %v3947, 0
        %v3971 = vsel %vm3706, %v3948, 0
        %v3974 = vsel %vm3706, %v3949, 0
        %v3977 = vsel %vm3706, %v3950, 0
        %v3980 = vsel %vm3706, %v3951, 0
        %v3983 = vsel %vm3706, %v3952, 0
        %v3986 = vsel %vm3706, %v3953, 0
        %3988 = vmatprep.subr.mxu0 0.0
        %3989 = vmatpush1.msra.mxu0 %v3954
        %3990 = vmatprep.subr.mxu0 0.0
        %3991 = vmatpush1.msra.mxu0 %v3955
        %3992 = vmatprep.subr.mxu0 0.0
        %3993 = vmatpush1.msra.mxu0 %v3956
        %3994 = vmatprep.subr.mxu0 0.0
        %3995 = vmatpush1.msra.mxu0 %v3957
        %3996 = vmatprep.subr.mxu0 0.0
        %3997 = vmatpush1.msra.mxu0 0.0
        %3998 = vmatprep.subr.mxu0 0.0
        %3999 = vmatpush1.msra.mxu0 0.0
        %4000 = vmatprep.subr.mxu0 0.0
        %4001 = vmatpush1.msra.mxu0 0.0
        %4002 = vmatprep.subr.mxu0 0.0
        %4003 = vmatpush1.msra.mxu0 0.0
        %4004 = vmatprep.subr.mxu0 0.0
        %4005 = vmatpush1.msra.mxu0 0.0
        %4006 = vmatprep.subr.mxu0 0.0
        %4007 = vmatpush1.msra.mxu0 0.0
        %4008 = vmatprep.subr.mxu0 0.0
        %4009 = vmatpush1.msra.mxu0 0.0
        %4010 = vmatprep.subr.mxu0 0.0
        %4011 = vmatpush1.msra.mxu0 0.0
        %4012 = vmatprep.subr.mxu0 0.0
        %4013 = vmatpush1.msra.mxu0 0.0
        %4014 = vmatprep.subr.mxu0 0.0
        %4015 = vmatpush1.msra.mxu0 0.0
        %4016 = vmatprep.subr.mxu0 0.0
        %4017 = vmatpush1.msra.mxu0 0.0
        %4018 = vmatprep.subr.mxu0 0.0
        %4019 = vmatpush1.msra.mxu0 0.0
        %4020 = vmatprep.subr.mxu0 0.0
        %4021 = vmatpush1.msra.mxu0 0.0
        %4022 = vmatprep.subr.mxu0 0.0
        %4023 = vmatpush1.msra.mxu0 0.0
        %4024 = vmatprep.subr.mxu0 0.0
        %4025 = vmatpush1.msra.mxu0 0.0
        %4026 = vmatprep.subr.mxu0 0.0
        %4027 = vmatpush1.msra.mxu0 0.0
        %4028 = vmatprep.subr.mxu0 0.0
        %4029 = vmatpush1.msra.mxu0 0.0
        %4030 = vmatprep.subr.mxu0 0.0
        %4031 = vmatpush1.msra.mxu0 0.0
        %4032 = vmatprep.subr.mxu0 0.0
        %4033 = vmatpush1.msra.mxu0 0.0
        %4034 = vmatprep.subr.mxu0 0.0
        %4035 = vmatpush1.msra.mxu0 0.0
        %4036 = vmatprep.subr.mxu0 0.0
        %4037 = vmatpush1.msra.mxu0 0.0
        %4038 = vmatprep.subr.mxu0 0.0
        %4039 = vmatpush1.msra.mxu0 0.0
        %4040 = vmatprep.subr.mxu0 0.0
        %4041 = vmatpush1.msra.mxu0 0.0
        %4042 = vmatprep.subr.mxu0 0.0
        %4043 = vmatpush1.msra.mxu0 0.0
        %4044 = vmatprep.subr.mxu0 0.0
        %4045 = vmatpush1.msra.mxu0 0.0
        %4046 = vmatprep.subr.mxu0 0.0
        %4047 = vmatpush1.msra.mxu0 0.0
        %4048 = vmatprep.subr.mxu0 0.0
        %4049 = vmatpush1.msra.mxu0 0.0
        %4050 = vmatprep.subr.mxu0 0.0
        %4051 = vmatpush1.msra.mxu0 0.0
        %4052 = vmatprep.mubr.f32.mxu0 0.0
        %4053 = vmatmul.mubr.f32.gmra.mrb[0].mxu0 %v3959
        %v4054 = vpop.f32.mrb[0].mxu0
        %v4055 = vadd.f32 0.0, %v4054
        %v4056 = vpop.f32.mrb[0].mxu0
        %4057 = vmatprep.mubr.f32.mxu0 0.0
        %4058 = vmatmul.mubr.f32.gmra.mrb[0].mxu0 %v3962
        %v4059 = vpop.f32.mrb[0].mxu0
        %v4060 = vadd.f32 0.0, %v4059
        %v4061 = vpop.f32.mrb[0].mxu0
        %4062 = vmatprep.mubr.f32.mxu0 0.0
        %4063 = vmatmul.mubr.f32.gmra.mrb[0].mxu0 %v3965
        %v4064 = vpop.f32.mrb[0].mxu0
        %v4065 = vadd.f32 0.0, %v4064
        %v4066 = vpop.f32.mrb[0].mxu0
        %4067 = vmatprep.mubr.f32.mxu0 0.0
        %4068 = vmatmul.mubr.f32.gmra.mrb[0].mxu0 %v3968
        %v4069 = vpop.f32.mrb[0].mxu0
        %v4070 = vadd.f32 0.0, %v4069
        %v4071 = vpop.f32.mrb[0].mxu0
        %4072 = vmatprep.mubr.f32.mxu0 0.0
        %4073 = vmatmul.mubr.f32.gmra.mrb[0].mxu0 %v3971
        %v4074 = vpop.f32.mrb[0].mxu0
        %v4075 = vadd.f32 0.0, %v4074
        %v4076 = vpop.f32.mrb[0].mxu0
        %4077 = vmatprep.mubr.f32.mxu0 0.0
        %4078 = vmatmul.mubr.f32.gmra.mrb[0].mxu0 %v3974
        %v4079 = vpop.f32.mrb[0].mxu0
        %v4080 = vadd.f32 0.0, %v4079
        %v4081 = vpop.f32.mrb[0].mxu0
        %4082 = vmatprep.mubr.f32.mxu0 0.0
        %4083 = vmatmul.mubr.f32.gmra.mrb[0].mxu0 %v3977
        %v4084 = vpop.f32.mrb[0].mxu0
        %v4085 = vadd.f32 0.0, %v4084
        %v4086 = vpop.f32.mrb[0].mxu0
        %4087 = vmatprep.mubr.f32.mxu0 0.0
        %4088 = vmatmul.mubr.f32.gmra.mrb[0].mxu0 %v3980
        %v4089 = vpop.f32.mrb[0].mxu0
        %v4090 = vadd.f32 0.0, %v4089
        %v4091 = vpop.f32.mrb[0].mxu0
        %4092 = vmatprep.mubr.f32.mxu0 0.0
        %4093 = vmatmul.mubr.f32.gmra.mrb[0].mxu0 %v3983
        %v4094 = vpop.f32.mrb[0].mxu0
        %v4095 = vadd.f32 0.0, %v4094
        %v4096 = vpop.f32.mrb[0].mxu0
        %4097 = vmatprep.mubr.f32.mxu0 0.0
        %4098 = vmatmul.mubr.f32.gmra.mrb[0].mxu0 %v3986
        %v4099 = vpop.f32.mrb[0].mxu0
        %v4100 = vadd.f32 0.0, %v4099
        %v4101 = vpop.f32.mrb[0].mxu0
        %4102 = vdwg.mxu0
        %v4103 = vld [vmem:[#allocation9] sm:$0x1]
        %v4105 = vlaneseq
        %v4106 = vshrl.u32 %v4105, 7
        %v4107 = vsub.s32 0, %v4106
        %v4108 = vrot.slane %v4103, %v4107
        %v4110 = vmul.f32 %v4055, %v4108
        %v4111 = vmul.f32 %v4060, %v4108
        %v4112 = vmul.f32 %v4065, %v4108
        %v4113 = vmul.f32 %v4070, %v4108
        %v4114 = vmul.f32 %v4075, %v4108
        %v4115 = vmul.f32 %v4080, %v4108
        %v4116 = vmul.f32 %v4085, %v4108
        %v4117 = vmul.f32 %v4090, %v4108
        %v4118 = vmul.f32 %v4095, %v4108
        %v4119 = vmul.f32 %v4100, %v4108
        %v4120 = vld [vmem:[#allocation10] sm:$0x1]
        %v4122 = vlaneseq
        %v4123 = vshrl.u32 %v4122, 7
        %v4124 = vsub.s32 0, %v4123
        %v4125 = vrot.slane %v4120, %v4124
        %v4127 = vadd.f32 %v4110, %v4125
        %v4128 = vadd.f32 %v4111, %v4125
        %v4129 = vadd.f32 %v4112, %v4125
        %v4130 = vadd.f32 %v4113, %v4125
        %v4131 = vadd.f32 %v4114, %v4125
        %v4132 = vadd.f32 %v4115, %v4125
        %v4133 = vadd.f32 %v4116, %v4125
        %v4134 = vadd.f32 %v4117, %v4125
        %v4135 = vadd.f32 %v4118, %v4125
        %v4136 = vadd.f32 %v4119, %v4125
        %v4137 = vmax.f32 %v4127, 0.0
        %v4138 = vmax.f32 %v4128, 0.0
        %v4139 = vmax.f32 %v4129, 0.0
        %v4140 = vmax.f32 %v4130, 0.0
        %v4141 = vmax.f32 %v4131, 0.0
        %v4142 = vmax.f32 %v4132, 0.0
        %v4143 = vmax.f32 %v4133, 0.0
        %v4144 = vmax.f32 %v4134, 0.0
        %v4145 = vmax.f32 %v4135, 0.0
        %v4146 = vmax.f32 %v4136, 0.0
        %4147 = vst.msk [vmem:[%s365] sm:$0xff] %vm3719, %v4137
        %4148 = vst.msk [vmem:[%s365 + $0x8] sm:$0xff] %vm3719, %v4138
        %4149 = vst.msk [vmem:[%s365 + $0x10] sm:$0xff] %vm3719, %v4139
        %4150 = vst.msk [vmem:[%s365 + $0x18] sm:$0xff] %vm3719, %v4140
        %4151 = vst.msk [vmem:[%s365 + $0x20] sm:$0xff] %vm3719, %v4141
        %4152 = vst.msk [vmem:[%s365 + $0x28] sm:$0xff] %vm3719, %v4142
        %4153 = vst.msk [vmem:[%s365 + $0x30] sm:$0xff] %vm3719, %v4143
        %4154 = vst.msk [vmem:[%s365 + $0x38] sm:$0xff] %vm3719, %v4144
        %4155 = vst.msk [vmem:[%s365 + $0x40] sm:$0xff] %vm3719, %v4145
        %4156 = vst.msk [vmem:[%s365 + $0x48] sm:$0xff] %vm3719, %v4146
        %s4157 = smul.u32 10, %s24
        %p4158 = scmp.lt.s32.totalorder %s4157, 19
        %s4159 = scalar_select %p4158, %s4157, 19
        %s4160 = smul.addr %s4159, 8
        %s4161 = scalar_lea.vmem %s7, %s4160
        // Predicated region
        $region73: #{tpu_custom_call.1} parent=47 // pred_check
          %p4162 = pneg %p194
        $region74: #{tpu_custom_call.1} parent=47 // pred_check_branch
          %4164 = sbr.rel (%p4162) target = $region76
        $region75: #{tpu_custom_call.1} parent=47 // pred_region
          %s4165 = smul.u32 10, %s24
        $region76: #{tpu_custom_call.1} parent=47 // pred_fallthru
          _
      $region48: #{tpu_custom_call.1} parent=5 // pred_fallthru
        _
      %p4166 = scmp.le.s32.totalorder 2, %s19
      // Predicated region
      $region77: #{tpu_custom_call.1} parent=5 // pred_check
        %p4167 = pneg %p4166
      $region78: #{tpu_custom_call.1} parent=5 // pred_check_branch
        %4169 = sbr.rel (%p4167) target = $region80
      $region79: #{tpu_custom_call.1} parent=5 // pred_region
        %s4170 = ssub.s32 %s19, 2
        // Predicated region
        $region81: #{tpu_custom_call.1} parent=79 // pred_check
          %p4171 = pneg %p200
        $region82: #{tpu_custom_call.1} parent=79 // pred_check_branch
          %4173 = sbr.rel (%p4171) target = $region84
        $region83: #{tpu_custom_call.1} parent=79 // pred_region
          %s4174 = smul.u32 10, %s25
          %p4175 = scmp.lt.s32.totalorder %s4174, 19
          %s4176 = scalar_select %p4175, %s4174, 19
          %s4177 = smul.addr %s4176, 8
          %s4178 = scalar_lea.vmem %s7, %s4177
        $region84: #{tpu_custom_call.1} parent=79 // pred_fallthru
          _
      $region80: #{tpu_custom_call.1} parent=5 // pred_fallthru
        _
    $region6: #{tpu_custom_call.1} parent=1 // loop_footer
      %s23 = sadd.s32 1, %s19
    $region7: #{tpu_custom_call.1} parent=1 // loop_footer_branch
      %18 = sbr.rel target = $region3
    $region8: #{tpu_custom_call.1} parent=1 // loop_exit
      _
    %4179 = vsyncpa [#allocation3], 1
    %s4180 = scalar_lea.sflag [#allocation3], 1
    %4181 = vsyncpa %s4180, 1
    %4182 = vsyncpa [#allocation5], 1
    %4183 = vsyncpa [#allocation8], 1
    %4184 = vsyncpa [#allocation11], 1

</llo_original>
